<compile_context>
chip_gen: v6e
topology: v6e:2x2x1
jax: 0.10.0
libtpu: 0.0.40
codegen_flags: <defaults>
</compile_context>

<pallas_src>
import math
from functools import partial

import jax
import jax.numpy as jnp
from jax.experimental import pallas as pl
from jax.experimental.pallas import tpu as pltpu


def _ln_f32(x_f32, w, b, eps=1e-5):
    # LayerNorm subclass in the reference always computes in fp32.
    mu = jnp.mean(x_f32, axis=-1, keepdims=True)
    var = jnp.mean((x_f32 - mu) ** 2, axis=-1, keepdims=True)
    return (x_f32 - mu) * jax.lax.rsqrt(var + eps) * w + b


def faformer_kernel(x_ref,
                    ln1w_ref, ln1b_ref, wq_ref, bq_ref, wk_ref, bk_ref,
                    wv_ref, bv_ref, wo_ref, bo_ref, ln2w_ref, ln2b_ref,
                    w1_ref, b1_ref, w2_ref, b2_ref,
                    o_ref, cls_ref, x_acc, *, n_head):
    layer = pl.program_id(1)
    n_layers = pl.num_programs(1)
    TB, L, D = x_acc.shape
    LYR = cls_ref.shape[1]
    hd = D // n_head
    M = TB * L

    # Load the activation block into the persistent f32 carry at the first layer.
    @pl.when(layer == 0)
    def _():
        x_acc[...] = x_ref[...].astype(jnp.float32)

    x = x_acc[...].reshape(M, D)                                     # f32 carry

    # ----------------- attention branch -----------------
    xn = _ln_f32(x, ln1w_ref[0], ln1b_ref[0])                        # (M, D) f32
    xn_b = xn.astype(jnp.bfloat16)                                   # MXU input

    # Per-head projections (weights pre-split/pre-transposed; Wq/bq carry 1/sqrt(hd)).
    # TODO(synk): for very long sequences (L >~ 512) the (TB, L, L) scores should
    # be tiled along KV with an online softmax instead of materializing fully.
    ctx_heads = []
    for h in range(n_head):                                          # static head loop
        q = (jnp.dot(xn_b, wq_ref[0, h], preferred_element_type=jnp.float32)
             + bq_ref[0, h]).reshape(TB, L, hd)
        k = (jnp.dot(xn_b, wk_ref[0, h], preferred_element_type=jnp.float32)
             + bk_ref[0, h]).reshape(TB, L, hd)
        v = (jnp.dot(xn_b, wv_ref[0, h], preferred_element_type=jnp.float32)
             + bv_ref[0, h]).reshape(TB, L, hd)
        s = jnp.einsum("bqd,bkd->bqk",
                       q.astype(jnp.bfloat16), k.astype(jnp.bfloat16),
                       preferred_element_type=jnp.float32)           # (TB, L, L)
        s = s - jnp.max(s, axis=-1, keepdims=True)
        p = jnp.exp(s)
        p = p * pl.reciprocal(jnp.sum(p, axis=-1, keepdims=True), approx=True)
        ctx = jnp.einsum("bqk,bkd->bqd",
                         p.astype(jnp.bfloat16), v.astype(jnp.bfloat16),
                         preferred_element_type=jnp.float32)         # (TB, L, hd)
        ctx_heads.append(ctx)

    # Single full-contraction output projection (K = D).
    ctx_all = jnp.concatenate(ctx_heads, axis=-1).reshape(M, D)
    attn = jnp.dot(ctx_all.astype(jnp.bfloat16), wo_ref[0],
                   preferred_element_type=jnp.float32) + bo_ref[0]
    x = x + attn

    # ----------------- MLP branch -----------------
    # TODO(synk): nn.Dropout(0.5) is stochastic in train mode; eval-mode
    # (identity) is implemented here.
    yn = _ln_f32(x, ln2w_ref[0], ln2b_ref[0])
    h1 = jnp.maximum(
        jnp.dot(yn.astype(jnp.bfloat16), w1_ref[0],
                preferred_element_type=jnp.float32) + b1_ref[0], 0.0)
    h2 = jnp.dot(h1.astype(jnp.bfloat16), w2_ref[0],
                 preferred_element_type=jnp.float32) + b2_ref[0]
    x = x + h2

    x3 = x.reshape(TB, L, D)
    x_acc[...] = x3

    # out['layer<l>'] = x[0] of the (L, N, D) tensor == sequence position 0.
    # Merge into the resident (TB, layers, D) block via a select (avoids a
    # dynamic partial store); the block is written back to HBM once per batch.
    row_mask = jax.lax.broadcasted_iota(jnp.int32, (1, LYR, 1), 1) == layer
    cls_ref[...] = jnp.where(row_mask, x3[:, 0:1, :].astype(cls_ref.dtype),
                             cls_ref[...])

    @pl.when(layer == n_layers - 1)
    def _():
        o_ref[...] = x3.astype(o_ref.dtype)


_WNAMES = ["ln1_w", "ln1_b", "wq", "bq", "wk", "bk", "wv", "bv",
           "wo", "bo", "ln2_w", "ln2_b", "w1", "b1", "w2", "b2"]


def _prep_params(params, n_head, mxu_dtype=jnp.bfloat16):
    """Stack per-layer params, pre-transpose, pre-split QKV per head, fold scale."""
    D = params[0]["ln1_w"].shape[-1]
    hd = D // n_head
    scale = 1.0 / math.sqrt(hd)

    def stack(fn, dtype=None):
        w = jnp.stack([fn(p) for p in params], axis=0)
        return w.astype(dtype) if dtype is not None else w

    def split_heads(w_t):                     # (D_in, D_out) -> (H, D_in, hd)
        return w_t.reshape(D, n_head, hd).transpose(1, 0, 2)

    def split_bias(b):                        # (1, D) -> (H, 1, hd)
        return b.reshape(n_head, 1, hd)

    return {
        "ln1_w": stack(lambda p: p["ln1_w"]),                              # (Lyr,1,D) f32
        "ln1_b": stack(lambda p: p["ln1_b"]),
        "wq": stack(lambda p: split_heads(p["w_in"][:D].T * scale), mxu_dtype),
        "bq": stack(lambda p: split_bias(p["b_in"][:, :D] * scale)),       # (Lyr,H,1,hd)
        "wk": stack(lambda p: split_heads(p["w_in"][D:2 * D].T), mxu_dtype),
        "bk": stack(lambda p: split_bias(p["b_in"][:, D:2 * D])),
        "wv": stack(lambda p: split_heads(p["w_in"][2 * D:].T), mxu_dtype),
        "bv": stack(lambda p: split_bias(p["b_in"][:, 2 * D:])),
        "wo": stack(lambda p: p["w_out"].T, mxu_dtype),                    # (Lyr,D,D)
        "bo": stack(lambda p: p["b_out"]),                                 # (Lyr,1,D)
        "ln2_w": stack(lambda p: p["ln2_w"]),
        "ln2_b": stack(lambda p: p["ln2_b"]),
        "w1": stack(lambda p: p["w_fc1"].T, mxu_dtype),                    # (Lyr,D,dh)
        "b1": stack(lambda p: p["b_fc1"]),                                 # (Lyr,1,dh)
        "w2": stack(lambda p: p["w_fc2"].T, mxu_dtype),                    # (Lyr,dh,D)
        "b2": stack(lambda p: p["b_fc2"]),                                 # (Lyr,1,D)
    }


def _vmem_capacity_bytes(default=64 << 20):
    try:
        cap = getattr(pltpu.get_tpu_info(), "vmem_capacity_bytes", None)
        if cap:
            return int(cap)
    except Exception:
        pass
    return default


def _pick_batch_block(n, seq_len, d_model, target_rows=512, interm_budget=24 << 20):
    """Divisor TB of n with M = TB*L >= target_rows if possible, TB <= n//2 so the
    batch grid keeps >=2 steps (feeds both v7x TensorCores), capped by a rough
    per-step intermediate-VMEM estimate."""
    cap = max(1, n // 2)
    divs = [d for d in range(1, cap + 1) if n % d == 0]

    def fits(tb):
        interm = (12 * tb * seq_len * d_model + 4 * tb * seq_len * seq_len) * 4
        return interm <= interm_budget

    divs = [d for d in divs if fits(d)] or [1]
    for d in divs:                            # smallest TB that reaches the target M
        if d * seq_len >= target_rows:
            return d
    return divs[-1]                           # otherwise the largest feasible


def faformer_forward(x_lnd, params, n_head, *, target_rows=512):
    """Matches FAFormer.forward: x is (L, N, D); returns (dict of x[0] per layer, x)."""
    L, N, D = x_lnd.shape
    layers = len(params)
    x_nld = jnp.transpose(x_lnd, (1, 0, 2))            # (N, L, D) for the kernel

    stacked = _prep_params(params, n_head)
    weights = [stacked[name] for name in _WNAMES]
    dh = int(stacked["w1"].shape[-1])

    TB = _pick_batch_block(N, L, D, target_rows)
    grid = (N // TB, layers)                            # layers innermost (carry axis)

    in_specs = [pl.BlockSpec((TB, L, D), lambda b, l: (b, 0, 0))]
    for w in weights:
        nd = w.ndim
        # One layer's slice per grid step; double-buffered so layer l+1's weights
        # are DMA'd while layer l computes.
        in_specs.append(pl.BlockSpec((1,) + tuple(w.shape[1:]),
                                     lambda b, l, nd=nd: (l,) + (0,) * (nd - 1)))

    out_shape = (jax.ShapeDtypeStruct((N, L, D), x_nld.dtype),
                 jax.ShapeDtypeStruct((N, layers, D), x_nld.dtype))
    out_specs = (pl.BlockSpec((TB, L, D), lambda b, l: (b, 0, 0)),
                 pl.BlockSpec((TB, layers, D), lambda b, l: (b, 0, 0)))

    scratch_shapes = [pltpu.VMEM((TB, L, D), jnp.float32)]   # layer-to-layer carry

    # Generation-aware VMEM budget: double-buffered per-layer weights, I/O blocks,
    # the f32 carry, and an estimate of live per-layer intermediates.
    vmem_cap = _vmem_capacity_bytes()
    xi = jnp.dtype(x_nld.dtype).itemsize
    per_layer_w = sum(int(w.size) * w.dtype.itemsize for w in weights) // max(layers, 1)
    io_bytes = 2 * (TB * L * D) * xi * 2 + 2 * (TB * layers * D) * xi
    carry_bytes = TB * L * D * 4
    interm_bytes = (12 * TB * L * D + 4 * TB * L * L + 2 * TB * L * max(D, dh)) * 4
    need = 2 * per_layer_w + io_bytes + carry_bytes + interm_bytes + (2 << 20)
    vmem_limit = int(min(max(need, 16 << 20), int(vmem_cap * 0.85)))

    xf, cls = pl.pallas_call(
        partial(faformer_kernel, n_head=n_head),
        out_shape=out_shape,
        grid=grid,
        in_specs=in_specs,
        out_specs=out_specs,
        scratch_shapes=scratch_shapes,
        compiler_params=pltpu.CompilerParams(
            dimension_semantics=("parallel", "arbitrary"),
            vmem_limit_bytes=vmem_limit),
    )(x_nld, *weights)

    out = {"layer" + str(i): cls[:, i, :] for i in range(layers)}   # each (N, D)
    return out, jnp.transpose(xf, (1, 0, 2))            # back to (L, N, D)


def init_faformer_params(key, width, layers, heads, reduction_factor):
    d = width
    dh = d // reduction_factor
    params = []
    for _ in range(layers):
        key, k0, k1, k2, k3, k4, k5 = jax.random.split(key, 7)
        rnd = lambda k, shape, s: jax.random.normal(k, shape, jnp.float32) * s
        params.append({
            "ln1_w": jnp.ones((1, d), jnp.float32),
            "ln1_b": jnp.zeros((1, d), jnp.float32),
            "w_in":  rnd(k0, (3 * d, d), 1.0 / math.sqrt(d)),
            "b_in":  jnp.zeros((1, 3 * d), jnp.float32),
            "w_out": rnd(k1, (d, d), 1.0 / math.sqrt(d)),
            "b_out": jnp.zeros((1, d), jnp.float32),
            "ln2_w": jnp.ones((1, d), jnp.float32),
            "ln2_b": jnp.zeros((1, d), jnp.float32),
            "w_fc1": rnd(k2, (dh, d), 1.0 / math.sqrt(d)),
            "b_fc1": rnd(k3, (1, dh), 0.01),
            "w_fc2": rnd(k4, (d, dh), 1.0 / math.sqrt(dh)),
            "b_fc2": rnd(k5, (1, d), 0.01),
        })
    return params


# -------- pure-JAX f32 reference (same math, no Pallas) for a correctness check --------
def _ref_block(x_nld, p, n_head):
    N, L, D = x_nld.shape
    hd = D // n_head
    xn = _ln_f32(x_nld.astype(jnp.float32), p["ln1_w"][0], p["ln1_b"][0])
    qkv = jnp.einsum("nld,ed->nle", xn, p["w_in"]) + p["b_in"][0]
    q, k, v = qkv[..., :D] / math.sqrt(hd), qkv[..., D:2 * D], qkv[..., 2 * D:]
    qh = q.reshape(N, L, n_head, hd).transpose(0, 2, 1, 3)
    kh = k.reshape(N, L, n_head, hd).transpose(0, 2, 1, 3)
    vh = v.reshape(N, L, n_head, hd).transpose(0, 2, 1, 3)
    s = jnp.einsum("nhqd,nhkd->nhqk", qh, kh)
    patt = jax.nn.softmax(s, axis=-1)
    o = jnp.einsum("nhqk,nhkd->nhqd", patt, vh).transpose(0, 2, 1, 3).reshape(N, L, D)
    o = jnp.einsum("nld,ed->nle", o, p["w_out"]) + p["b_out"][0]
    x = x_nld + o
    yn = _ln_f32(x.astype(jnp.float32), p["ln2_w"][0], p["ln2_b"][0])
    h1 = jnp.maximum(jnp.einsum("nld,ed->nle", yn, p["w_fc1"]) + p["b_fc1"][0], 0.0)
    h2 = jnp.einsum("nle,de->nld", h1, p["w_fc2"]) + p["b_fc2"][0]
    return x + h2


def _ref_forward(x_lnd, params, n_head):
    x = jnp.transpose(x_lnd, (1, 0, 2))
    out = {}
    for i, p in enumerate(params):
        x = _ref_block(x, p, n_head)
        out["layer" + str(i)] = x[:, 0, :]
    return out, jnp.transpose(x, (1, 0, 2))


if __name__ == "__main__":
    L, N, WIDTH, HEADS, RF, LAYERS = 8, 2, 32, 4, 2, 2
    key = jax.random.PRNGKey(0)
    kx, kp = jax.random.split(key)
    x = jax.random.normal(kx, (L, N, WIDTH), jnp.float32)
    params = init_faformer_params(kp, WIDTH, LAYERS, HEADS, RF)

    out, xf = faformer_forward(x, params, HEADS)
    xf = jax.block_until_ready(xf)
    for k_ in out:
        jax.block_until_ready(out[k_])

    ref_out, xr = _ref_forward(x, params, HEADS)
    assert xf.shape == (L, N, WIDTH)
    # Tolerance loosened vs. the exact fp32 reference: the kernel feeds the MXU
    # bf16 (f32 accumulation) and uses the EUP approximate reciprocal in softmax.
    assert jnp.allclose(xf, xr, atol=1e-1, rtol=5e-2), float(jnp.max(jnp.abs(xf - xr)))
    for i in range(LAYERS):
        name = "layer%d" % i
        assert out[name].shape == (N, WIDTH)
        assert jnp.allclose(out[name], ref_out[name], atol=1e-1, rtol=5e-2), \
            float(jnp.max(jnp.abs(out[name] - ref_out[name])))
    print("KERNEL_OK")
</pallas_src>

<mosaic_0001>
module attributes {stable_mosaic.version = 11 : i64} {
  func.func @faformer_kernel(%arg0: i32, %arg1: i32, %arg2: memref<1x8x32xf32, #tpu.memory_space<vmem>>, %arg3: memref<1x1x32xf32, #tpu.memory_space<vmem>>, %arg4: memref<1x1x32xf32, #tpu.memory_space<vmem>>, %arg5: memref<1x4x32x8xbf16, #tpu.memory_space<vmem>>, %arg6: memref<1x4x1x8xf32, #tpu.memory_space<vmem>>, %arg7: memref<1x4x32x8xbf16, #tpu.memory_space<vmem>>, %arg8: memref<1x4x1x8xf32, #tpu.memory_space<vmem>>, %arg9: memref<1x4x32x8xbf16, #tpu.memory_space<vmem>>, %arg10: memref<1x4x1x8xf32, #tpu.memory_space<vmem>>, %arg11: memref<1x32x32xbf16, #tpu.memory_space<vmem>>, %arg12: memref<1x1x32xf32, #tpu.memory_space<vmem>>, %arg13: memref<1x1x32xf32, #tpu.memory_space<vmem>>, %arg14: memref<1x1x32xf32, #tpu.memory_space<vmem>>, %arg15: memref<1x32x16xbf16, #tpu.memory_space<vmem>>, %arg16: memref<1x1x16xf32, #tpu.memory_space<vmem>>, %arg17: memref<1x16x32xbf16, #tpu.memory_space<vmem>>, %arg18: memref<1x1x32xf32, #tpu.memory_space<vmem>>, %arg19: memref<1x8x32xf32, #tpu.memory_space<vmem>>, %arg20: memref<1x2x32xf32, #tpu.memory_space<vmem>>, %arg21: memref<1x8x32xf32, #tpu.memory_space<vmem>>) attributes {dimension_semantics = [#tpu.dimension_semantics<parallel>, #tpu.dimension_semantics<arbitrary>], iteration_bounds = array<i64: 2, 2>, scalar_prefetch = 0 : i64, scratch_operands = 1 : i64, tpu.core_type = #tpu.core_type<tc>, window_params = [{transform_indices = @transform_0, window_bounds = array<i64: 1, 8, 32>}, {transform_indices = @transform_1, window_bounds = array<i64: 1, 1, 32>}, {transform_indices = @transform_2, window_bounds = array<i64: 1, 1, 32>}, {transform_indices = @transform_3, window_bounds = array<i64: 1, 4, 32, 8>}, {transform_indices = @transform_4, window_bounds = array<i64: 1, 4, 1, 8>}, {transform_indices = @transform_5, window_bounds = array<i64: 1, 4, 32, 8>}, {transform_indices = @transform_6, window_bounds = array<i64: 1, 4, 1, 8>}, {transform_indices = @transform_7, window_bounds = array<i64: 1, 4, 32, 8>}, {transform_indices = @transform_8, window_bounds = array<i64: 1, 4, 1, 8>}, {transform_indices = @transform_9, window_bounds = array<i64: 1, 32, 32>}, {transform_indices = @transform_10, window_bounds = array<i64: 1, 1, 32>}, {transform_indices = @transform_11, window_bounds = array<i64: 1, 1, 32>}, {transform_indices = @transform_12, window_bounds = array<i64: 1, 1, 32>}, {transform_indices = @transform_13, window_bounds = array<i64: 1, 32, 16>}, {transform_indices = @transform_14, window_bounds = array<i64: 1, 1, 16>}, {transform_indices = @transform_15, window_bounds = array<i64: 1, 16, 32>}, {transform_indices = @transform_16, window_bounds = array<i64: 1, 1, 32>}, {transform_indices = @transform_17, window_bounds = array<i64: 1, 8, 32>}, {transform_indices = @transform_18, window_bounds = array<i64: 1, 2, 32>}]} {
    %c0_i32 = arith.constant 0 : i32
    %0 = arith.cmpi eq, %arg1, %c0_i32 : i32
    %1 = arith.extui %0 : i1 to i32
    %c0_i32_0 = arith.constant 0 : i32
    %2 = arith.cmpi ne, %1, %c0_i32_0 : i32
    scf.if %2 {
      %c0_177 = arith.constant 0 : index
      %c0_178 = arith.constant 0 : index
      %c0_179 = arith.constant 0 : index
      %264 = vector.load %arg2[%c0_177, %c0_178, %c0_179] : memref<1x8x32xf32, #tpu.memory_space<vmem>>, vector<1x8x32xf32>
      %c0_180 = arith.constant 0 : index
      %c0_181 = arith.constant 0 : index
      %c0_182 = arith.constant 0 : index
      %265 = vector.load %arg21[%c0_180, %c0_181, %c0_182] : memref<1x8x32xf32, #tpu.memory_space<vmem>>, vector<1x8x32xf32>
      tpu.vector_store %arg21[%c0_180, %c0_181, %c0_182], %264 {strides = array<i32>} : memref<1x8x32xf32, #tpu.memory_space<vmem>>, vector<1x8x32xf32>,
    } else {
    }
    %c0 = arith.constant 0 : index
    %c0_1 = arith.constant 0 : index
    %c0_2 = arith.constant 0 : index
    %3 = vector.load %arg21[%c0, %c0_1, %c0_2] : memref<1x8x32xf32, #tpu.memory_space<vmem>>, vector<1x8x32xf32>
    %4 = vector.shape_cast %3 : vector<1x8x32xf32> to vector<8x32xf32>
    %c0_3 = arith.constant 0 : index
    %c0_4 = arith.constant 0 : index
    %c0_5 = arith.constant 0 : index
    %5 = vector.load %arg3[%c0_3, %c0_4, %c0_5] : memref<1x1x32xf32, #tpu.memory_space<vmem>>, vector<1x1x32xf32>
    %6 = vector.shape_cast %5 : vector<1x1x32xf32> to vector<1x32xf32>
    %c0_6 = arith.constant 0 : index
    %c0_7 = arith.constant 0 : index
    %c0_8 = arith.constant 0 : index
    %7 = vector.load %arg4[%c0_6, %c0_7, %c0_8] : memref<1x1x32xf32, #tpu.memory_space<vmem>>, vector<1x1x32xf32>
    %8 = vector.shape_cast %7 : vector<1x1x32xf32> to vector<1x32xf32>
    %cst = arith.constant dense<0.000000e+00> : vector<8xf32>
    %9 = vector.multi_reduction <add>, %4, %cst [1] : vector<8x32xf32> to vector<8xf32>
    %10 = vector.shape_cast %9 : vector<8xf32> to vector<8x1xf32>
    %cst_9 = arith.constant 3.200000e+01 : f32
    %11 = vector.broadcast %cst_9 : f32 to vector<8x1xf32>
    %12 = arith.divf %10, %11 : vector<8x1xf32>
    %13 = vector.broadcast %12 : vector<8x1xf32> to vector<8x32xf32>
    %14 = arith.subf %4, %13 : vector<8x32xf32>
    %15 = arith.mulf %14, %14 : vector<8x32xf32>
    %cst_10 = arith.constant dense<0.000000e+00> : vector<8xf32>
    %16 = vector.multi_reduction <add>, %15, %cst_10 [1] : vector<8x32xf32> to vector<8xf32>
    %17 = vector.shape_cast %16 : vector<8xf32> to vector<8x1xf32>
    %cst_11 = arith.constant 3.200000e+01 : f32
    %18 = vector.broadcast %cst_11 : f32 to vector<8x1xf32>
    %19 = arith.divf %17, %18 : vector<8x1xf32>
    %20 = vector.broadcast %12 : vector<8x1xf32> to vector<8x32xf32>
    %21 = arith.subf %4, %20 : vector<8x32xf32>
    %cst_12 = arith.constant 9.99999974E-6 : f32
    %22 = vector.broadcast %cst_12 : f32 to vector<8x1xf32>
    %23 = arith.addf %19, %22 : vector<8x1xf32>
    %24 = math.rsqrt %23 : vector<8x1xf32>
    %25 = vector.broadcast %24 : vector<8x1xf32> to vector<8x32xf32>
    %26 = arith.mulf %21, %25 : vector<8x32xf32>
    %27 = vector.broadcast %6 : vector<1x32xf32> to vector<8x32xf32>
    %28 = arith.mulf %26, %27 : vector<8x32xf32>
    %29 = vector.broadcast %8 : vector<1x32xf32> to vector<8x32xf32>
    %30 = arith.addf %28, %29 : vector<8x32xf32>
    %31 = arith.truncf %30 : vector<8x32xf32> to vector<8x32xbf16>
    %c0_13 = arith.constant 0 : index
    %c0_14 = arith.constant 0 : index
    %c0_15 = arith.constant 0 : index
    %c0_16 = arith.constant 0 : index
    %32 = vector.load %arg5[%c0_13, %c0_14, %c0_15, %c0_16] : memref<1x4x32x8xbf16, #tpu.memory_space<vmem>>, vector<1x1x32x8xbf16>
    %33 = vector.shape_cast %32 : vector<1x1x32x8xbf16> to vector<32x8xbf16>
    %cst_17 = arith.constant dense<0.000000e+00> : vector<8x8xf32>
    %34 = tpu.matmul %31, %33, %cst_17 {dimension_numbers = #tpu.dot_dimension_numbers<[1], [0], [0], [1], [0, 0, 1, 1], [], []>} : vector<8x32xbf16>, vector<32x8xbf16>, vector<8x8xf32> -> vector<8x8xf32>
    %c0_18 = arith.constant 0 : index
    %c0_19 = arith.constant 0 : index
    %c0_20 = arith.constant 0 : index
    %c0_21 = arith.constant 0 : index
    %35 = vector.load %arg6[%c0_18, %c0_19, %c0_20, %c0_21] : memref<1x4x1x8xf32, #tpu.memory_space<vmem>>, vector<1x1x1x8xf32>
    %36 = vector.shape_cast %35 : vector<1x1x1x8xf32> to vector<1x8xf32>
    %37 = vector.broadcast %36 : vector<1x8xf32> to vector<8x8xf32>
    %38 = arith.addf %34, %37 : vector<8x8xf32>
    %39 = vector.shape_cast %38 : vector<8x8xf32> to vector<1x8x8xf32>
    %c0_22 = arith.constant 0 : index
    %c0_23 = arith.constant 0 : index
    %c0_24 = arith.constant 0 : index
    %c0_25 = arith.constant 0 : index
    %40 = vector.load %arg7[%c0_22, %c0_23, %c0_24, %c0_25] : memref<1x4x32x8xbf16, #tpu.memory_space<vmem>>, vector<1x1x32x8xbf16>
    %41 = vector.shape_cast %40 : vector<1x1x32x8xbf16> to vector<32x8xbf16>
    %cst_26 = arith.constant dense<0.000000e+00> : vector<8x8xf32>
    %42 = tpu.matmul %31, %41, %cst_26 {dimension_numbers = #tpu.dot_dimension_numbers<[1], [0], [0], [1], [0, 0, 1, 1], [], []>} : vector<8x32xbf16>, vector<32x8xbf16>, vector<8x8xf32> -> vector<8x8xf32>
    %c0_27 = arith.constant 0 : index
    %c0_28 = arith.constant 0 : index
    %c0_29 = arith.constant 0 : index
    %c0_30 = arith.constant 0 : index
    %43 = vector.load %arg8[%c0_27, %c0_28, %c0_29, %c0_30] : memref<1x4x1x8xf32, #tpu.memory_space<vmem>>, vector<1x1x1x8xf32>
    %44 = vector.shape_cast %43 : vector<1x1x1x8xf32> to vector<1x8xf32>
    %45 = vector.broadcast %44 : vector<1x8xf32> to vector<8x8xf32>
    %46 = arith.addf %42, %45 : vector<8x8xf32>
    %47 = vector.shape_cast %46 : vector<8x8xf32> to vector<1x8x8xf32>
    %c0_31 = arith.constant 0 : index
    %c0_32 = arith.constant 0 : index
    %c0_33 = arith.constant 0 : index
    %c0_34 = arith.constant 0 : index
    %48 = vector.load %arg9[%c0_31, %c0_32, %c0_33, %c0_34] : memref<1x4x32x8xbf16, #tpu.memory_space<vmem>>, vector<1x1x32x8xbf16>
    %49 = vector.shape_cast %48 : vector<1x1x32x8xbf16> to vector<32x8xbf16>
    %cst_35 = arith.constant dense<0.000000e+00> : vector<8x8xf32>
    %50 = tpu.matmul %31, %49, %cst_35 {dimension_numbers = #tpu.dot_dimension_numbers<[1], [0], [0], [1], [0, 0, 1, 1], [], []>} : vector<8x32xbf16>, vector<32x8xbf16>, vector<8x8xf32> -> vector<8x8xf32>
    %c0_36 = arith.constant 0 : index
    %c0_37 = arith.constant 0 : index
    %c0_38 = arith.constant 0 : index
    %c0_39 = arith.constant 0 : index
    %51 = vector.load %arg10[%c0_36, %c0_37, %c0_38, %c0_39] : memref<1x4x1x8xf32, #tpu.memory_space<vmem>>, vector<1x1x1x8xf32>
    %52 = vector.shape_cast %51 : vector<1x1x1x8xf32> to vector<1x8xf32>
    %53 = vector.broadcast %52 : vector<1x8xf32> to vector<8x8xf32>
    %54 = arith.addf %50, %53 : vector<8x8xf32>
    %55 = vector.shape_cast %54 : vector<8x8xf32> to vector<1x8x8xf32>
    %56 = arith.truncf %39 : vector<1x8x8xf32> to vector<1x8x8xbf16>
    %57 = arith.truncf %47 : vector<1x8x8xf32> to vector<1x8x8xbf16>
    "tpu.trace_start"() <{level = 10 : i32, message = "bqd,bkd->bqk"}> : () -> ()
    %cst_40 = arith.constant dense<0.000000e+00> : vector<1x8x8xf32>
    %58 = tpu.matmul %56, %57, %cst_40 {dimension_numbers = #tpu.dot_dimension_numbers<[2], [2], [1], [1], [0, 0, 0, 1, 1, 1], [0], [0]>} : vector<1x8x8xbf16>, vector<1x8x8xbf16>, vector<1x8x8xf32> -> vector<1x8x8xf32>
    "tpu.trace_stop"() : () -> ()
    %cst_41 = arith.constant dense<0xFF800000> : vector<1x8xf32>
    %59 = vector.multi_reduction <maximumf>, %58, %cst_41 [2] : vector<1x8x8xf32> to vector<1x8xf32>
    %60 = vector.shape_cast %59 : vector<1x8xf32> to vector<1x8x1xf32>
    %61 = vector.broadcast %60 : vector<1x8x1xf32> to vector<1x8x8xf32>
    %62 = arith.subf %58, %61 : vector<1x8x8xf32>
    %63 = math.exp %62 : vector<1x8x8xf32>
    %cst_42 = arith.constant dense<0.000000e+00> : vector<1x8xf32>
    %64 = vector.multi_reduction <add>, %63, %cst_42 [2] : vector<1x8x8xf32> to vector<1x8xf32>
    %65 = vector.shape_cast %64 : vector<1x8xf32> to vector<1x8x1xf32>
    %66 = tpu.reciprocal %65 {approx = true} : vector<1x8x1xf32> -> vector<1x8x1xf32>
    %67 = vector.broadcast %66 : vector<1x8x1xf32> to vector<1x8x8xf32>
    %68 = arith.mulf %63, %67 : vector<1x8x8xf32>
    %69 = arith.truncf %68 : vector<1x8x8xf32> to vector<1x8x8xbf16>
    %70 = arith.truncf %55 : vector<1x8x8xf32> to vector<1x8x8xbf16>
    "tpu.trace_start"() <{level = 10 : i32, message = "bqk,bkd->bqd"}> : () -> ()
    %cst_43 = arith.constant dense<0.000000e+00> : vector<1x8x8xf32>
    %71 = tpu.matmul %69, %70, %cst_43 {dimension_numbers = #tpu.dot_dimension_numbers<[2], [1], [1], [2], [0, 0, 0, 1, 1, 2], [0], [0]>} : vector<1x8x8xbf16>, vector<1x8x8xbf16>, vector<1x8x8xf32> -> vector<1x8x8xf32>
    "tpu.trace_stop"() : () -> ()
    %c0_44 = arith.constant 0 : index
    %c1 = arith.constant 1 : index
    %c0_45 = arith.constant 0 : index
    %c0_46 = arith.constant 0 : index
    %72 = vector.load %arg5[%c0_44, %c1, %c0_45, %c0_46] : memref<1x4x32x8xbf16, #tpu.memory_space<vmem>>, vector<1x1x32x8xbf16>
    %73 = vector.shape_cast %72 : vector<1x1x32x8xbf16> to vector<32x8xbf16>
    %cst_47 = arith.constant dense<0.000000e+00> : vector<8x8xf32>
    %74 = tpu.matmul %31, %73, %cst_47 {dimension_numbers = #tpu.dot_dimension_numbers<[1], [0], [0], [1], [0, 0, 1, 1], [], []>} : vector<8x32xbf16>, vector<32x8xbf16>, vector<8x8xf32> -> vector<8x8xf32>
    %c0_48 = arith.constant 0 : index
    %c1_49 = arith.constant 1 : index
    %c0_50 = arith.constant 0 : index
    %c0_51 = arith.constant 0 : index
    %75 = vector.load %arg6[%c0_48, %c1_49, %c0_50, %c0_51] : memref<1x4x1x8xf32, #tpu.memory_space<vmem>>, vector<1x1x1x8xf32>
    %76 = vector.shape_cast %75 : vector<1x1x1x8xf32> to vector<1x8xf32>
    %77 = vector.broadcast %76 : vector<1x8xf32> to vector<8x8xf32>
    %78 = arith.addf %74, %77 : vector<8x8xf32>
    %79 = vector.shape_cast %78 : vector<8x8xf32> to vector<1x8x8xf32>
    %c0_52 = arith.constant 0 : index
    %c1_53 = arith.constant 1 : index
    %c0_54 = arith.constant 0 : index
    %c0_55 = arith.constant 0 : index
    %80 = vector.load %arg7[%c0_52, %c1_53, %c0_54, %c0_55] : memref<1x4x32x8xbf16, #tpu.memory_space<vmem>>, vector<1x1x32x8xbf16>
    %81 = vector.shape_cast %80 : vector<1x1x32x8xbf16> to vector<32x8xbf16>
    %cst_56 = arith.constant dense<0.000000e+00> : vector<8x8xf32>
    %82 = tpu.matmul %31, %81, %cst_56 {dimension_numbers = #tpu.dot_dimension_numbers<[1], [0], [0], [1], [0, 0, 1, 1], [], []>} : vector<8x32xbf16>, vector<32x8xbf16>, vector<8x8xf32> -> vector<8x8xf32>
    %c0_57 = arith.constant 0 : index
    %c1_58 = arith.constant 1 : index
    %c0_59 = arith.constant 0 : index
    %c0_60 = arith.constant 0 : index
    %83 = vector.load %arg8[%c0_57, %c1_58, %c0_59, %c0_60] : memref<1x4x1x8xf32, #tpu.memory_space<vmem>>, vector<1x1x1x8xf32>
    %84 = vector.shape_cast %83 : vector<1x1x1x8xf32> to vector<1x8xf32>
    %85 = vector.broadcast %84 : vector<1x8xf32> to vector<8x8xf32>
    %86 = arith.addf %82, %85 : vector<8x8xf32>
    %87 = vector.shape_cast %86 : vector<8x8xf32> to vector<1x8x8xf32>
    %c0_61 = arith.constant 0 : index
    %c1_62 = arith.constant 1 : index
    %c0_63 = arith.constant 0 : index
    %c0_64 = arith.constant 0 : index
    %88 = vector.load %arg9[%c0_61, %c1_62, %c0_63, %c0_64] : memref<1x4x32x8xbf16, #tpu.memory_space<vmem>>, vector<1x1x32x8xbf16>
    %89 = vector.shape_cast %88 : vector<1x1x32x8xbf16> to vector<32x8xbf16>
    %cst_65 = arith.constant dense<0.000000e+00> : vector<8x8xf32>
    %90 = tpu.matmul %31, %89, %cst_65 {dimension_numbers = #tpu.dot_dimension_numbers<[1], [0], [0], [1], [0, 0, 1, 1], [], []>} : vector<8x32xbf16>, vector<32x8xbf16>, vector<8x8xf32> -> vector<8x8xf32>
    %c0_66 = arith.constant 0 : index
    %c1_67 = arith.constant 1 : index
    %c0_68 = arith.constant 0 : index
    %c0_69 = arith.constant 0 : index
    %91 = vector.load %arg10[%c0_66, %c1_67, %c0_68, %c0_69] : memref<1x4x1x8xf32, #tpu.memory_space<vmem>>, vector<1x1x1x8xf32>
    %92 = vector.shape_cast %91 : vector<1x1x1x8xf32> to vector<1x8xf32>
    %93 = vector.broadcast %92 : vector<1x8xf32> to vector<8x8xf32>
    %94 = arith.addf %90, %93 : vector<8x8xf32>
    %95 = vector.shape_cast %94 : vector<8x8xf32> to vector<1x8x8xf32>
    %96 = arith.truncf %79 : vector<1x8x8xf32> to vector<1x8x8xbf16>
    %97 = arith.truncf %87 : vector<1x8x8xf32> to vector<1x8x8xbf16>
    "tpu.trace_start"() <{level = 10 : i32, message = "bqd,bkd->bqk"}> : () -> ()
    %cst_70 = arith.constant dense<0.000000e+00> : vector<1x8x8xf32>
    %98 = tpu.matmul %96, %97, %cst_70 {dimension_numbers = #tpu.dot_dimension_numbers<[2], [2], [1], [1], [0, 0, 0, 1, 1, 1], [0], [0]>} : vector<1x8x8xbf16>, vector<1x8x8xbf16>, vector<1x8x8xf32> -> vector<1x8x8xf32>
    "tpu.trace_stop"() : () -> ()
    %cst_71 = arith.constant dense<0xFF800000> : vector<1x8xf32>
    %99 = vector.multi_reduction <maximumf>, %98, %cst_71 [2] : vector<1x8x8xf32> to vector<1x8xf32>
    %100 = vector.shape_cast %99 : vector<1x8xf32> to vector<1x8x1xf32>
    %101 = vector.broadcast %100 : vector<1x8x1xf32> to vector<1x8x8xf32>
    %102 = arith.subf %98, %101 : vector<1x8x8xf32>
    %103 = math.exp %102 : vector<1x8x8xf32>
    %cst_72 = arith.constant dense<0.000000e+00> : vector<1x8xf32>
    %104 = vector.multi_reduction <add>, %103, %cst_72 [2] : vector<1x8x8xf32> to vector<1x8xf32>
    %105 = vector.shape_cast %104 : vector<1x8xf32> to vector<1x8x1xf32>
    %106 = tpu.reciprocal %105 {approx = true} : vector<1x8x1xf32> -> vector<1x8x1xf32>
    %107 = vector.broadcast %106 : vector<1x8x1xf32> to vector<1x8x8xf32>
    %108 = arith.mulf %103, %107 : vector<1x8x8xf32>
    %109 = arith.truncf %108 : vector<1x8x8xf32> to vector<1x8x8xbf16>
    %110 = arith.truncf %95 : vector<1x8x8xf32> to vector<1x8x8xbf16>
    "tpu.trace_start"() <{level = 10 : i32, message = "bqk,bkd->bqd"}> : () -> ()
    %cst_73 = arith.constant dense<0.000000e+00> : vector<1x8x8xf32>
    %111 = tpu.matmul %109, %110, %cst_73 {dimension_numbers = #tpu.dot_dimension_numbers<[2], [1], [1], [2], [0, 0, 0, 1, 1, 2], [0], [0]>} : vector<1x8x8xbf16>, vector<1x8x8xbf16>, vector<1x8x8xf32> -> vector<1x8x8xf32>
    "tpu.trace_stop"() : () -> ()
    %c0_74 = arith.constant 0 : index
    %c2 = arith.constant 2 : index
    %c0_75 = arith.constant 0 : index
    %c0_76 = arith.constant 0 : index
    %112 = vector.load %arg5[%c0_74, %c2, %c0_75, %c0_76] : memref<1x4x32x8xbf16, #tpu.memory_space<vmem>>, vector<1x1x32x8xbf16>
    %113 = vector.shape_cast %112 : vector<1x1x32x8xbf16> to vector<32x8xbf16>
    %cst_77 = arith.constant dense<0.000000e+00> : vector<8x8xf32>
    %114 = tpu.matmul %31, %113, %cst_77 {dimension_numbers = #tpu.dot_dimension_numbers<[1], [0], [0], [1], [0, 0, 1, 1], [], []>} : vector<8x32xbf16>, vector<32x8xbf16>, vector<8x8xf32> -> vector<8x8xf32>
    %c0_78 = arith.constant 0 : index
    %c2_79 = arith.constant 2 : index
    %c0_80 = arith.constant 0 : index
    %c0_81 = arith.constant 0 : index
    %115 = vector.load %arg6[%c0_78, %c2_79, %c0_80, %c0_81] : memref<1x4x1x8xf32, #tpu.memory_space<vmem>>, vector<1x1x1x8xf32>
    %116 = vector.shape_cast %115 : vector<1x1x1x8xf32> to vector<1x8xf32>
    %117 = vector.broadcast %116 : vector<1x8xf32> to vector<8x8xf32>
    %118 = arith.addf %114, %117 : vector<8x8xf32>
    %119 = vector.shape_cast %118 : vector<8x8xf32> to vector<1x8x8xf32>
    %c0_82 = arith.constant 0 : index
    %c2_83 = arith.constant 2 : index
    %c0_84 = arith.constant 0 : index
    %c0_85 = arith.constant 0 : index
    %120 = vector.load %arg7[%c0_82, %c2_83, %c0_84, %c0_85] : memref<1x4x32x8xbf16, #tpu.memory_space<vmem>>, vector<1x1x32x8xbf16>
    %121 = vector.shape_cast %120 : vector<1x1x32x8xbf16> to vector<32x8xbf16>
    %cst_86 = arith.constant dense<0.000000e+00> : vector<8x8xf32>
    %122 = tpu.matmul %31, %121, %cst_86 {dimension_numbers = #tpu.dot_dimension_numbers<[1], [0], [0], [1], [0, 0, 1, 1], [], []>} : vector<8x32xbf16>, vector<32x8xbf16>, vector<8x8xf32> -> vector<8x8xf32>
    %c0_87 = arith.constant 0 : index
    %c2_88 = arith.constant 2 : index
    %c0_89 = arith.constant 0 : index
    %c0_90 = arith.constant 0 : index
    %123 = vector.load %arg8[%c0_87, %c2_88, %c0_89, %c0_90] : memref<1x4x1x8xf32, #tpu.memory_space<vmem>>, vector<1x1x1x8xf32>
    %124 = vector.shape_cast %123 : vector<1x1x1x8xf32> to vector<1x8xf32>
    %125 = vector.broadcast %124 : vector<1x8xf32> to vector<8x8xf32>
    %126 = arith.addf %122, %125 : vector<8x8xf32>
    %127 = vector.shape_cast %126 : vector<8x8xf32> to vector<1x8x8xf32>
    %c0_91 = arith.constant 0 : index
    %c2_92 = arith.constant 2 : index
    %c0_93 = arith.constant 0 : index
    %c0_94 = arith.constant 0 : index
    %128 = vector.load %arg9[%c0_91, %c2_92, %c0_93, %c0_94] : memref<1x4x32x8xbf16, #tpu.memory_space<vmem>>, vector<1x1x32x8xbf16>
    %129 = vector.shape_cast %128 : vector<1x1x32x8xbf16> to vector<32x8xbf16>
    %cst_95 = arith.constant dense<0.000000e+00> : vector<8x8xf32>
    %130 = tpu.matmul %31, %129, %cst_95 {dimension_numbers = #tpu.dot_dimension_numbers<[1], [0], [0], [1], [0, 0, 1, 1], [], []>} : vector<8x32xbf16>, vector<32x8xbf16>, vector<8x8xf32> -> vector<8x8xf32>
    %c0_96 = arith.constant 0 : index
    %c2_97 = arith.constant 2 : index
    %c0_98 = arith.constant 0 : index
    %c0_99 = arith.constant 0 : index
    %131 = vector.load %arg10[%c0_96, %c2_97, %c0_98, %c0_99] : memref<1x4x1x8xf32, #tpu.memory_space<vmem>>, vector<1x1x1x8xf32>
    %132 = vector.shape_cast %131 : vector<1x1x1x8xf32> to vector<1x8xf32>
    %133 = vector.broadcast %132 : vector<1x8xf32> to vector<8x8xf32>
    %134 = arith.addf %130, %133 : vector<8x8xf32>
    %135 = vector.shape_cast %134 : vector<8x8xf32> to vector<1x8x8xf32>
    %136 = arith.truncf %119 : vector<1x8x8xf32> to vector<1x8x8xbf16>
    %137 = arith.truncf %127 : vector<1x8x8xf32> to vector<1x8x8xbf16>
    "tpu.trace_start"() <{level = 10 : i32, message = "bqd,bkd->bqk"}> : () -> ()
    %cst_100 = arith.constant dense<0.000000e+00> : vector<1x8x8xf32>
    %138 = tpu.matmul %136, %137, %cst_100 {dimension_numbers = #tpu.dot_dimension_numbers<[2], [2], [1], [1], [0, 0, 0, 1, 1, 1], [0], [0]>} : vector<1x8x8xbf16>, vector<1x8x8xbf16>, vector<1x8x8xf32> -> vector<1x8x8xf32>
    "tpu.trace_stop"() : () -> ()
    %cst_101 = arith.constant dense<0xFF800000> : vector<1x8xf32>
    %139 = vector.multi_reduction <maximumf>, %138, %cst_101 [2] : vector<1x8x8xf32> to vector<1x8xf32>
    %140 = vector.shape_cast %139 : vector<1x8xf32> to vector<1x8x1xf32>
    %141 = vector.broadcast %140 : vector<1x8x1xf32> to vector<1x8x8xf32>
    %142 = arith.subf %138, %141 : vector<1x8x8xf32>
    %143 = math.exp %142 : vector<1x8x8xf32>
    %cst_102 = arith.constant dense<0.000000e+00> : vector<1x8xf32>
    %144 = vector.multi_reduction <add>, %143, %cst_102 [2] : vector<1x8x8xf32> to vector<1x8xf32>
    %145 = vector.shape_cast %144 : vector<1x8xf32> to vector<1x8x1xf32>
    %146 = tpu.reciprocal %145 {approx = true} : vector<1x8x1xf32> -> vector<1x8x1xf32>
    %147 = vector.broadcast %146 : vector<1x8x1xf32> to vector<1x8x8xf32>
    %148 = arith.mulf %143, %147 : vector<1x8x8xf32>
    %149 = arith.truncf %148 : vector<1x8x8xf32> to vector<1x8x8xbf16>
    %150 = arith.truncf %135 : vector<1x8x8xf32> to vector<1x8x8xbf16>
    "tpu.trace_start"() <{level = 10 : i32, message = "bqk,bkd->bqd"}> : () -> ()
    %cst_103 = arith.constant dense<0.000000e+00> : vector<1x8x8xf32>
    %151 = tpu.matmul %149, %150, %cst_103 {dimension_numbers = #tpu.dot_dimension_numbers<[2], [1], [1], [2], [0, 0, 0, 1, 1, 2], [0], [0]>} : vector<1x8x8xbf16>, vector<1x8x8xbf16>, vector<1x8x8xf32> -> vector<1x8x8xf32>
    "tpu.trace_stop"() : () -> ()
    %c0_104 = arith.constant 0 : index
    %c3 = arith.constant 3 : index
    %c0_105 = arith.constant 0 : index
    %c0_106 = arith.constant 0 : index
    %152 = vector.load %arg5[%c0_104, %c3, %c0_105, %c0_106] : memref<1x4x32x8xbf16, #tpu.memory_space<vmem>>, vector<1x1x32x8xbf16>
    %153 = vector.shape_cast %152 : vector<1x1x32x8xbf16> to vector<32x8xbf16>
    %cst_107 = arith.constant dense<0.000000e+00> : vector<8x8xf32>
    %154 = tpu.matmul %31, %153, %cst_107 {dimension_numbers = #tpu.dot_dimension_numbers<[1], [0], [0], [1], [0, 0, 1, 1], [], []>} : vector<8x32xbf16>, vector<32x8xbf16>, vector<8x8xf32> -> vector<8x8xf32>
    %c0_108 = arith.constant 0 : index
    %c3_109 = arith.constant 3 : index
    %c0_110 = arith.constant 0 : index
    %c0_111 = arith.constant 0 : index
    %155 = vector.load %arg6[%c0_108, %c3_109, %c0_110, %c0_111] : memref<1x4x1x8xf32, #tpu.memory_space<vmem>>, vector<1x1x1x8xf32>
    %156 = vector.shape_cast %155 : vector<1x1x1x8xf32> to vector<1x8xf32>
    %157 = vector.broadcast %156 : vector<1x8xf32> to vector<8x8xf32>
    %158 = arith.addf %154, %157 : vector<8x8xf32>
    %159 = vector.shape_cast %158 : vector<8x8xf32> to vector<1x8x8xf32>
    %c0_112 = arith.constant 0 : index
    %c3_113 = arith.constant 3 : index
    %c0_114 = arith.constant 0 : index
    %c0_115 = arith.constant 0 : index
    %160 = vector.load %arg7[%c0_112, %c3_113, %c0_114, %c0_115] : memref<1x4x32x8xbf16, #tpu.memory_space<vmem>>, vector<1x1x32x8xbf16>
    %161 = vector.shape_cast %160 : vector<1x1x32x8xbf16> to vector<32x8xbf16>
    %cst_116 = arith.constant dense<0.000000e+00> : vector<8x8xf32>
    %162 = tpu.matmul %31, %161, %cst_116 {dimension_numbers = #tpu.dot_dimension_numbers<[1], [0], [0], [1], [0, 0, 1, 1], [], []>} : vector<8x32xbf16>, vector<32x8xbf16>, vector<8x8xf32> -> vector<8x8xf32>
    %c0_117 = arith.constant 0 : index
    %c3_118 = arith.constant 3 : index
    %c0_119 = arith.constant 0 : index
    %c0_120 = arith.constant 0 : index
    %163 = vector.load %arg8[%c0_117, %c3_118, %c0_119, %c0_120] : memref<1x4x1x8xf32, #tpu.memory_space<vmem>>, vector<1x1x1x8xf32>
    %164 = vector.shape_cast %163 : vector<1x1x1x8xf32> to vector<1x8xf32>
    %165 = vector.broadcast %164 : vector<1x8xf32> to vector<8x8xf32>
    %166 = arith.addf %162, %165 : vector<8x8xf32>
    %167 = vector.shape_cast %166 : vector<8x8xf32> to vector<1x8x8xf32>
    %c0_121 = arith.constant 0 : index
    %c3_122 = arith.constant 3 : index
    %c0_123 = arith.constant 0 : index
    %c0_124 = arith.constant 0 : index
    %168 = vector.load %arg9[%c0_121, %c3_122, %c0_123, %c0_124] : memref<1x4x32x8xbf16, #tpu.memory_space<vmem>>, vector<1x1x32x8xbf16>
    %169 = vector.shape_cast %168 : vector<1x1x32x8xbf16> to vector<32x8xbf16>
    %cst_125 = arith.constant dense<0.000000e+00> : vector<8x8xf32>
    %170 = tpu.matmul %31, %169, %cst_125 {dimension_numbers = #tpu.dot_dimension_numbers<[1], [0], [0], [1], [0, 0, 1, 1], [], []>} : vector<8x32xbf16>, vector<32x8xbf16>, vector<8x8xf32> -> vector<8x8xf32>
    %c0_126 = arith.constant 0 : index
    %c3_127 = arith.constant 3 : index
    %c0_128 = arith.constant 0 : index
    %c0_129 = arith.constant 0 : index
    %171 = vector.load %arg10[%c0_126, %c3_127, %c0_128, %c0_129] : memref<1x4x1x8xf32, #tpu.memory_space<vmem>>, vector<1x1x1x8xf32>
    %172 = vector.shape_cast %171 : vector<1x1x1x8xf32> to vector<1x8xf32>
    %173 = vector.broadcast %172 : vector<1x8xf32> to vector<8x8xf32>
    %174 = arith.addf %170, %173 : vector<8x8xf32>
    %175 = vector.shape_cast %174 : vector<8x8xf32> to vector<1x8x8xf32>
    %176 = arith.truncf %159 : vector<1x8x8xf32> to vector<1x8x8xbf16>
    %177 = arith.truncf %167 : vector<1x8x8xf32> to vector<1x8x8xbf16>
    "tpu.trace_start"() <{level = 10 : i32, message = "bqd,bkd->bqk"}> : () -> ()
    %cst_130 = arith.constant dense<0.000000e+00> : vector<1x8x8xf32>
    %178 = tpu.matmul %176, %177, %cst_130 {dimension_numbers = #tpu.dot_dimension_numbers<[2], [2], [1], [1], [0, 0, 0, 1, 1, 1], [0], [0]>} : vector<1x8x8xbf16>, vector<1x8x8xbf16>, vector<1x8x8xf32> -> vector<1x8x8xf32>
    "tpu.trace_stop"() : () -> ()
    %cst_131 = arith.constant dense<0xFF800000> : vector<1x8xf32>
    %179 = vector.multi_reduction <maximumf>, %178, %cst_131 [2] : vector<1x8x8xf32> to vector<1x8xf32>
    %180 = vector.shape_cast %179 : vector<1x8xf32> to vector<1x8x1xf32>
    %181 = vector.broadcast %180 : vector<1x8x1xf32> to vector<1x8x8xf32>
    %182 = arith.subf %178, %181 : vector<1x8x8xf32>
    %183 = math.exp %182 : vector<1x8x8xf32>
    %cst_132 = arith.constant dense<0.000000e+00> : vector<1x8xf32>
    %184 = vector.multi_reduction <add>, %183, %cst_132 [2] : vector<1x8x8xf32> to vector<1x8xf32>
    %185 = vector.shape_cast %184 : vector<1x8xf32> to vector<1x8x1xf32>
    %186 = tpu.reciprocal %185 {approx = true} : vector<1x8x1xf32> -> vector<1x8x1xf32>
    %187 = vector.broadcast %186 : vector<1x8x1xf32> to vector<1x8x8xf32>
    %188 = arith.mulf %183, %187 : vector<1x8x8xf32>
    %189 = arith.truncf %188 : vector<1x8x8xf32> to vector<1x8x8xbf16>
    %190 = arith.truncf %175 : vector<1x8x8xf32> to vector<1x8x8xbf16>
    "tpu.trace_start"() <{level = 10 : i32, message = "bqk,bkd->bqd"}> : () -> ()
    %cst_133 = arith.constant dense<0.000000e+00> : vector<1x8x8xf32>
    %191 = tpu.matmul %189, %190, %cst_133 {dimension_numbers = #tpu.dot_dimension_numbers<[2], [1], [1], [2], [0, 0, 0, 1, 1, 2], [0], [0]>} : vector<1x8x8xbf16>, vector<1x8x8xbf16>, vector<1x8x8xf32> -> vector<1x8x8xf32>
    "tpu.trace_stop"() : () -> ()
    %192 = tpu.concatenate %71, %111, %151, %191 in 2 : vector<1x8x8xf32>, vector<1x8x8xf32>, vector<1x8x8xf32>, vector<1x8x8xf32> -> vector<1x8x32xf32>
    %193 = vector.shape_cast %192 : vector<1x8x32xf32> to vector<8x32xf32>
    %194 = arith.truncf %193 : vector<8x32xf32> to vector<8x32xbf16>
    %c0_134 = arith.constant 0 : index
    %c0_135 = arith.constant 0 : index
    %c0_136 = arith.constant 0 : index
    %195 = vector.load %arg11[%c0_134, %c0_135, %c0_136] : memref<1x32x32xbf16, #tpu.memory_space<vmem>>, vector<1x32x32xbf16>
    %196 = vector.shape_cast %195 : vector<1x32x32xbf16> to vector<32x32xbf16>
    %cst_137 = arith.constant dense<0.000000e+00> : vector<8x32xf32>
    %197 = tpu.matmul %194, %196, %cst_137 {dimension_numbers = #tpu.dot_dimension_numbers<[1], [0], [0], [1], [0, 0, 1, 1], [], []>} : vector<8x32xbf16>, vector<32x32xbf16>, vector<8x32xf32> -> vector<8x32xf32>
    %c0_138 = arith.constant 0 : index
    %c0_139 = arith.constant 0 : index
    %c0_140 = arith.constant 0 : index
    %198 = vector.load %arg12[%c0_138, %c0_139, %c0_140] : memref<1x1x32xf32, #tpu.memory_space<vmem>>, vector<1x1x32xf32>
    %199 = vector.shape_cast %198 : vector<1x1x32xf32> to vector<1x32xf32>
    %200 = vector.broadcast %199 : vector<1x32xf32> to vector<8x32xf32>
    %201 = arith.addf %197, %200 : vector<8x32xf32>
    %202 = arith.addf %4, %201 : vector<8x32xf32>
    %c0_141 = arith.constant 0 : index
    %c0_142 = arith.constant 0 : index
    %c0_143 = arith.constant 0 : index
    %203 = vector.load %arg13[%c0_141, %c0_142, %c0_143] : memref<1x1x32xf32, #tpu.memory_space<vmem>>, vector<1x1x32xf32>
    %204 = vector.shape_cast %203 : vector<1x1x32xf32> to vector<1x32xf32>
    %c0_144 = arith.constant 0 : index
    %c0_145 = arith.constant 0 : index
    %c0_146 = arith.constant 0 : index
    %205 = vector.load %arg14[%c0_144, %c0_145, %c0_146] : memref<1x1x32xf32, #tpu.memory_space<vmem>>, vector<1x1x32xf32>
    %206 = vector.shape_cast %205 : vector<1x1x32xf32> to vector<1x32xf32>
    %cst_147 = arith.constant dense<0.000000e+00> : vector<8xf32>
    %207 = vector.multi_reduction <add>, %202, %cst_147 [1] : vector<8x32xf32> to vector<8xf32>
    %208 = vector.shape_cast %207 : vector<8xf32> to vector<8x1xf32>
    %cst_148 = arith.constant 3.200000e+01 : f32
    %209 = vector.broadcast %cst_148 : f32 to vector<8x1xf32>
    %210 = arith.divf %208, %209 : vector<8x1xf32>
    %211 = vector.broadcast %210 : vector<8x1xf32> to vector<8x32xf32>
    %212 = arith.subf %202, %211 : vector<8x32xf32>
    %213 = arith.mulf %212, %212 : vector<8x32xf32>
    %cst_149 = arith.constant dense<0.000000e+00> : vector<8xf32>
    %214 = vector.multi_reduction <add>, %213, %cst_149 [1] : vector<8x32xf32> to vector<8xf32>
    %215 = vector.shape_cast %214 : vector<8xf32> to vector<8x1xf32>
    %cst_150 = arith.constant 3.200000e+01 : f32
    %216 = vector.broadcast %cst_150 : f32 to vector<8x1xf32>
    %217 = arith.divf %215, %216 : vector<8x1xf32>
    %218 = vector.broadcast %210 : vector<8x1xf32> to vector<8x32xf32>
    %219 = arith.subf %202, %218 : vector<8x32xf32>
    %cst_151 = arith.constant 9.99999974E-6 : f32
    %220 = vector.broadcast %cst_151 : f32 to vector<8x1xf32>
    %221 = arith.addf %217, %220 : vector<8x1xf32>
    %222 = math.rsqrt %221 : vector<8x1xf32>
    %223 = vector.broadcast %222 : vector<8x1xf32> to vector<8x32xf32>
    %224 = arith.mulf %219, %223 : vector<8x32xf32>
    %225 = vector.broadcast %204 : vector<1x32xf32> to vector<8x32xf32>
    %226 = arith.mulf %224, %225 : vector<8x32xf32>
    %227 = vector.broadcast %206 : vector<1x32xf32> to vector<8x32xf32>
    %228 = arith.addf %226, %227 : vector<8x32xf32>
    %229 = arith.truncf %228 : vector<8x32xf32> to vector<8x32xbf16>
    %c0_152 = arith.constant 0 : index
    %c0_153 = arith.constant 0 : index
    %c0_154 = arith.constant 0 : index
    %230 = vector.load %arg15[%c0_152, %c0_153, %c0_154] : memref<1x32x16xbf16, #tpu.memory_space<vmem>>, vector<1x32x16xbf16>
    %231 = vector.shape_cast %230 : vector<1x32x16xbf16> to vector<32x16xbf16>
    %cst_155 = arith.constant dense<0.000000e+00> : vector<8x16xf32>
    %232 = tpu.matmul %229, %231, %cst_155 {dimension_numbers = #tpu.dot_dimension_numbers<[1], [0], [0], [1], [0, 0, 1, 1], [], []>} : vector<8x32xbf16>, vector<32x16xbf16>, vector<8x16xf32> -> vector<8x16xf32>
    %c0_156 = arith.constant 0 : index
    %c0_157 = arith.constant 0 : index
    %c0_158 = arith.constant 0 : index
    %233 = vector.load %arg16[%c0_156, %c0_157, %c0_158] : memref<1x1x16xf32, #tpu.memory_space<vmem>>, vector<1x1x16xf32>
    %234 = vector.shape_cast %233 : vector<1x1x16xf32> to vector<1x16xf32>
    %235 = vector.broadcast %234 : vector<1x16xf32> to vector<8x16xf32>
    %236 = arith.addf %232, %235 : vector<8x16xf32>
    %cst_159 = arith.constant 0.000000e+00 : f32
    %237 = vector.broadcast %cst_159 : f32 to vector<8x16xf32>
    %238 = arith.maximumf %236, %237 : vector<8x16xf32>
    %239 = arith.truncf %238 : vector<8x16xf32> to vector<8x16xbf16>
    %c0_160 = arith.constant 0 : index
    %c0_161 = arith.constant 0 : index
    %c0_162 = arith.constant 0 : index
    %240 = vector.load %arg17[%c0_160, %c0_161, %c0_162] : memref<1x16x32xbf16, #tpu.memory_space<vmem>>, vector<1x16x32xbf16>
    %241 = vector.shape_cast %240 : vector<1x16x32xbf16> to vector<16x32xbf16>
    %cst_163 = arith.constant dense<0.000000e+00> : vector<8x32xf32>
    %242 = tpu.matmul %239, %241, %cst_163 {dimension_numbers = #tpu.dot_dimension_numbers<[1], [0], [0], [1], [0, 0, 1, 1], [], []>} : vector<8x16xbf16>, vector<16x32xbf16>, vector<8x32xf32> -> vector<8x32xf32>
    %c0_164 = arith.constant 0 : index
    %c0_165 = arith.constant 0 : index
    %c0_166 = arith.constant 0 : index
    %243 = vector.load %arg18[%c0_164, %c0_165, %c0_166] : memref<1x1x32xf32, #tpu.memory_space<vmem>>, vector<1x1x32xf32>
    %244 = vector.shape_cast %243 : vector<1x1x32xf32> to vector<1x32xf32>
    %245 = vector.broadcast %244 : vector<1x32xf32> to vector<8x32xf32>
    %246 = arith.addf %242, %245 : vector<8x32xf32>
    %247 = arith.addf %202, %246 : vector<8x32xf32>
    %248 = vector.shape_cast %247 : vector<8x32xf32> to vector<1x8x32xf32>
    %c0_167 = arith.constant 0 : index
    %c0_168 = arith.constant 0 : index
    %c0_169 = arith.constant 0 : index
    %249 = vector.load %arg21[%c0_167, %c0_168, %c0_169] : memref<1x8x32xf32, #tpu.memory_space<vmem>>, vector<1x8x32xf32>
    tpu.vector_store %arg21[%c0_167, %c0_168, %c0_169], %248 {strides = array<i32>} : memref<1x8x32xf32, #tpu.memory_space<vmem>>, vector<1x8x32xf32>,
    %250 = tpu.iota {dimensions = array<i32: 1>} : vector<1x2x1xi32>
    %251 = vector.broadcast %arg1 : i32 to vector<1x2x1xi32>
    %252 = arith.cmpi eq, %250, %251 : vector<1x2x1xi32>
    %253 = vector.extract_strided_slice %248 {offsets = [0, 0, 0], sizes = [1, 1, 32], strides = [1, 1, 1]} : vector<1x8x32xf32> to vector<1x1x32xf32>
    %c0_170 = arith.constant 0 : index
    %c0_171 = arith.constant 0 : index
    %c0_172 = arith.constant 0 : index
    %254 = vector.load %arg20[%c0_170, %c0_171, %c0_172] : memref<1x2x32xf32, #tpu.memory_space<vmem>>, vector<1x2x32xf32>
    %255 = vector.shape_cast %252 : vector<1x2x1xi1> to vector<1x2x1xi1>
    %256 = vector.broadcast %255 : vector<1x2x1xi1> to vector<1x2x32xi1>
    %257 = vector.shape_cast %253 : vector<1x1x32xf32> to vector<1x1x32xf32>
    %258 = vector.broadcast %257 : vector<1x1x32xf32> to vector<1x2x32xf32>
    %259 = arith.select %256, %258, %254 : vector<1x2x32xi1>, vector<1x2x32xf32>
    %c0_173 = arith.constant 0 : index
    %c0_174 = arith.constant 0 : index
    %c0_175 = arith.constant 0 : index
    %260 = vector.load %arg20[%c0_173, %c0_174, %c0_175] : memref<1x2x32xf32, #tpu.memory_space<vmem>>, vector<1x2x32xf32>
    tpu.vector_store %arg20[%c0_173, %c0_174, %c0_175], %259 {strides = array<i32>} : memref<1x2x32xf32, #tpu.memory_space<vmem>>, vector<1x2x32xf32>,
    %c1_i32 = arith.constant 1 : i32
    %261 = arith.cmpi eq, %arg1, %c1_i32 : i32
    %262 = arith.extui %261 : i1 to i32
    %c0_i32_176 = arith.constant 0 : i32
    %263 = arith.cmpi ne, %262, %c0_i32_176 : i32
    scf.if %263 {
      %c0_177 = arith.constant 0 : index
      %c0_178 = arith.constant 0 : index
      %c0_179 = arith.constant 0 : index
      %264 = vector.load %arg19[%c0_177, %c0_178, %c0_179] : memref<1x8x32xf32, #tpu.memory_space<vmem>>, vector<1x8x32xf32>
      tpu.vector_store %arg19[%c0_177, %c0_178, %c0_179], %248 {strides = array<i32>} : memref<1x8x32xf32, #tpu.memory_space<vmem>>, vector<1x8x32xf32>,
    } else {
    }
    return
  }
  func.func @transform_0(%arg0: i32, %arg1: i32) -> (i32, i32, i32) {
    %c0_i32 = arith.constant 0 : i32
    %c0_i32_0 = arith.constant 0 : i32
    %c0_i32_1 = arith.constant 0 : i32
    return %arg0, %c0_i32, %c0_i32_0 : i32, i32, i32
  }
  func.func @transform_1(%arg0: i32, %arg1: i32) -> (i32, i32, i32) {
    %c0_i32 = arith.constant 0 : i32
    %c0_i32_0 = arith.constant 0 : i32
    %c0_i32_1 = arith.constant 0 : i32
    return %arg1, %c0_i32, %c0_i32_0 : i32, i32, i32
  }
  func.func @transform_2(%arg0: i32, %arg1: i32) -> (i32, i32, i32) {
    %c0_i32 = arith.constant 0 : i32
    %c0_i32_0 = arith.constant 0 : i32
    %c0_i32_1 = arith.constant 0 : i32
    return %arg1, %c0_i32, %c0_i32_0 : i32, i32, i32
  }
  func.func @transform_3(%arg0: i32, %arg1: i32) -> (i32, i32, i32, i32) {
    %c0_i32 = arith.constant 0 : i32
    %c0_i32_0 = arith.constant 0 : i32
    %c0_i32_1 = arith.constant 0 : i32
    %c0_i32_2 = arith.constant 0 : i32
    return %arg1, %c0_i32, %c0_i32_0, %c0_i32_1 : i32, i32, i32, i32
  }
  func.func @transform_4(%arg0: i32, %arg1: i32) -> (i32, i32, i32, i32) {
    %c0_i32 = arith.constant 0 : i32
    %c0_i32_0 = arith.constant 0 : i32
    %c0_i32_1 = arith.constant 0 : i32
    %c0_i32_2 = arith.constant 0 : i32
    return %arg1, %c0_i32, %c0_i32_0, %c0_i32_1 : i32, i32, i32, i32
  }
  func.func @transform_5(%arg0: i32, %arg1: i32) -> (i32, i32, i32, i32) {
    %c0_i32 = arith.constant 0 : i32
    %c0_i32_0 = arith.constant 0 : i32
    %c0_i32_1 = arith.constant 0 : i32
    %c0_i32_2 = arith.constant 0 : i32
    return %arg1, %c0_i32, %c0_i32_0, %c0_i32_1 : i32, i32, i32, i32
  }
  func.func @transform_6(%arg0: i32, %arg1: i32) -> (i32, i32, i32, i32) {
    %c0_i32 = arith.constant 0 : i32
    %c0_i32_0 = arith.constant 0 : i32
    %c0_i32_1 = arith.constant 0 : i32
    %c0_i32_2 = arith.constant 0 : i32
    return %arg1, %c0_i32, %c0_i32_0, %c0_i32_1 : i32, i32, i32, i32
  }
  func.func @transform_7(%arg0: i32, %arg1: i32) -> (i32, i32, i32, i32) {
    %c0_i32 = arith.constant 0 : i32
    %c0_i32_0 = arith.constant 0 : i32
    %c0_i32_1 = arith.constant 0 : i32
    %c0_i32_2 = arith.constant 0 : i32
    return %arg1, %c0_i32, %c0_i32_0, %c0_i32_1 : i32, i32, i32, i32
  }
  func.func @transform_8(%arg0: i32, %arg1: i32) -> (i32, i32, i32, i32) {
    %c0_i32 = arith.constant 0 : i32
    %c0_i32_0 = arith.constant 0 : i32
    %c0_i32_1 = arith.constant 0 : i32
    %c0_i32_2 = arith.constant 0 : i32
    return %arg1, %c0_i32, %c0_i32_0, %c0_i32_1 : i32, i32, i32, i32
  }
  func.func @transform_9(%arg0: i32, %arg1: i32) -> (i32, i32, i32) {
    %c0_i32 = arith.constant 0 : i32
    %c0_i32_0 = arith.constant 0 : i32
    %c0_i32_1 = arith.constant 0 : i32
    return %arg1, %c0_i32, %c0_i32_0 : i32, i32, i32
  }
  func.func @transform_10(%arg0: i32, %arg1: i32) -> (i32, i32, i32) {
    %c0_i32 = arith.constant 0 : i32
    %c0_i32_0 = arith.constant 0 : i32
    %c0_i32_1 = arith.constant 0 : i32
    return %arg1, %c0_i32, %c0_i32_0 : i32, i32, i32
  }
  func.func @transform_11(%arg0: i32, %arg1: i32) -> (i32, i32, i32) {
    %c0_i32 = arith.constant 0 : i32
    %c0_i32_0 = arith.constant 0 : i32
    %c0_i32_1 = arith.constant 0 : i32
    return %arg1, %c0_i32, %c0_i32_0 : i32, i32, i32
  }
  func.func @transform_12(%arg0: i32, %arg1: i32) -> (i32, i32, i32) {
    %c0_i32 = arith.constant 0 : i32
    %c0_i32_0 = arith.constant 0 : i32
    %c0_i32_1 = arith.constant 0 : i32
    return %arg1, %c0_i32, %c0_i32_0 : i32, i32, i32
  }
  func.func @transform_13(%arg0: i32, %arg1: i32) -> (i32, i32, i32) {
    %c0_i32 = arith.constant 0 : i32
    %c0_i32_0 = arith.constant 0 : i32
    %c0_i32_1 = arith.constant 0 : i32
    return %arg1, %c0_i32, %c0_i32_0 : i32, i32, i32
  }
  func.func @transform_14(%arg0: i32, %arg1: i32) -> (i32, i32, i32) {
    %c0_i32 = arith.constant 0 : i32
    %c0_i32_0 = arith.constant 0 : i32
    %c0_i32_1 = arith.constant 0 : i32
    return %arg1, %c0_i32, %c0_i32_0 : i32, i32, i32
  }
  func.func @transform_15(%arg0: i32, %arg1: i32) -> (i32, i32, i32) {
    %c0_i32 = arith.constant 0 : i32
    %c0_i32_0 = arith.constant 0 : i32
    %c0_i32_1 = arith.constant 0 : i32
    return %arg1, %c0_i32, %c0_i32_0 : i32, i32, i32
  }
  func.func @transform_16(%arg0: i32, %arg1: i32) -> (i32, i32, i32) {
    %c0_i32 = arith.constant 0 : i32
    %c0_i32_0 = arith.constant 0 : i32
    %c0_i32_1 = arith.constant 0 : i32
    return %arg1, %c0_i32, %c0_i32_0 : i32, i32, i32
  }
  func.func @transform_17(%arg0: i32, %arg1: i32) -> (i32, i32, i32) {
    %c0_i32 = arith.constant 0 : i32
    %c0_i32_0 = arith.constant 0 : i32
    %c0_i32_1 = arith.constant 0 : i32
    return %arg0, %c0_i32, %c0_i32_0 : i32, i32, i32
  }
  func.func @transform_18(%arg0: i32, %arg1: i32) -> (i32, i32, i32) {
    %c0_i32 = arith.constant 0 : i32
    %c0_i32_0 = arith.constant 0 : i32
    %c0_i32_1 = arith.constant 0 : i32
    return %arg0, %c0_i32, %c0_i32_0 : i32, i32, i32
  }
}

</mosaic_0001>

<llo_original>
// kernel: tpu_custom_call.1
$region0: #{tpu_custom_call.1}
  #allocation0 [shape = 'u32[]', space=smem, size = 0x4, offset = 0x4, fixed_abs, tag = 'smem constant byte address 0x4 - core index']
  #allocation1 [shape = 'u32[144,128]{1,0:T(1,128)}', space=vmem, size = 0x12000, scoped, tag = 'internal scratch']
  #allocation2 [shape = 'f32[1,8,32]{2,1,0:T(8,128)}', space=vmem, size = 0x1000, scoped, tag = 'scratch operand']
  %s0 = inlined_call_operand.vmem [shape: f32[2,8,32], index: 0, kind: input, shape index: {}]
  %s1 = inlined_call_operand.vmem [shape: f32[2,1,32], index: 1, kind: input, shape index: {}]
  %s2 = inlined_call_operand.vmem [shape: f32[2,1,32], index: 2, kind: input, shape index: {}]
  %s3 = inlined_call_operand.vmem [shape: bf16[2,4,32,8], index: 3, kind: input, shape index: {}]
  %s4 = inlined_call_operand.vmem [shape: f32[2,4,1,8], index: 4, kind: input, shape index: {}]
  %s5 = inlined_call_operand.vmem [shape: bf16[2,4,32,8], index: 5, kind: input, shape index: {}]
  %s6 = inlined_call_operand.vmem [shape: f32[2,4,1,8], index: 6, kind: input, shape index: {}]
  %s7 = inlined_call_operand.vmem [shape: bf16[2,4,32,8], index: 7, kind: input, shape index: {}]
  %s8 = inlined_call_operand.vmem [shape: f32[2,4,1,8], index: 8, kind: input, shape index: {}]
  %s9 = inlined_call_operand.vmem [shape: bf16[2,32,32], index: 9, kind: input, shape index: {}]
  %s10 = inlined_call_operand.vmem [shape: f32[2,1,32], index: 10, kind: input, shape index: {}]
  %s11 = inlined_call_operand.vmem [shape: f32[2,1,32], index: 11, kind: input, shape index: {}]
  %s12 = inlined_call_operand.vmem [shape: f32[2,1,32], index: 12, kind: input, shape index: {}]
  %s13 = inlined_call_operand.vmem [shape: bf16[2,32,16], index: 13, kind: input, shape index: {}]
  %s14 = inlined_call_operand.vmem [shape: f32[2,1,16], index: 14, kind: input, shape index: {}]
  %s15 = inlined_call_operand.vmem [shape: bf16[2,16,32], index: 15, kind: input, shape index: {}]
  %s16 = inlined_call_operand.vmem [shape: f32[2,1,32], index: 16, kind: input, shape index: {}]
  %s17 = inlined_call_operand.hbm [shape: f32[2,8,32], index: 17, kind: output, shape index: {0}]
  %s18 = inlined_call_operand.hbm [shape: f32[2,2,32], index: 18, kind: output, shape index: {1}]
  %19 = xla_tuple %s17, %s18
  %s20 = sld [smem:[#allocation0]]
  $region117: #{tpu_custom_call.1} parent=0
    _
  %s22 = ssub.s32 1, %s20
  %s23 = scalar_select 0, %s22, %s20
  $region1: #{tpu_custom_call.1} parent=0
    #allocation3 [shape = 'u8[8192]{0}', space=vmem, size = 0x2000, scoped, tag = 'output window, operand 0']
    #allocation4 [shape = 's32[2]{0}', space=sflag, size = 0x8, scoped, tag = 'scoped memory for tpu_custom_call.1']
    #allocation5 [shape = 'u8[2048]{0}', space=vmem, size = 0x800, scoped, tag = 'output window, operand 1']
    #allocation6 [shape = 's32[2]{0}', space=sflag, size = 0x8, scoped, tag = 'scoped memory for tpu_custom_call.1']
    %24 = vsyncpa [#allocation4], 0
    %s25 = scalar_lea.sflag [#allocation4], 1
    %26 = vsyncpa %s25, 0
    %27 = vsyncpa [#allocation6], 0
    %s28 = scalar_lea.sflag [#allocation6], 1
    %29 = vsyncpa %s28, 0
    loop: start=0, step=1, limit=6
    $region2: #{tpu_custom_call.1} parent=1 // loop_pre_header
      _
    $region3: #{tpu_custom_call.1} parent=1 // loop_header
      %s31 = sphi 0, %s35
      %p32 = scmp.ge.s32.totalorder %s31, 6
      %s38 = sphi 0, %s50
      %s39 = sphi 0, %s46
      %s40 = sphi 0, %s38
      %s41 = sphi 0, %s39
      %s42 = sphi 0, %s40
      %s43 = sphi 0, %s41
      %s53 = sphi 0, %s55
      %s56 = sphi 0, %s53
      %s57 = sphi 0, %s56
      %s73 = sphi 0, %s57
      %s79 = sphi 0, %s81
      %s82 = sphi 0, %s79
      %s83 = sphi 0, %s82
      %s99 = sphi 0, %s83
      %s105 = sphi 0, %s107
      %s108 = sphi 0, %s105
      %s109 = sphi 0, %s108
      %s125 = sphi 0, %s109
      %s131 = sphi 0, %s133
      %s134 = sphi 0, %s131
      %s135 = sphi 0, %s134
      %s151 = sphi 0, %s135
      %s157 = sphi 0, %s159
      %s160 = sphi 0, %s157
      %s161 = sphi 0, %s160
      %s177 = sphi 0, %s161
      %s183 = sphi 0, %s185
      %s186 = sphi 0, %s183
      %s187 = sphi 0, %s186
      %s203 = sphi 0, %s187
      %s209 = sphi 0, %s211
      %s212 = sphi 0, %s209
      %s213 = sphi 0, %s212
      %s229 = sphi 0, %s213
      %s235 = sphi 0, %s237
      %s238 = sphi 0, %s235
      %s239 = sphi 0, %s238
      %s255 = sphi 0, %s239
      %s261 = sphi 0, %s263
      %s264 = sphi 0, %s261
      %s265 = sphi 0, %s264
      %s281 = sphi 0, %s265
      %s287 = sphi 0, %s289
      %s290 = sphi 0, %s287
      %s291 = sphi 0, %s290
      %s307 = sphi 0, %s291
      %s313 = sphi 0, %s315
      %s316 = sphi 0, %s313
      %s317 = sphi 0, %s316
      %s333 = sphi 0, %s317
      %s339 = sphi 0, %s341
      %s342 = sphi 0, %s339
      %s343 = sphi 0, %s342
      %s359 = sphi 0, %s343
      %s365 = sphi 0, %s367
      %s368 = sphi 0, %s365
      %s369 = sphi 0, %s368
      %s385 = sphi 0, %s369
      %s391 = sphi 0, %s393
      %s394 = sphi 0, %s391
      %s395 = sphi 0, %s394
      %s411 = sphi 0, %s395
      %s417 = sphi 0, %s419
      %s420 = sphi 0, %s417
      %s421 = sphi 0, %s420
      %s437 = sphi 0, %s421
      %s443 = sphi 0, %s445
      %s446 = sphi 0, %s443
      %s447 = sphi 0, %s446
      %s463 = sphi 0, %s447
      %s469 = sphi 0, %s471
      %s472 = sphi 0, %s469
      %s473 = sphi 0, %s472
      %s489 = sphi 0, %s473
      %s495 = sphi 0, %s497
      %s498 = sphi 0, %s495
      %s499 = sphi 0, %s498
      %s515 = sphi 0, %s499
      %s521 = sphi 0, %s523
      %s524 = sphi 0, %s521
      %s525 = sphi 0, %s524
      %s541 = sphi 0, %s525
    $region4: #{tpu_custom_call.1} parent=1 // loop_header_branch
      %34 = sbr.rel (%p32) target = $region8
    $region5: #{tpu_custom_call.1} parent=1 // loop_body
      %s36 = ssub.s32 %s31, 1
      %s37 = ssub.s32 %s31, 2
      %s44 = sadd.s32 1, %s39
      %p45 = scmp.ge.s32.totalorder %s44, 2
      %s46 = scalar_select %p45, 0, %s44
      %s47 = sadd.s32 1, %s38
      %s48 = scalar_select %p45, %s47, %s38
      %p49 = scmp.ge.s32.totalorder %s48, 2
      %s50 = scalar_select %p49, 0, %s48
      %s51 = ssub.s32 %s38, %s50
      %p52 = scmp.eq.s32.totalorder %s51, 0
      %s54 = sadd.s32 %s53, 1
      %s55 = scalar_select %p52, %s53, %s54
      %p58 = pneg %p52
      %p59 = scmp.eq.s32.totalorder %s31, 3
      %p60 = por %p58, %p59
      %p61 = scmp.ne.s32.totalorder %s53, %s56
      %p62 = scmp.eq.s32.totalorder %s31, 0
      %p63 = por %p61, %p62
      %p64 = scmp.ne.s32.totalorder %s53, %s56
      %p65 = scmp.eq.s32.totalorder %s36, 3
      %p66 = por %p64, %p65
      %p67 = scmp.ne.s32.totalorder %s56, %s57
      %p68 = scmp.eq.s32.totalorder %s36, 0
      %p69 = por %p67, %p68
      %p70 = scmp.ne.s32.totalorder %s56, %s57
      %p71 = scmp.eq.s32.totalorder %s37, 3
      %p72 = por %p70, %p71
      %p74 = scmp.ne.s32.totalorder %s57, %s73
      %p75 = scmp.eq.s32.totalorder %s37, 0
      %p76 = por %p74, %p75
      %s77 = ssub.s32 %s39, %s46
      %p78 = scmp.eq.s32.totalorder %s77, 0
      %s80 = sadd.s32 %s79, 1
      %s81 = scalar_select %p78, %s79, %s80
      %p84 = pneg %p78
      %p85 = scmp.eq.s32.totalorder %s31, 3
      %p86 = por %p84, %p85
      %p87 = scmp.ne.s32.totalorder %s79, %s82
      %p88 = scmp.eq.s32.totalorder %s31, 0
      %p89 = por %p87, %p88
      %p90 = scmp.ne.s32.totalorder %s79, %s82
      %p91 = scmp.eq.s32.totalorder %s36, 3
      %p92 = por %p90, %p91
      %p93 = scmp.ne.s32.totalorder %s82, %s83
      %p94 = scmp.eq.s32.totalorder %s36, 0
      %p95 = por %p93, %p94
      %p96 = scmp.ne.s32.totalorder %s82, %s83
      %p97 = scmp.eq.s32.totalorder %s37, 3
      %p98 = por %p96, %p97
      %p100 = scmp.ne.s32.totalorder %s83, %s99
      %p101 = scmp.eq.s32.totalorder %s37, 0
      %p102 = por %p100, %p101
      %s103 = ssub.s32 %s39, %s46
      %p104 = scmp.eq.s32.totalorder %s103, 0
      %s106 = sadd.s32 %s105, 1
      %s107 = scalar_select %p104, %s105, %s106
      %p110 = pneg %p104
      %p111 = scmp.eq.s32.totalorder %s31, 3
      %p112 = por %p110, %p111
      %p113 = scmp.ne.s32.totalorder %s105, %s108
      %p114 = scmp.eq.s32.totalorder %s31, 0
      %p115 = por %p113, %p114
      %p116 = scmp.ne.s32.totalorder %s105, %s108
      %p117 = scmp.eq.s32.totalorder %s36, 3
      %p118 = por %p116, %p117
      %p119 = scmp.ne.s32.totalorder %s108, %s109
      %p120 = scmp.eq.s32.totalorder %s36, 0
      %p121 = por %p119, %p120
      %p122 = scmp.ne.s32.totalorder %s108, %s109
      %p123 = scmp.eq.s32.totalorder %s37, 3
      %p124 = por %p122, %p123
      %p126 = scmp.ne.s32.totalorder %s109, %s125
      %p127 = scmp.eq.s32.totalorder %s37, 0
      %p128 = por %p126, %p127
      %s129 = ssub.s32 %s39, %s46
      %p130 = scmp.eq.s32.totalorder %s129, 0
      %s132 = sadd.s32 %s131, 1
      %s133 = scalar_select %p130, %s131, %s132
      %p136 = pneg %p130
      %p137 = scmp.eq.s32.totalorder %s31, 3
      %p138 = por %p136, %p137
      %p139 = scmp.ne.s32.totalorder %s131, %s134
      %p140 = scmp.eq.s32.totalorder %s31, 0
      %p141 = por %p139, %p140
      %p142 = scmp.ne.s32.totalorder %s131, %s134
      %p143 = scmp.eq.s32.totalorder %s36, 3
      %p144 = por %p142, %p143
      %p145 = scmp.ne.s32.totalorder %s134, %s135
      %p146 = scmp.eq.s32.totalorder %s36, 0
      %p147 = por %p145, %p146
      %p148 = scmp.ne.s32.totalorder %s134, %s135
      %p149 = scmp.eq.s32.totalorder %s37, 3
      %p150 = por %p148, %p149
      %p152 = scmp.ne.s32.totalorder %s135, %s151
      %p153 = scmp.eq.s32.totalorder %s37, 0
      %p154 = por %p152, %p153
      %s155 = ssub.s32 %s39, %s46
      %p156 = scmp.eq.s32.totalorder %s155, 0
      %s158 = sadd.s32 %s157, 1
      %s159 = scalar_select %p156, %s157, %s158
      %p162 = pneg %p156
      %p163 = scmp.eq.s32.totalorder %s31, 3
      %p164 = por %p162, %p163
      %p165 = scmp.ne.s32.totalorder %s157, %s160
      %p166 = scmp.eq.s32.totalorder %s31, 0
      %p167 = por %p165, %p166
      %p168 = scmp.ne.s32.totalorder %s157, %s160
      %p169 = scmp.eq.s32.totalorder %s36, 3
      %p170 = por %p168, %p169
      %p171 = scmp.ne.s32.totalorder %s160, %s161
      %p172 = scmp.eq.s32.totalorder %s36, 0
      %p173 = por %p171, %p172
      %p174 = scmp.ne.s32.totalorder %s160, %s161
      %p175 = scmp.eq.s32.totalorder %s37, 3
      %p176 = por %p174, %p175
      %p178 = scmp.ne.s32.totalorder %s161, %s177
      %p179 = scmp.eq.s32.totalorder %s37, 0
      %p180 = por %p178, %p179
      %s181 = ssub.s32 %s39, %s46
      %p182 = scmp.eq.s32.totalorder %s181, 0
      %s184 = sadd.s32 %s183, 1
      %s185 = scalar_select %p182, %s183, %s184
      %p188 = pneg %p182
      %p189 = scmp.eq.s32.totalorder %s31, 3
      %p190 = por %p188, %p189
      %p191 = scmp.ne.s32.totalorder %s183, %s186
      %p192 = scmp.eq.s32.totalorder %s31, 0
      %p193 = por %p191, %p192
      %p194 = scmp.ne.s32.totalorder %s183, %s186
      %p195 = scmp.eq.s32.totalorder %s36, 3
      %p196 = por %p194, %p195
      %p197 = scmp.ne.s32.totalorder %s186, %s187
      %p198 = scmp.eq.s32.totalorder %s36, 0
      %p199 = por %p197, %p198
      %p200 = scmp.ne.s32.totalorder %s186, %s187
      %p201 = scmp.eq.s32.totalorder %s37, 3
      %p202 = por %p200, %p201
      %p204 = scmp.ne.s32.totalorder %s187, %s203
      %p205 = scmp.eq.s32.totalorder %s37, 0
      %p206 = por %p204, %p205
      %s207 = ssub.s32 %s39, %s46
      %p208 = scmp.eq.s32.totalorder %s207, 0
      %s210 = sadd.s32 %s209, 1
      %s211 = scalar_select %p208, %s209, %s210
      %p214 = pneg %p208
      %p215 = scmp.eq.s32.totalorder %s31, 3
      %p216 = por %p214, %p215
      %p217 = scmp.ne.s32.totalorder %s209, %s212
      %p218 = scmp.eq.s32.totalorder %s31, 0
      %p219 = por %p217, %p218
      %p220 = scmp.ne.s32.totalorder %s209, %s212
      %p221 = scmp.eq.s32.totalorder %s36, 3
      %p222 = por %p220, %p221
      %p223 = scmp.ne.s32.totalorder %s212, %s213
      %p224 = scmp.eq.s32.totalorder %s36, 0
      %p225 = por %p223, %p224
      %p226 = scmp.ne.s32.totalorder %s212, %s213
      %p227 = scmp.eq.s32.totalorder %s37, 3
      %p228 = por %p226, %p227
      %p230 = scmp.ne.s32.totalorder %s213, %s229
      %p231 = scmp.eq.s32.totalorder %s37, 0
      %p232 = por %p230, %p231
      %s233 = ssub.s32 %s39, %s46
      %p234 = scmp.eq.s32.totalorder %s233, 0
      %s236 = sadd.s32 %s235, 1
      %s237 = scalar_select %p234, %s235, %s236
      %p240 = pneg %p234
      %p241 = scmp.eq.s32.totalorder %s31, 3
      %p242 = por %p240, %p241
      %p243 = scmp.ne.s32.totalorder %s235, %s238
      %p244 = scmp.eq.s32.totalorder %s31, 0
      %p245 = por %p243, %p244
      %p246 = scmp.ne.s32.totalorder %s235, %s238
      %p247 = scmp.eq.s32.totalorder %s36, 3
      %p248 = por %p246, %p247
      %p249 = scmp.ne.s32.totalorder %s238, %s239
      %p250 = scmp.eq.s32.totalorder %s36, 0
      %p251 = por %p249, %p250
      %p252 = scmp.ne.s32.totalorder %s238, %s239
      %p253 = scmp.eq.s32.totalorder %s37, 3
      %p254 = por %p252, %p253
      %p256 = scmp.ne.s32.totalorder %s239, %s255
      %p257 = scmp.eq.s32.totalorder %s37, 0
      %p258 = por %p256, %p257
      %s259 = ssub.s32 %s39, %s46
      %p260 = scmp.eq.s32.totalorder %s259, 0
      %s262 = sadd.s32 %s261, 1
      %s263 = scalar_select %p260, %s261, %s262
      %p266 = pneg %p260
      %p267 = scmp.eq.s32.totalorder %s31, 3
      %p268 = por %p266, %p267
      %p269 = scmp.ne.s32.totalorder %s261, %s264
      %p270 = scmp.eq.s32.totalorder %s31, 0
      %p271 = por %p269, %p270
      %p272 = scmp.ne.s32.totalorder %s261, %s264
      %p273 = scmp.eq.s32.totalorder %s36, 3
      %p274 = por %p272, %p273
      %p275 = scmp.ne.s32.totalorder %s264, %s265
      %p276 = scmp.eq.s32.totalorder %s36, 0
      %p277 = por %p275, %p276
      %p278 = scmp.ne.s32.totalorder %s264, %s265
      %p279 = scmp.eq.s32.totalorder %s37, 3
      %p280 = por %p278, %p279
      %p282 = scmp.ne.s32.totalorder %s265, %s281
      %p283 = scmp.eq.s32.totalorder %s37, 0
      %p284 = por %p282, %p283
      %s285 = ssub.s32 %s39, %s46
      %p286 = scmp.eq.s32.totalorder %s285, 0
      %s288 = sadd.s32 %s287, 1
      %s289 = scalar_select %p286, %s287, %s288
      %p292 = pneg %p286
      %p293 = scmp.eq.s32.totalorder %s31, 3
      %p294 = por %p292, %p293
      %p295 = scmp.ne.s32.totalorder %s287, %s290
      %p296 = scmp.eq.s32.totalorder %s31, 0
      %p297 = por %p295, %p296
      %p298 = scmp.ne.s32.totalorder %s287, %s290
      %p299 = scmp.eq.s32.totalorder %s36, 3
      %p300 = por %p298, %p299
      %p301 = scmp.ne.s32.totalorder %s290, %s291
      %p302 = scmp.eq.s32.totalorder %s36, 0
      %p303 = por %p301, %p302
      %p304 = scmp.ne.s32.totalorder %s290, %s291
      %p305 = scmp.eq.s32.totalorder %s37, 3
      %p306 = por %p304, %p305
      %p308 = scmp.ne.s32.totalorder %s291, %s307
      %p309 = scmp.eq.s32.totalorder %s37, 0
      %p310 = por %p308, %p309
      %s311 = ssub.s32 %s39, %s46
      %p312 = scmp.eq.s32.totalorder %s311, 0
      %s314 = sadd.s32 %s313, 1
      %s315 = scalar_select %p312, %s313, %s314
      %p318 = pneg %p312
      %p319 = scmp.eq.s32.totalorder %s31, 3
      %p320 = por %p318, %p319
      %p321 = scmp.ne.s32.totalorder %s313, %s316
      %p322 = scmp.eq.s32.totalorder %s31, 0
      %p323 = por %p321, %p322
      %p324 = scmp.ne.s32.totalorder %s313, %s316
      %p325 = scmp.eq.s32.totalorder %s36, 3
      %p326 = por %p324, %p325
      %p327 = scmp.ne.s32.totalorder %s316, %s317
      %p328 = scmp.eq.s32.totalorder %s36, 0
      %p329 = por %p327, %p328
      %p330 = scmp.ne.s32.totalorder %s316, %s317
      %p331 = scmp.eq.s32.totalorder %s37, 3
      %p332 = por %p330, %p331
      %p334 = scmp.ne.s32.totalorder %s317, %s333
      %p335 = scmp.eq.s32.totalorder %s37, 0
      %p336 = por %p334, %p335
      %s337 = ssub.s32 %s39, %s46
      %p338 = scmp.eq.s32.totalorder %s337, 0
      %s340 = sadd.s32 %s339, 1
      %s341 = scalar_select %p338, %s339, %s340
      %p344 = pneg %p338
      %p345 = scmp.eq.s32.totalorder %s31, 3
      %p346 = por %p344, %p345
      %p347 = scmp.ne.s32.totalorder %s339, %s342
      %p348 = scmp.eq.s32.totalorder %s31, 0
      %p349 = por %p347, %p348
      %p350 = scmp.ne.s32.totalorder %s339, %s342
      %p351 = scmp.eq.s32.totalorder %s36, 3
      %p352 = por %p350, %p351
      %p353 = scmp.ne.s32.totalorder %s342, %s343
      %p354 = scmp.eq.s32.totalorder %s36, 0
      %p355 = por %p353, %p354
      %p356 = scmp.ne.s32.totalorder %s342, %s343
      %p357 = scmp.eq.s32.totalorder %s37, 3
      %p358 = por %p356, %p357
      %p360 = scmp.ne.s32.totalorder %s343, %s359
      %p361 = scmp.eq.s32.totalorder %s37, 0
      %p362 = por %p360, %p361
      %s363 = ssub.s32 %s39, %s46
      %p364 = scmp.eq.s32.totalorder %s363, 0
      %s366 = sadd.s32 %s365, 1
      %s367 = scalar_select %p364, %s365, %s366
      %p370 = pneg %p364
      %p371 = scmp.eq.s32.totalorder %s31, 3
      %p372 = por %p370, %p371
      %p373 = scmp.ne.s32.totalorder %s365, %s368
      %p374 = scmp.eq.s32.totalorder %s31, 0
      %p375 = por %p373, %p374
      %p376 = scmp.ne.s32.totalorder %s365, %s368
      %p377 = scmp.eq.s32.totalorder %s36, 3
      %p378 = por %p376, %p377
      %p379 = scmp.ne.s32.totalorder %s368, %s369
      %p380 = scmp.eq.s32.totalorder %s36, 0
      %p381 = por %p379, %p380
      %p382 = scmp.ne.s32.totalorder %s368, %s369
      %p383 = scmp.eq.s32.totalorder %s37, 3
      %p384 = por %p382, %p383
      %p386 = scmp.ne.s32.totalorder %s369, %s385
      %p387 = scmp.eq.s32.totalorder %s37, 0
      %p388 = por %p386, %p387
      %s389 = ssub.s32 %s39, %s46
      %p390 = scmp.eq.s32.totalorder %s389, 0
      %s392 = sadd.s32 %s391, 1
      %s393 = scalar_select %p390, %s391, %s392
      %p396 = pneg %p390
      %p397 = scmp.eq.s32.totalorder %s31, 3
      %p398 = por %p396, %p397
      %p399 = scmp.ne.s32.totalorder %s391, %s394
      %p400 = scmp.eq.s32.totalorder %s31, 0
      %p401 = por %p399, %p400
      %p402 = scmp.ne.s32.totalorder %s391, %s394
      %p403 = scmp.eq.s32.totalorder %s36, 3
      %p404 = por %p402, %p403
      %p405 = scmp.ne.s32.totalorder %s394, %s395
      %p406 = scmp.eq.s32.totalorder %s36, 0
      %p407 = por %p405, %p406
      %p408 = scmp.ne.s32.totalorder %s394, %s395
      %p409 = scmp.eq.s32.totalorder %s37, 3
      %p410 = por %p408, %p409
      %p412 = scmp.ne.s32.totalorder %s395, %s411
      %p413 = scmp.eq.s32.totalorder %s37, 0
      %p414 = por %p412, %p413
      %s415 = ssub.s32 %s39, %s46
      %p416 = scmp.eq.s32.totalorder %s415, 0
      %s418 = sadd.s32 %s417, 1
      %s419 = scalar_select %p416, %s417, %s418
      %p422 = pneg %p416
      %p423 = scmp.eq.s32.totalorder %s31, 3
      %p424 = por %p422, %p423
      %p425 = scmp.ne.s32.totalorder %s417, %s420
      %p426 = scmp.eq.s32.totalorder %s31, 0
      %p427 = por %p425, %p426
      %p428 = scmp.ne.s32.totalorder %s417, %s420
      %p429 = scmp.eq.s32.totalorder %s36, 3
      %p430 = por %p428, %p429
      %p431 = scmp.ne.s32.totalorder %s420, %s421
      %p432 = scmp.eq.s32.totalorder %s36, 0
      %p433 = por %p431, %p432
      %p434 = scmp.ne.s32.totalorder %s420, %s421
      %p435 = scmp.eq.s32.totalorder %s37, 3
      %p436 = por %p434, %p435
      %p438 = scmp.ne.s32.totalorder %s421, %s437
      %p439 = scmp.eq.s32.totalorder %s37, 0
      %p440 = por %p438, %p439
      %s441 = ssub.s32 %s39, %s46
      %p442 = scmp.eq.s32.totalorder %s441, 0
      %s444 = sadd.s32 %s443, 1
      %s445 = scalar_select %p442, %s443, %s444
      %p448 = pneg %p442
      %p449 = scmp.eq.s32.totalorder %s31, 3
      %p450 = por %p448, %p449
      %p451 = scmp.ne.s32.totalorder %s443, %s446
      %p452 = scmp.eq.s32.totalorder %s31, 0
      %p453 = por %p451, %p452
      %p454 = scmp.ne.s32.totalorder %s443, %s446
      %p455 = scmp.eq.s32.totalorder %s36, 3
      %p456 = por %p454, %p455
      %p457 = scmp.ne.s32.totalorder %s446, %s447
      %p458 = scmp.eq.s32.totalorder %s36, 0
      %p459 = por %p457, %p458
      %p460 = scmp.ne.s32.totalorder %s446, %s447
      %p461 = scmp.eq.s32.totalorder %s37, 3
      %p462 = por %p460, %p461
      %p464 = scmp.ne.s32.totalorder %s447, %s463
      %p465 = scmp.eq.s32.totalorder %s37, 0
      %p466 = por %p464, %p465
      %s467 = ssub.s32 %s39, %s46
      %p468 = scmp.eq.s32.totalorder %s467, 0
      %s470 = sadd.s32 %s469, 1
      %s471 = scalar_select %p468, %s469, %s470
      %p474 = pneg %p468
      %p475 = scmp.eq.s32.totalorder %s31, 3
      %p476 = por %p474, %p475
      %p477 = scmp.ne.s32.totalorder %s469, %s472
      %p478 = scmp.eq.s32.totalorder %s31, 0
      %p479 = por %p477, %p478
      %p480 = scmp.ne.s32.totalorder %s469, %s472
      %p481 = scmp.eq.s32.totalorder %s36, 3
      %p482 = por %p480, %p481
      %p483 = scmp.ne.s32.totalorder %s472, %s473
      %p484 = scmp.eq.s32.totalorder %s36, 0
      %p485 = por %p483, %p484
      %p486 = scmp.ne.s32.totalorder %s472, %s473
      %p487 = scmp.eq.s32.totalorder %s37, 3
      %p488 = por %p486, %p487
      %p490 = scmp.ne.s32.totalorder %s473, %s489
      %p491 = scmp.eq.s32.totalorder %s37, 0
      %p492 = por %p490, %p491
      %s493 = ssub.s32 %s38, %s50
      %p494 = scmp.eq.s32.totalorder %s493, 0
      %s496 = sadd.s32 %s495, 1
      %s497 = scalar_select %p494, %s495, %s496
      %p500 = pneg %p494
      %p501 = scmp.eq.s32.totalorder %s31, 3
      %p502 = por %p500, %p501
      %p503 = scmp.ne.s32.totalorder %s495, %s498
      %p504 = scmp.eq.s32.totalorder %s31, 0
      %p505 = por %p503, %p504
      %p506 = scmp.ne.s32.totalorder %s495, %s498
      %p507 = scmp.eq.s32.totalorder %s36, 3
      %p508 = por %p506, %p507
      %p509 = scmp.ne.s32.totalorder %s498, %s499
      %p510 = scmp.eq.s32.totalorder %s36, 0
      %p511 = por %p509, %p510
      %p512 = scmp.ne.s32.totalorder %s498, %s499
      %p513 = scmp.eq.s32.totalorder %s37, 3
      %p514 = por %p512, %p513
      %p516 = scmp.ne.s32.totalorder %s499, %s515
      %p517 = scmp.eq.s32.totalorder %s37, 0
      %p518 = por %p516, %p517
      %s519 = ssub.s32 %s38, %s50
      %p520 = scmp.eq.s32.totalorder %s519, 0
      %s522 = sadd.s32 %s521, 1
      %s523 = scalar_select %p520, %s521, %s522
      %p526 = pneg %p520
      %p527 = scmp.eq.s32.totalorder %s31, 3
      %p528 = por %p526, %p527
      %p529 = scmp.ne.s32.totalorder %s521, %s524
      %p530 = scmp.eq.s32.totalorder %s31, 0
      %p531 = por %p529, %p530
      %p532 = scmp.ne.s32.totalorder %s521, %s524
      %p533 = scmp.eq.s32.totalorder %s36, 3
      %p534 = por %p532, %p533
      %p535 = scmp.ne.s32.totalorder %s524, %s525
      %p536 = scmp.eq.s32.totalorder %s36, 0
      %p537 = por %p535, %p536
      %p538 = scmp.ne.s32.totalorder %s524, %s525
      %p539 = scmp.eq.s32.totalorder %s37, 3
      %p540 = por %p538, %p539
      %p542 = scmp.ne.s32.totalorder %s525, %s541
      %p543 = scmp.eq.s32.totalorder %s37, 0
      %p544 = por %p542, %p543
      %p545 = scmp.le.s32.totalorder 1, %s31
      %p546 = scmp.lt.s32.totalorder %s31, 5
      %p547 = pnand %p545, %p546
      %p548 = pneg %p547
      // Predicated region
      $region9: #{tpu_custom_call.1} parent=5 // pred_check
        _
      $region10: #{tpu_custom_call.1} parent=5 // pred_check_branch
        %550 = sbr.rel (%p547) target = $region12
      $region11: #{tpu_custom_call.1} parent=5 // pred_region
        %s551 = ssub.s32 %s31, 1
      $region12: #{tpu_custom_call.1} parent=5 // pred_fallthru
        _
      %p552 = scmp.lt.s32.totalorder %s31, 4
      // Predicated region
      $region13: #{tpu_custom_call.1} parent=5 // pred_check
        %p553 = pneg %p552
      $region14: #{tpu_custom_call.1} parent=5 // pred_check_branch
        %555 = sbr.rel (%p553) target = $region16
      $region15: #{tpu_custom_call.1} parent=5 // pred_region
        // Predicated region
        $region17: #{tpu_custom_call.1} parent=15 // pred_check
          %p556 = pneg %p63
        $region18: #{tpu_custom_call.1} parent=15 // pred_check_branch
          %558 = sbr.rel (%p556) target = $region20
        $region19: #{tpu_custom_call.1} parent=15 // pred_region
          %p559 = scmp.lt.s32.totalorder %s38, 1
          %s560 = scalar_select %p559, %s38, 1
          %s561 = smul.addr %s560, 8
          %s562 = scalar_lea.vmem %s0, %s561
        $region20: #{tpu_custom_call.1} parent=15 // pred_fallthru
          _
        // Predicated region
        $region21: #{tpu_custom_call.1} parent=15 // pred_check
          %p563 = pneg %p89
        $region22: #{tpu_custom_call.1} parent=15 // pred_check_branch
          %565 = sbr.rel (%p563) target = $region24
        $region23: #{tpu_custom_call.1} parent=15 // pred_region
          %p566 = scmp.lt.s32.totalorder %s39, 1
          %s567 = scalar_select %p566, %s39, 1
          %s568 = scalar_lea.vmem %s1, %s567
        $region24: #{tpu_custom_call.1} parent=15 // pred_fallthru
          _
        // Predicated region
        $region25: #{tpu_custom_call.1} parent=15 // pred_check
          %p569 = pneg %p115
        $region26: #{tpu_custom_call.1} parent=15 // pred_check_branch
          %571 = sbr.rel (%p569) target = $region28
        $region27: #{tpu_custom_call.1} parent=15 // pred_region
          %p572 = scmp.lt.s32.totalorder %s39, 1
          %s573 = scalar_select %p572, %s39, 1
          %s574 = scalar_lea.vmem %s2, %s573
        $region28: #{tpu_custom_call.1} parent=15 // pred_fallthru
          _
        // Predicated region
        $region29: #{tpu_custom_call.1} parent=15 // pred_check
          %p575 = pneg %p141
        $region30: #{tpu_custom_call.1} parent=15 // pred_check_branch
          %577 = sbr.rel (%p575) target = $region32
        $region31: #{tpu_custom_call.1} parent=15 // pred_region
          %p578 = scmp.lt.s32.totalorder %s39, 1
          %s579 = scalar_select %p578, %s39, 1
          %s580 = smul.addr %s579, 16
          %s581 = smul.addr %s580, 4
          %s582 = scalar_lea.vmem %s3, %s581
        $region32: #{tpu_custom_call.1} parent=15 // pred_fallthru
          _
        // Predicated region
        $region33: #{tpu_custom_call.1} parent=15 // pred_check
          %p583 = pneg %p167
        $region34: #{tpu_custom_call.1} parent=15 // pred_check_branch
          %585 = sbr.rel (%p583) target = $region36
        $region35: #{tpu_custom_call.1} parent=15 // pred_region
          %p586 = scmp.lt.s32.totalorder %s39, 1
          %s587 = scalar_select %p586, %s39, 1
          %s588 = smul.addr %s587, 4
          %s589 = scalar_lea.vmem %s4, %s588
        $region36: #{tpu_custom_call.1} parent=15 // pred_fallthru
          _
        // Predicated region
        $region37: #{tpu_custom_call.1} parent=15 // pred_check
          %p590 = pneg %p193
        $region38: #{tpu_custom_call.1} parent=15 // pred_check_branch
          %592 = sbr.rel (%p590) target = $region40
        $region39: #{tpu_custom_call.1} parent=15 // pred_region
          %p593 = scmp.lt.s32.totalorder %s39, 1
          %s594 = scalar_select %p593, %s39, 1
          %s595 = smul.addr %s594, 16
          %s596 = smul.addr %s595, 4
          %s597 = scalar_lea.vmem %s5, %s596
        $region40: #{tpu_custom_call.1} parent=15 // pred_fallthru
          _
        // Predicated region
        $region41: #{tpu_custom_call.1} parent=15 // pred_check
          %p598 = pneg %p219
        $region42: #{tpu_custom_call.1} parent=15 // pred_check_branch
          %600 = sbr.rel (%p598) target = $region44
        $region43: #{tpu_custom_call.1} parent=15 // pred_region
          %p601 = scmp.lt.s32.totalorder %s39, 1
          %s602 = scalar_select %p601, %s39, 1
          %s603 = smul.addr %s602, 4
          %s604 = scalar_lea.vmem %s6, %s603
        $region44: #{tpu_custom_call.1} parent=15 // pred_fallthru
          _
        // Predicated region
        $region45: #{tpu_custom_call.1} parent=15 // pred_check
          %p605 = pneg %p245
        $region46: #{tpu_custom_call.1} parent=15 // pred_check_branch
          %607 = sbr.rel (%p605) target = $region48
        $region47: #{tpu_custom_call.1} parent=15 // pred_region
          %p608 = scmp.lt.s32.totalorder %s39, 1
          %s609 = scalar_select %p608, %s39, 1
          %s610 = smul.addr %s609, 16
          %s611 = smul.addr %s610, 4
          %s612 = scalar_lea.vmem %s7, %s611
        $region48: #{tpu_custom_call.1} parent=15 // pred_fallthru
          _
        // Predicated region
        $region49: #{tpu_custom_call.1} parent=15 // pred_check
          %p613 = pneg %p271
        $region50: #{tpu_custom_call.1} parent=15 // pred_check_branch
          %615 = sbr.rel (%p613) target = $region52
        $region51: #{tpu_custom_call.1} parent=15 // pred_region
          %p616 = scmp.lt.s32.totalorder %s39, 1
          %s617 = scalar_select %p616, %s39, 1
          %s618 = smul.addr %s617, 4
          %s619 = scalar_lea.vmem %s8, %s618
        $region52: #{tpu_custom_call.1} parent=15 // pred_fallthru
          _
        // Predicated region
        $region53: #{tpu_custom_call.1} parent=15 // pred_check
          %p620 = pneg %p297
        $region54: #{tpu_custom_call.1} parent=15 // pred_check_branch
          %622 = sbr.rel (%p620) target = $region56
        $region55: #{tpu_custom_call.1} parent=15 // pred_region
          %p623 = scmp.lt.s32.totalorder %s39, 1
          %s624 = scalar_select %p623, %s39, 1
          %s625 = smul.addr %s624, 4
          %s626 = smul.addr %s625, 4
          %s627 = scalar_lea.vmem %s9, %s626
        $region56: #{tpu_custom_call.1} parent=15 // pred_fallthru
          _
        // Predicated region
        $region57: #{tpu_custom_call.1} parent=15 // pred_check
          %p628 = pneg %p323
        $region58: #{tpu_custom_call.1} parent=15 // pred_check_branch
          %630 = sbr.rel (%p628) target = $region60
        $region59: #{tpu_custom_call.1} parent=15 // pred_region
          %p631 = scmp.lt.s32.totalorder %s39, 1
          %s632 = scalar_select %p631, %s39, 1
          %s633 = scalar_lea.vmem %s10, %s632
        $region60: #{tpu_custom_call.1} parent=15 // pred_fallthru
          _
        // Predicated region
        $region61: #{tpu_custom_call.1} parent=15 // pred_check
          %p634 = pneg %p349
        $region62: #{tpu_custom_call.1} parent=15 // pred_check_branch
          %636 = sbr.rel (%p634) target = $region64
        $region63: #{tpu_custom_call.1} parent=15 // pred_region
          %p637 = scmp.lt.s32.totalorder %s39, 1
          %s638 = scalar_select %p637, %s39, 1
          %s639 = scalar_lea.vmem %s11, %s638
        $region64: #{tpu_custom_call.1} parent=15 // pred_fallthru
          _
        // Predicated region
        $region65: #{tpu_custom_call.1} parent=15 // pred_check
          %p640 = pneg %p375
        $region66: #{tpu_custom_call.1} parent=15 // pred_check_branch
          %642 = sbr.rel (%p640) target = $region68
        $region67: #{tpu_custom_call.1} parent=15 // pred_region
          %p643 = scmp.lt.s32.totalorder %s39, 1
          %s644 = scalar_select %p643, %s39, 1
          %s645 = scalar_lea.vmem %s12, %s644
        $region68: #{tpu_custom_call.1} parent=15 // pred_fallthru
          _
        // Predicated region
        $region69: #{tpu_custom_call.1} parent=15 // pred_check
          %p646 = pneg %p401
        $region70: #{tpu_custom_call.1} parent=15 // pred_check_branch
          %648 = sbr.rel (%p646) target = $region72
        $region71: #{tpu_custom_call.1} parent=15 // pred_region
          %p649 = scmp.lt.s32.totalorder %s39, 1
          %s650 = scalar_select %p649, %s39, 1
          %s651 = smul.addr %s650, 4
          %s652 = smul.addr %s651, 4
          %s653 = scalar_lea.vmem %s13, %s652
        $region72: #{tpu_custom_call.1} parent=15 // pred_fallthru
          _
        // Predicated region
        $region73: #{tpu_custom_call.1} parent=15 // pred_check
          %p654 = pneg %p427
        $region74: #{tpu_custom_call.1} parent=15 // pred_check_branch
          %656 = sbr.rel (%p654) target = $region76
        $region75: #{tpu_custom_call.1} parent=15 // pred_region
          %p657 = scmp.lt.s32.totalorder %s39, 1
          %s658 = scalar_select %p657, %s39, 1
          %s659 = scalar_lea.vmem %s14, %s658
        $region76: #{tpu_custom_call.1} parent=15 // pred_fallthru
          _
        // Predicated region
        $region77: #{tpu_custom_call.1} parent=15 // pred_check
          %p660 = pneg %p453
        $region78: #{tpu_custom_call.1} parent=15 // pred_check_branch
          %662 = sbr.rel (%p660) target = $region80
        $region79: #{tpu_custom_call.1} parent=15 // pred_region
          %p663 = scmp.lt.s32.totalorder %s39, 1
          %s664 = scalar_select %p663, %s39, 1
          %s665 = smul.addr %s664, 2
          %s666 = smul.addr %s665, 4
          %s667 = scalar_lea.vmem %s15, %s666
        $region80: #{tpu_custom_call.1} parent=15 // pred_fallthru
          _
        // Predicated region
        $region81: #{tpu_custom_call.1} parent=15 // pred_check
          %p668 = pneg %p479
        $region82: #{tpu_custom_call.1} parent=15 // pred_check_branch
          %670 = sbr.rel (%p668) target = $region84
        $region83: #{tpu_custom_call.1} parent=15 // pred_region
          %p671 = scmp.lt.s32.totalorder %s39, 1
          %s672 = scalar_select %p671, %s39, 1
          %s673 = scalar_lea.vmem %s16, %s672
        $region84: #{tpu_custom_call.1} parent=15 // pred_fallthru
          _
      $region16: #{tpu_custom_call.1} parent=5 // pred_fallthru
        _
      %p674 = scmp.le.s32.totalorder 1, %s31
      %p675 = scmp.lt.s32.totalorder %s31, 5
      %p676 = pnand %p674, %p675
      %p677 = pneg %p676
      // Predicated region
      $region85: #{tpu_custom_call.1} parent=5 // pred_check
        _
      $region86: #{tpu_custom_call.1} parent=5 // pred_check_branch
        %679 = sbr.rel (%p676) target = $region88
      $region87: #{tpu_custom_call.1} parent=5 // pred_region
        %s680 = ssub.s32 %s31, 1
        %p681 = scmp.lt.s32.totalorder %s40, 1
        %s682 = scalar_select %p681, %s40, 1
        %s683 = smul.addr %s682, 8
        %s684 = scalar_lea.vmem %s0, %s683
        %p685 = pneg %p69
        %p686 = pneg %p66
        %p687 = scmp.lt.s32.totalorder %s41, 1
        %s688 = scalar_select %p687, %s41, 1
        %s689 = scalar_lea.vmem %s1, %s688
        %p690 = pneg %p95
        %p691 = pneg %p92
        %p692 = scmp.lt.s32.totalorder %s41, 1
        %s693 = scalar_select %p692, %s41, 1
        %s694 = scalar_lea.vmem %s2, %s693
        %p695 = pneg %p121
        %p696 = pneg %p118
        %p697 = scmp.lt.s32.totalorder %s41, 1
        %s698 = scalar_select %p697, %s41, 1
        %s699 = smul.addr %s698, 16
        %s700 = smul.addr %s699, 4
        %s701 = scalar_lea.vmem %s3, %s700
        %p702 = pneg %p147
        %p703 = pneg %p144
        %p704 = scmp.lt.s32.totalorder %s41, 1
        %s705 = scalar_select %p704, %s41, 1
        %s706 = smul.addr %s705, 4
        %s707 = scalar_lea.vmem %s4, %s706
        %p708 = pneg %p173
        %p709 = pneg %p170
        %p710 = scmp.lt.s32.totalorder %s41, 1
        %s711 = scalar_select %p710, %s41, 1
        %s712 = smul.addr %s711, 16
        %s713 = smul.addr %s712, 4
        %s714 = scalar_lea.vmem %s5, %s713
        %p715 = pneg %p199
        %p716 = pneg %p196
        %p717 = scmp.lt.s32.totalorder %s41, 1
        %s718 = scalar_select %p717, %s41, 1
        %s719 = smul.addr %s718, 4
        %s720 = scalar_lea.vmem %s6, %s719
        %p721 = pneg %p225
        %p722 = pneg %p222
        %p723 = scmp.lt.s32.totalorder %s41, 1
        %s724 = scalar_select %p723, %s41, 1
        %s725 = smul.addr %s724, 16
        %s726 = smul.addr %s725, 4
        %s727 = scalar_lea.vmem %s7, %s726
        %p728 = pneg %p251
        %p729 = pneg %p248
        %p730 = scmp.lt.s32.totalorder %s41, 1
        %s731 = scalar_select %p730, %s41, 1
        %s732 = smul.addr %s731, 4
        %s733 = scalar_lea.vmem %s8, %s732
        %p734 = pneg %p277
        %p735 = pneg %p274
        %p736 = scmp.lt.s32.totalorder %s41, 1
        %s737 = scalar_select %p736, %s41, 1
        %s738 = smul.addr %s737, 4
        %s739 = smul.addr %s738, 4
        %s740 = scalar_lea.vmem %s9, %s739
        %p741 = pneg %p303
        %p742 = pneg %p300
        %p743 = scmp.lt.s32.totalorder %s41, 1
        %s744 = scalar_select %p743, %s41, 1
        %s745 = scalar_lea.vmem %s10, %s744
        %p746 = pneg %p329
        %p747 = pneg %p326
        %p748 = scmp.lt.s32.totalorder %s41, 1
        %s749 = scalar_select %p748, %s41, 1
        %s750 = scalar_lea.vmem %s11, %s749
        %p751 = pneg %p355
        %p752 = pneg %p352
        %p753 = scmp.lt.s32.totalorder %s41, 1
        %s754 = scalar_select %p753, %s41, 1
        %s755 = scalar_lea.vmem %s12, %s754
        %p756 = pneg %p381
        %p757 = pneg %p378
        %p758 = scmp.lt.s32.totalorder %s41, 1
        %s759 = scalar_select %p758, %s41, 1
        %s760 = smul.addr %s759, 4
        %s761 = smul.addr %s760, 4
        %s762 = scalar_lea.vmem %s13, %s761
        %p763 = pneg %p407
        %p764 = pneg %p404
        %p765 = scmp.lt.s32.totalorder %s41, 1
        %s766 = scalar_select %p765, %s41, 1
        %s767 = scalar_lea.vmem %s14, %s766
        %p768 = pneg %p433
        %p769 = pneg %p430
        %p770 = scmp.lt.s32.totalorder %s41, 1
        %s771 = scalar_select %p770, %s41, 1
        %s772 = smul.addr %s771, 2
        %s773 = smul.addr %s772, 4
        %s774 = scalar_lea.vmem %s15, %s773
        %p775 = pneg %p459
        %p776 = pneg %p456
        %p777 = scmp.lt.s32.totalorder %s41, 1
        %s778 = scalar_select %p777, %s41, 1
        %s779 = scalar_lea.vmem %s16, %s778
        %p780 = pneg %p485
        %p781 = pneg %p482
        %p782 = pneg %p511
        %p783 = pneg %p508
        %s784 = sand.u32 %s498, 1
        %s785 = scalar_lea.sflag [#allocation4], %s784
        %s786 = sand.u32 %s498, 1
        %s787 = smul.addr %s786, 8
        %s788 = scalar_lea.vmem [#allocation3], %s787
        %p789 = pneg %p537
        %p790 = pneg %p534
        %s791 = sand.u32 %s524, 1
        %s792 = scalar_lea.sflag [#allocation6], %s791
        %s793 = sand.u32 %s524, 1
        %s794 = smul.addr %s793, 2
        %s795 = scalar_lea.vmem [#allocation5], %s794
        %p796 = scmp.lt.s32.totalorder %s40, 1
        %s797 = scalar_select %p796, %s40, 1
        %s798 = smul.addr %s797, 8
        %s799 = scalar_lea.vmem %s0, %s798
        %p800 = scmp.lt.s32.totalorder %s41, 1
        %s801 = scalar_select %p800, %s41, 1
        %s802 = scalar_lea.vmem %s1, %s801
        %p803 = scmp.lt.s32.totalorder %s41, 1
        %s804 = scalar_select %p803, %s41, 1
        %s805 = scalar_lea.vmem %s2, %s804
        %p806 = scmp.lt.s32.totalorder %s41, 1
        %s807 = scalar_select %p806, %s41, 1
        %s808 = smul.addr %s807, 16
        %s809 = smul.addr %s808, 4
        %s810 = scalar_lea.vmem %s3, %s809
        %p811 = scmp.lt.s32.totalorder %s41, 1
        %s812 = scalar_select %p811, %s41, 1
        %s813 = smul.addr %s812, 4
        %s814 = scalar_lea.vmem %s4, %s813
        %p815 = scmp.lt.s32.totalorder %s41, 1
        %s816 = scalar_select %p815, %s41, 1
        %s817 = smul.addr %s816, 16
        %s818 = smul.addr %s817, 4
        %s819 = scalar_lea.vmem %s5, %s818
        %p820 = scmp.lt.s32.totalorder %s41, 1
        %s821 = scalar_select %p820, %s41, 1
        %s822 = smul.addr %s821, 4
        %s823 = scalar_lea.vmem %s6, %s822
        %p824 = scmp.lt.s32.totalorder %s41, 1
        %s825 = scalar_select %p824, %s41, 1
        %s826 = smul.addr %s825, 16
        %s827 = smul.addr %s826, 4
        %s828 = scalar_lea.vmem %s7, %s827
        %p829 = scmp.lt.s32.totalorder %s41, 1
        %s830 = scalar_select %p829, %s41, 1
        %s831 = smul.addr %s830, 4
        %s832 = scalar_lea.vmem %s8, %s831
        %p833 = scmp.lt.s32.totalorder %s41, 1
        %s834 = scalar_select %p833, %s41, 1
        %s835 = smul.addr %s834, 4
        %s836 = smul.addr %s835, 4
        %s837 = scalar_lea.vmem %s9, %s836
        %p838 = scmp.lt.s32.totalorder %s41, 1
        %s839 = scalar_select %p838, %s41, 1
        %s840 = scalar_lea.vmem %s10, %s839
        %p841 = scmp.lt.s32.totalorder %s41, 1
        %s842 = scalar_select %p841, %s41, 1
        %s843 = scalar_lea.vmem %s11, %s842
        %p844 = scmp.lt.s32.totalorder %s41, 1
        %s845 = scalar_select %p844, %s41, 1
        %s846 = scalar_lea.vmem %s12, %s845
        %p847 = scmp.lt.s32.totalorder %s41, 1
        %s848 = scalar_select %p847, %s41, 1
        %s849 = smul.addr %s848, 4
        %s850 = smul.addr %s849, 4
        %s851 = scalar_lea.vmem %s13, %s850
        %p852 = scmp.lt.s32.totalorder %s41, 1
        %s853 = scalar_select %p852, %s41, 1
        %s854 = scalar_lea.vmem %s14, %s853
        %p855 = scmp.lt.s32.totalorder %s41, 1
        %s856 = scalar_select %p855, %s41, 1
        %s857 = smul.addr %s856, 2
        %s858 = smul.addr %s857, 4
        %s859 = scalar_lea.vmem %s15, %s858
        %p860 = scmp.lt.s32.totalorder %s41, 1
        %s861 = scalar_select %p860, %s41, 1
        %s862 = scalar_lea.vmem %s16, %s861
        %p864 = scmp.eq.s32.totalorder %s41, 0
        // Predicated region
        $region89: #{tpu_custom_call.1} parent=87 // pred_check
          %p865 = pneg %p864
        $region90: #{tpu_custom_call.1} parent=87 // pred_check_branch
          %867 = sbr.rel (%p865) target = $region92
        $region91: #{tpu_custom_call.1} parent=87 // pred_region
          %v868 = vld [vmem:[%s799] sm:$0xff]
          %vm869 = vcmask 261120
          %870 = vst.msk [vmem:[#allocation2] sm:$0xff] %vm869, %v868
        $region92: #{tpu_custom_call.1} parent=87 // pred_fallthru
          _
        %v871 = vld [vmem:[#allocation2] sm:$0xff]
        %v872 = vld [vmem:[%s802] sm:$0x1]
        %v873 = vld [vmem:[%s805] sm:$0x1]
        %vm874 = vcmask 261120
        %v875 = vsel %vm874, %v871, 0.0
        %876 = vadd.xlane.f32.xlu0 %v875
        %v877 = vpop.xlane.xlu0 %876
        %v878 = vrcp.pop 32.0
        %v879 = vmul.f32 %v877, %v878
        %v880 = vsub.f32 %v871, %v879
        %v881 = vmul.f32 %v880, %v880
        %v882 = vsel %vm874, %v881, 0.0
        %883 = vadd.xlane.f32.xlu0 %v882
        %v884 = vpop.xlane.xlu0 %883
        %v885 = vmul.f32 %v884, %v878
        %v886 = vadd.f32 %v885, 1e-05
        %v887 = vrsqrt.pop %v886
        %v888 = vmul.f32 %v880, %v887
        %v890 = vlaneseq
        %v891 = vshrl.u32 %v890, 7
        %v892 = vsub.s32 0, %v891
        %v893 = vrot.slane %v872, %v892
        %v895 = vmul.f32 %v888, %v893
        %v897 = vlaneseq
        %v898 = vshrl.u32 %v897, 7
        %v899 = vsub.s32 0, %v898
        %v900 = vrot.slane %v873, %v899
        %v902 = vadd.f32 %v895, %v900
        %v903 = vpack.c.bf16 %v902, %v902
        %v904 = vld [vmem:[%s810] sm:$0xf]
        %v905 = vld [vmem:[%s810 + $0x4] sm:$0xf]
        %v906 = vld [vmem:[%s810 + $0x8] sm:$0xf]
        %v907 = vld [vmem:[%s810 + $0xc] sm:$0xf]
        %v908 = vld [vmem:[%s814] sm:$0x1]
        %v910 = vlaneseq
        %v911 = vshrl.u32 %v910, 7
        %v912 = vsub.s32 0, %v911
        %v913 = vrot.slane %v908, %v912
        %v919 = vunpack.c.l.b16 %v904
        %v920 = vunpack.c.l.b16 %v905
        %v921 = vunpack.c.l.b16 %v906
        %v922 = vunpack.c.l.b16 %v907
        %v923 = vpack.c.b16 %v920, %v919
        %v924 = vpack.c.b16 %v922, %v921
        %v928 = vsel %vm874, %v903, 0
        %930 = vmatprep.subr.bf16.mxu0 0
        %931 = vmatpush1.bf16.msra.mxu0 0
        %932 = vmatprep.subr.bf16.mxu0 0
        %933 = vmatpush1.bf16.msra.mxu0 0
        %934 = vmatprep.subr.bf16.mxu0 0
        %935 = vmatpush1.bf16.msra.mxu0 0
        %936 = vmatprep.subr.bf16.mxu0 0
        %937 = vmatpush1.bf16.msra.mxu0 0
        %938 = vmatprep.subr.bf16.mxu0 0
        %939 = vmatpush1.bf16.msra.mxu0 0
        %940 = vmatprep.subr.bf16.mxu0 0
        %941 = vmatpush1.bf16.msra.mxu0 0
        %942 = vmatprep.subr.bf16.mxu0 0
        %943 = vmatpush1.bf16.msra.mxu0 %v924
        %944 = vmatprep.subr.bf16.mxu0 0
        %945 = vmatpush1.bf16.msra.mxu0 %v923
        %946 = vmatprep.subr.bf16.mxu0 0
        %947 = vmatpush2.bf16.msra.mxu0 0
        %948 = vmatprep.subr.bf16.mxu0 0
        %949 = vmatpush2.bf16.msra.mxu0 0
        %950 = vmatprep.subr.bf16.mxu0 0
        %951 = vmatpush2.bf16.msra.mxu0 0
        %952 = vmatprep.subr.bf16.mxu0 0
        %953 = vmatpush2.bf16.msra.mxu0 0
        %954 = vmatprep.subr.bf16.mxu0 0
        %955 = vmatpush2.bf16.msra.mxu0 0
        %956 = vmatprep.subr.bf16.mxu0 0
        %957 = vmatpush2.bf16.msra.mxu0 0
        %958 = vmatprep.subr.bf16.mxu0 0
        %959 = vmatpush2.bf16.msra.mxu0 0
        %960 = vmatprep.subr.bf16.mxu0 0
        %961 = vmatpush2.bf16.msra.mxu0 0
        %962 = vmatprep.mubr.bf16.mxu0 0
        %963 = vmatmul.mubr.bf16.gmra.mxu0 %v928
        %v964 = vpop.f32.mrf.mxu0
        %v965 = vadd.f32 %v913, %v964
        %v966 = vpop.f32.mrf.mxu0
        %v967 = vpop.f32.mrf.mxu0
        %v968 = vpop.f32.mrf.mxu0
        %969 = vdwg.mxu0
        %v970 = vld [vmem:[%s819] sm:$0xf]
        %v971 = vld [vmem:[%s819 + $0x4] sm:$0xf]
        %v972 = vld [vmem:[%s819 + $0x8] sm:$0xf]
        %v973 = vld [vmem:[%s819 + $0xc] sm:$0xf]
        %v974 = vld [vmem:[%s823] sm:$0x1]
        %v976 = vlaneseq
        %v977 = vshrl.u32 %v976, 7
        %v978 = vsub.s32 0, %v977
        %v979 = vrot.slane %v974, %v978
        %v985 = vunpack.c.l.b16 %v970
        %v986 = vunpack.c.l.b16 %v971
        %v987 = vunpack.c.l.b16 %v972
        %v988 = vunpack.c.l.b16 %v973
        %v989 = vpack.c.b16 %v986, %v985
        %v990 = vpack.c.b16 %v988, %v987
        %993 = vmatprep.subr.bf16.mxu0 0
        %994 = vmatpush1.bf16.msra.mxu0 0
        %995 = vmatprep.subr.bf16.mxu0 0
        %996 = vmatpush1.bf16.msra.mxu0 0
        %997 = vmatprep.subr.bf16.mxu0 0
        %998 = vmatpush1.bf16.msra.mxu0 0
        %999 = vmatprep.subr.bf16.mxu0 0
        %1000 = vmatpush1.bf16.msra.mxu0 0
        %1001 = vmatprep.subr.bf16.mxu0 0
        %1002 = vmatpush1.bf16.msra.mxu0 0
        %1003 = vmatprep.subr.bf16.mxu0 0
        %1004 = vmatpush1.bf16.msra.mxu0 0
        %1005 = vmatprep.subr.bf16.mxu0 0
        %1006 = vmatpush1.bf16.msra.mxu0 %v990
        %1007 = vmatprep.subr.bf16.mxu0 0
        %1008 = vmatpush1.bf16.msra.mxu0 %v989
        %1009 = vmatprep.subr.bf16.mxu0 0
        %1010 = vmatpush2.bf16.msra.mxu0 0
        %1011 = vmatprep.subr.bf16.mxu0 0
        %1012 = vmatpush2.bf16.msra.mxu0 0
        %1013 = vmatprep.subr.bf16.mxu0 0
        %1014 = vmatpush2.bf16.msra.mxu0 0
        %1015 = vmatprep.subr.bf16.mxu0 0
        %1016 = vmatpush2.bf16.msra.mxu0 0
        %1017 = vmatprep.subr.bf16.mxu0 0
        %1018 = vmatpush2.bf16.msra.mxu0 0
        %1019 = vmatprep.subr.bf16.mxu0 0
        %1020 = vmatpush2.bf16.msra.mxu0 0
        %1021 = vmatprep.subr.bf16.mxu0 0
        %1022 = vmatpush2.bf16.msra.mxu0 0
        %1023 = vmatprep.subr.bf16.mxu0 0
        %1024 = vmatpush2.bf16.msra.mxu0 0
        %1025 = vmatprep.mubr.bf16.mxu0 0
        %1026 = vmatmul.mubr.bf16.gmra.mxu0 %v928
        %v1027 = vpop.f32.mrf.mxu0
        %v1028 = vadd.f32 %v979, %v1027
        %v1029 = vpop.f32.mrf.mxu0
        %v1030 = vpop.f32.mrf.mxu0
        %v1031 = vpop.f32.mrf.mxu0
        %1032 = vdwg.mxu0
        %v1033 = vld [vmem:[%s828] sm:$0xf]
        %v1034 = vld [vmem:[%s828 + $0x4] sm:$0xf]
        %v1035 = vld [vmem:[%s828 + $0x8] sm:$0xf]
        %v1036 = vld [vmem:[%s828 + $0xc] sm:$0xf]
        %v1037 = vld [vmem:[%s832] sm:$0x1]
        %v1039 = vlaneseq
        %v1040 = vshrl.u32 %v1039, 7
        %v1041 = vsub.s32 0, %v1040
        %v1042 = vrot.slane %v1037, %v1041
        %v1048 = vunpack.c.l.b16 %v1033
        %v1049 = vunpack.c.l.b16 %v1034
        %v1050 = vunpack.c.l.b16 %v1035
        %v1051 = vunpack.c.l.b16 %v1036
        %v1052 = vpack.c.b16 %v1049, %v1048
        %v1053 = vpack.c.b16 %v1051, %v1050
        %1056 = vmatprep.subr.bf16.mxu0 0
        %1057 = vmatpush1.bf16.msra.mxu0 0
        %1058 = vmatprep.subr.bf16.mxu0 0
        %1059 = vmatpush1.bf16.msra.mxu0 0
        %1060 = vmatprep.subr.bf16.mxu0 0
        %1061 = vmatpush1.bf16.msra.mxu0 0
        %1062 = vmatprep.subr.bf16.mxu0 0
        %1063 = vmatpush1.bf16.msra.mxu0 0
        %1064 = vmatprep.subr.bf16.mxu0 0
        %1065 = vmatpush1.bf16.msra.mxu0 0
        %1066 = vmatprep.subr.bf16.mxu0 0
        %1067 = vmatpush1.bf16.msra.mxu0 0
        %1068 = vmatprep.subr.bf16.mxu0 0
        %1069 = vmatpush1.bf16.msra.mxu0 %v1053
        %1070 = vmatprep.subr.bf16.mxu0 0
        %1071 = vmatpush1.bf16.msra.mxu0 %v1052
        %1072 = vmatprep.subr.bf16.mxu0 0
        %1073 = vmatpush2.bf16.msra.mxu0 0
        %1074 = vmatprep.subr.bf16.mxu0 0
        %1075 = vmatpush2.bf16.msra.mxu0 0
        %1076 = vmatprep.subr.bf16.mxu0 0
        %1077 = vmatpush2.bf16.msra.mxu0 0
        %1078 = vmatprep.subr.bf16.mxu0 0
        %1079 = vmatpush2.bf16.msra.mxu0 0
        %1080 = vmatprep.subr.bf16.mxu0 0
        %1081 = vmatpush2.bf16.msra.mxu0 0
        %1082 = vmatprep.subr.bf16.mxu0 0
        %1083 = vmatpush2.bf16.msra.mxu0 0
        %1084 = vmatprep.subr.bf16.mxu0 0
        %1085 = vmatpush2.bf16.msra.mxu0 0
        %1086 = vmatprep.subr.bf16.mxu0 0
        %1087 = vmatpush2.bf16.msra.mxu0 0
        %1088 = vmatprep.mubr.bf16.mxu0 0
        %1089 = vmatmul.mubr.bf16.gmra.mxu0 %v928
        %v1090 = vpop.f32.mrf.mxu0
        %v1091 = vadd.f32 %v1042, %v1090
        %v1092 = vpop.f32.mrf.mxu0
        %v1093 = vpop.f32.mrf.mxu0
        %v1094 = vpop.f32.mrf.mxu0
        %1095 = vdwg.mxu0
        %v1096 = vpack.c.bf16 %v965, %v965
        %v1097 = vpack.c.bf16 %v1028, %v1028
        %vm1098 = vcmask 64512
        %v1100 = vsel %vm1098, %v1096, 0
        %v1103 = vsel %vm1098, %v1097, 0
        %1105 = vmatprep.subr.bf16.mxu0 0
        %1106 = vmatpush1.bf16.xpose.msra.mxu0 0
        %1107 = vmatprep.subr.bf16.mxu0 0
        %1108 = vmatpush1.bf16.xpose.msra.mxu0 0
        %1109 = vmatprep.subr.bf16.mxu0 0
        %1110 = vmatpush1.bf16.xpose.msra.mxu0 0
        %1111 = vmatprep.subr.bf16.mxu0 0
        %1112 = vmatpush1.bf16.xpose.msra.mxu0 0
        %1113 = vmatprep.subr.bf16.mxu0 0
        %1114 = vmatpush1.bf16.xpose.msra.mxu0 0
        %1115 = vmatprep.subr.bf16.mxu0 0
        %1116 = vmatpush1.bf16.xpose.msra.mxu0 0
        %1117 = vmatprep.subr.bf16.mxu0 0
        %1118 = vmatpush1.bf16.xpose.msra.mxu0 0
        %1119 = vmatprep.subr.bf16.mxu0 0
        %1120 = vmatpush1.bf16.xpose.msra.mxu0 %v1103
        %1121 = vmatprep.subr.bf16.mxu0 0
        %1122 = vmatpush2.bf16.xpose.msra.mxu0 0
        %1123 = vmatprep.subr.bf16.mxu0 0
        %1124 = vmatpush2.bf16.xpose.msra.mxu0 0
        %1125 = vmatprep.subr.bf16.mxu0 0
        %1126 = vmatpush2.bf16.xpose.msra.mxu0 0
        %1127 = vmatprep.subr.bf16.mxu0 0
        %1128 = vmatpush2.bf16.xpose.msra.mxu0 0
        %1129 = vmatprep.subr.bf16.mxu0 0
        %1130 = vmatpush2.bf16.xpose.msra.mxu0 0
        %1131 = vmatprep.subr.bf16.mxu0 0
        %1132 = vmatpush2.bf16.xpose.msra.mxu0 0
        %1133 = vmatprep.subr.bf16.mxu0 0
        %1134 = vmatpush2.bf16.xpose.msra.mxu0 0
        %1135 = vmatprep.subr.bf16.mxu0 0
        %1136 = vmatpush2.bf16.xpose.msra.mxu0 0
        %1137 = vmatprep.mubr.bf16.mxu0 0
        %1138 = vmatmul.mubr.bf16.gmra.mxu0 %v1100
        %v1139 = vpop.f32.mrf.mxu0
        %v1140 = vadd.f32 0.0, %v1139
        %v1141 = vpop.f32.mrf.mxu0
        %v1142 = vpop.f32.mrf.mxu0
        %v1143 = vpop.f32.mrf.mxu0
        %1144 = vdwg.mxu0
        %v1145 = vsel %vm1098, %v1140, -inf
        %1146 = vmax.xlane.f32.xlu0 %v1145
        %v1147 = vpop.xlane.xlu0 %1146
        %v1148 = vsub.f32 %v1140, %v1147
        %v1149 = vmul.f32 %v1148, 1.442695
        %v1150 = vpow.pop %v1149
        %v1151 = vsel %vm1098, %v1150, 0.0
        %1152 = vadd.xlane.f32.xlu0 %v1151
        %v1153 = vpop.xlane.xlu0 %1152
        %v1154 = vrcp.pop %v1153
        %v1155 = vmul.f32 %v1150, %v1154
        %v1156 = vpack.c.bf16 %v1155, %v1155
        %v1157 = vpack.c.bf16 %v1091, %v1091
        %v1159 = vsel %vm1098, %v1156, 0
        %vm1161 = vcmask 1043456
        %v1163 = vsel %vm1161, %v1157, 0
        %1165 = vmatprep.subr.bf16.mxu0 0
        %1166 = vmatpush1.bf16.msra.mxu0 0
        %1167 = vmatprep.subr.bf16.mxu0 0
        %1168 = vmatpush1.bf16.msra.mxu0 0
        %1169 = vmatprep.subr.bf16.mxu0 0
        %1170 = vmatpush1.bf16.msra.mxu0 0
        %1171 = vmatprep.subr.bf16.mxu0 0
        %1172 = vmatpush1.bf16.msra.mxu0 0
        %1173 = vmatprep.subr.bf16.mxu0 0
        %1174 = vmatpush1.bf16.msra.mxu0 0
        %1175 = vmatprep.subr.bf16.mxu0 0
        %1176 = vmatpush1.bf16.msra.mxu0 0
        %1177 = vmatprep.subr.bf16.mxu0 0
        %1178 = vmatpush1.bf16.msra.mxu0 0
        %1179 = vmatprep.subr.bf16.mxu0 0
        %1180 = vmatpush1.bf16.msra.mxu0 %v1163
        %1181 = vmatprep.subr.bf16.mxu0 0
        %1182 = vmatpush2.bf16.msra.mxu0 0
        %1183 = vmatprep.subr.bf16.mxu0 0
        %1184 = vmatpush2.bf16.msra.mxu0 0
        %1185 = vmatprep.subr.bf16.mxu0 0
        %1186 = vmatpush2.bf16.msra.mxu0 0
        %1187 = vmatprep.subr.bf16.mxu0 0
        %1188 = vmatpush2.bf16.msra.mxu0 0
        %1189 = vmatprep.subr.bf16.mxu0 0
        %1190 = vmatpush2.bf16.msra.mxu0 0
        %1191 = vmatprep.subr.bf16.mxu0 0
        %1192 = vmatpush2.bf16.msra.mxu0 0
        %1193 = vmatprep.subr.bf16.mxu0 0
        %1194 = vmatpush2.bf16.msra.mxu0 0
        %1195 = vmatprep.subr.bf16.mxu0 0
        %1196 = vmatpush2.bf16.msra.mxu0 0
        %1197 = vmatprep.mubr.bf16.mxu0 0
        %1198 = vmatmul.mubr.bf16.gmra.mxu0 %v1159
        %v1199 = vpop.f32.mrf.mxu0
        %v1200 = vadd.f32 0.0, %v1199
        %v1201 = vpop.f32.mrf.mxu0
        %v1202 = vpop.f32.mrf.mxu0
        %v1203 = vpop.f32.mrf.mxu0
        %1204 = vdwg.mxu0
        %s1205 = scalar_lea.vmem %s810, 16
        %v1206 = vld [vmem:[%s1205] sm:$0xf]
        %v1207 = vld [vmem:[%s1205 + $0x4] sm:$0xf]
        %v1208 = vld [vmem:[%s1205 + $0x8] sm:$0xf]
        %v1209 = vld [vmem:[%s1205 + $0xc] sm:$0xf]
        %s1210 = scalar_lea.vmem %s814, 1
        %v1211 = vld [vmem:[%s1210] sm:$0x1]
        %v1213 = vlaneseq
        %v1214 = vshrl.u32 %v1213, 7
        %v1215 = vsub.s32 0, %v1214
        %v1216 = vrot.slane %v1211, %v1215
        %v1222 = vunpack.c.l.b16 %v1206
        %v1223 = vunpack.c.l.b16 %v1207
        %v1224 = vunpack.c.l.b16 %v1208
        %v1225 = vunpack.c.l.b16 %v1209
        %v1226 = vpack.c.b16 %v1223, %v1222
        %v1227 = vpack.c.b16 %v1225, %v1224
        %1230 = vmatprep.subr.bf16.mxu0 0
        %1231 = vmatpush1.bf16.msra.mxu0 0
        %1232 = vmatprep.subr.bf16.mxu0 0
        %1233 = vmatpush1.bf16.msra.mxu0 0
        %1234 = vmatprep.subr.bf16.mxu0 0
        %1235 = vmatpush1.bf16.msra.mxu0 0
        %1236 = vmatprep.subr.bf16.mxu0 0
        %1237 = vmatpush1.bf16.msra.mxu0 0
        %1238 = vmatprep.subr.bf16.mxu0 0
        %1239 = vmatpush1.bf16.msra.mxu0 0
        %1240 = vmatprep.subr.bf16.mxu0 0
        %1241 = vmatpush1.bf16.msra.mxu0 0
        %1242 = vmatprep.subr.bf16.mxu0 0
        %1243 = vmatpush1.bf16.msra.mxu0 %v1227
        %1244 = vmatprep.subr.bf16.mxu0 0
        %1245 = vmatpush1.bf16.msra.mxu0 %v1226
        %1246 = vmatprep.subr.bf16.mxu0 0
        %1247 = vmatpush2.bf16.msra.mxu0 0
        %1248 = vmatprep.subr.bf16.mxu0 0
        %1249 = vmatpush2.bf16.msra.mxu0 0
        %1250 = vmatprep.subr.bf16.mxu0 0
        %1251 = vmatpush2.bf16.msra.mxu0 0
        %1252 = vmatprep.subr.bf16.mxu0 0
        %1253 = vmatpush2.bf16.msra.mxu0 0
        %1254 = vmatprep.subr.bf16.mxu0 0
        %1255 = vmatpush2.bf16.msra.mxu0 0
        %1256 = vmatprep.subr.bf16.mxu0 0
        %1257 = vmatpush2.bf16.msra.mxu0 0
        %1258 = vmatprep.subr.bf16.mxu0 0
        %1259 = vmatpush2.bf16.msra.mxu0 0
        %1260 = vmatprep.subr.bf16.mxu0 0
        %1261 = vmatpush2.bf16.msra.mxu0 0
        %1262 = vmatprep.mubr.bf16.mxu0 0
        %1263 = vmatmul.mubr.bf16.gmra.mxu0 %v928
        %v1264 = vpop.f32.mrf.mxu0
        %v1265 = vadd.f32 %v1216, %v1264
        %v1266 = vpop.f32.mrf.mxu0
        %v1267 = vpop.f32.mrf.mxu0
        %v1268 = vpop.f32.mrf.mxu0
        %1269 = vdwg.mxu0
        %s1270 = scalar_lea.vmem %s819, 16
        %v1271 = vld [vmem:[%s1270] sm:$0xf]
        %v1272 = vld [vmem:[%s1270 + $0x4] sm:$0xf]
        %v1273 = vld [vmem:[%s1270 + $0x8] sm:$0xf]
        %v1274 = vld [vmem:[%s1270 + $0xc] sm:$0xf]
        %s1275 = scalar_lea.vmem %s823, 1
        %v1276 = vld [vmem:[%s1275] sm:$0x1]
        %v1278 = vlaneseq
        %v1279 = vshrl.u32 %v1278, 7
        %v1280 = vsub.s32 0, %v1279
        %v1281 = vrot.slane %v1276, %v1280
        %v1287 = vunpack.c.l.b16 %v1271
        %v1288 = vunpack.c.l.b16 %v1272
        %v1289 = vunpack.c.l.b16 %v1273
        %v1290 = vunpack.c.l.b16 %v1274
        %v1291 = vpack.c.b16 %v1288, %v1287
        %v1292 = vpack.c.b16 %v1290, %v1289
        %1295 = vmatprep.subr.bf16.mxu0 0
        %1296 = vmatpush1.bf16.msra.mxu0 0
        %1297 = vmatprep.subr.bf16.mxu0 0
        %1298 = vmatpush1.bf16.msra.mxu0 0
        %1299 = vmatprep.subr.bf16.mxu0 0
        %1300 = vmatpush1.bf16.msra.mxu0 0
        %1301 = vmatprep.subr.bf16.mxu0 0
        %1302 = vmatpush1.bf16.msra.mxu0 0
        %1303 = vmatprep.subr.bf16.mxu0 0
        %1304 = vmatpush1.bf16.msra.mxu0 0
        %1305 = vmatprep.subr.bf16.mxu0 0
        %1306 = vmatpush1.bf16.msra.mxu0 0
        %1307 = vmatprep.subr.bf16.mxu0 0
        %1308 = vmatpush1.bf16.msra.mxu0 %v1292
        %1309 = vmatprep.subr.bf16.mxu0 0
        %1310 = vmatpush1.bf16.msra.mxu0 %v1291
        %1311 = vmatprep.subr.bf16.mxu0 0
        %1312 = vmatpush2.bf16.msra.mxu0 0
        %1313 = vmatprep.subr.bf16.mxu0 0
        %1314 = vmatpush2.bf16.msra.mxu0 0
        %1315 = vmatprep.subr.bf16.mxu0 0
        %1316 = vmatpush2.bf16.msra.mxu0 0
        %1317 = vmatprep.subr.bf16.mxu0 0
        %1318 = vmatpush2.bf16.msra.mxu0 0
        %1319 = vmatprep.subr.bf16.mxu0 0
        %1320 = vmatpush2.bf16.msra.mxu0 0
        %1321 = vmatprep.subr.bf16.mxu0 0
        %1322 = vmatpush2.bf16.msra.mxu0 0
        %1323 = vmatprep.subr.bf16.mxu0 0
        %1324 = vmatpush2.bf16.msra.mxu0 0
        %1325 = vmatprep.subr.bf16.mxu0 0
        %1326 = vmatpush2.bf16.msra.mxu0 0
        %1327 = vmatprep.mubr.bf16.mxu0 0
        %1328 = vmatmul.mubr.bf16.gmra.mxu0 %v928
        %v1329 = vpop.f32.mrf.mxu0
        %v1330 = vadd.f32 %v1281, %v1329
        %v1331 = vpop.f32.mrf.mxu0
        %v1332 = vpop.f32.mrf.mxu0
        %v1333 = vpop.f32.mrf.mxu0
        %1334 = vdwg.mxu0
        %s1335 = scalar_lea.vmem %s828, 16
        %v1336 = vld [vmem:[%s1335] sm:$0xf]
        %v1337 = vld [vmem:[%s1335 + $0x4] sm:$0xf]
        %v1338 = vld [vmem:[%s1335 + $0x8] sm:$0xf]
        %v1339 = vld [vmem:[%s1335 + $0xc] sm:$0xf]
        %s1340 = scalar_lea.vmem %s832, 1
        %v1341 = vld [vmem:[%s1340] sm:$0x1]
        %v1343 = vlaneseq
        %v1344 = vshrl.u32 %v1343, 7
        %v1345 = vsub.s32 0, %v1344
        %v1346 = vrot.slane %v1341, %v1345
        %v1352 = vunpack.c.l.b16 %v1336
        %v1353 = vunpack.c.l.b16 %v1337
        %v1354 = vunpack.c.l.b16 %v1338
        %v1355 = vunpack.c.l.b16 %v1339
        %v1356 = vpack.c.b16 %v1353, %v1352
        %v1357 = vpack.c.b16 %v1355, %v1354
        %1360 = vmatprep.subr.bf16.mxu0 0
        %1361 = vmatpush1.bf16.msra.mxu0 0
        %1362 = vmatprep.subr.bf16.mxu0 0
        %1363 = vmatpush1.bf16.msra.mxu0 0
        %1364 = vmatprep.subr.bf16.mxu0 0
        %1365 = vmatpush1.bf16.msra.mxu0 0
        %1366 = vmatprep.subr.bf16.mxu0 0
        %1367 = vmatpush1.bf16.msra.mxu0 0
        %1368 = vmatprep.subr.bf16.mxu0 0
        %1369 = vmatpush1.bf16.msra.mxu0 0
        %1370 = vmatprep.subr.bf16.mxu0 0
        %1371 = vmatpush1.bf16.msra.mxu0 0
        %1372 = vmatprep.subr.bf16.mxu0 0
        %1373 = vmatpush1.bf16.msra.mxu0 %v1357
        %1374 = vmatprep.subr.bf16.mxu0 0
        %1375 = vmatpush1.bf16.msra.mxu0 %v1356
        %1376 = vmatprep.subr.bf16.mxu0 0
        %1377 = vmatpush2.bf16.msra.mxu0 0
        %1378 = vmatprep.subr.bf16.mxu0 0
        %1379 = vmatpush2.bf16.msra.mxu0 0
        %1380 = vmatprep.subr.bf16.mxu0 0
        %1381 = vmatpush2.bf16.msra.mxu0 0
        %1382 = vmatprep.subr.bf16.mxu0 0
        %1383 = vmatpush2.bf16.msra.mxu0 0
        %1384 = vmatprep.subr.bf16.mxu0 0
        %1385 = vmatpush2.bf16.msra.mxu0 0
        %1386 = vmatprep.subr.bf16.mxu0 0
        %1387 = vmatpush2.bf16.msra.mxu0 0
        %1388 = vmatprep.subr.bf16.mxu0 0
        %1389 = vmatpush2.bf16.msra.mxu0 0
        %1390 = vmatprep.subr.bf16.mxu0 0
        %1391 = vmatpush2.bf16.msra.mxu0 0
        %1392 = vmatprep.mubr.bf16.mxu0 0
        %1393 = vmatmul.mubr.bf16.gmra.mxu0 %v928
        %v1394 = vpop.f32.mrf.mxu0
        %v1395 = vadd.f32 %v1346, %v1394
        %v1396 = vpop.f32.mrf.mxu0
        %v1397 = vpop.f32.mrf.mxu0
        %v1398 = vpop.f32.mrf.mxu0
        %1399 = vdwg.mxu0
        %v1400 = vpack.c.bf16 %v1265, %v1265
        %v1401 = vpack.c.bf16 %v1330, %v1330
        %v1403 = vsel %vm1098, %v1400, 0
        %v1406 = vsel %vm1098, %v1401, 0
        %1408 = vmatprep.subr.bf16.mxu0 0
        %1409 = vmatpush1.bf16.xpose.msra.mxu0 0
        %1410 = vmatprep.subr.bf16.mxu0 0
        %1411 = vmatpush1.bf16.xpose.msra.mxu0 0
        %1412 = vmatprep.subr.bf16.mxu0 0
        %1413 = vmatpush1.bf16.xpose.msra.mxu0 0
        %1414 = vmatprep.subr.bf16.mxu0 0
        %1415 = vmatpush1.bf16.xpose.msra.mxu0 0
        %1416 = vmatprep.subr.bf16.mxu0 0
        %1417 = vmatpush1.bf16.xpose.msra.mxu0 0
        %1418 = vmatprep.subr.bf16.mxu0 0
        %1419 = vmatpush1.bf16.xpose.msra.mxu0 0
        %1420 = vmatprep.subr.bf16.mxu0 0
        %1421 = vmatpush1.bf16.xpose.msra.mxu0 0
        %1422 = vmatprep.subr.bf16.mxu0 0
        %1423 = vmatpush1.bf16.xpose.msra.mxu0 %v1406
        %1424 = vmatprep.subr.bf16.mxu0 0
        %1425 = vmatpush2.bf16.xpose.msra.mxu0 0
        %1426 = vmatprep.subr.bf16.mxu0 0
        %1427 = vmatpush2.bf16.xpose.msra.mxu0 0
        %1428 = vmatprep.subr.bf16.mxu0 0
        %1429 = vmatpush2.bf16.xpose.msra.mxu0 0
        %1430 = vmatprep.subr.bf16.mxu0 0
        %1431 = vmatpush2.bf16.xpose.msra.mxu0 0
        %1432 = vmatprep.subr.bf16.mxu0 0
        %1433 = vmatpush2.bf16.xpose.msra.mxu0 0
        %1434 = vmatprep.subr.bf16.mxu0 0
        %1435 = vmatpush2.bf16.xpose.msra.mxu0 0
        %1436 = vmatprep.subr.bf16.mxu0 0
        %1437 = vmatpush2.bf16.xpose.msra.mxu0 0
        %1438 = vmatprep.subr.bf16.mxu0 0
        %1439 = vmatpush2.bf16.xpose.msra.mxu0 0
        %1440 = vmatprep.mubr.bf16.mxu0 0
        %1441 = vmatmul.mubr.bf16.gmra.mxu0 %v1403
        %v1442 = vpop.f32.mrf.mxu0
        %v1443 = vadd.f32 0.0, %v1442
        %v1444 = vpop.f32.mrf.mxu0
        %v1445 = vpop.f32.mrf.mxu0
        %v1446 = vpop.f32.mrf.mxu0
        %1447 = vdwg.mxu0
        %v1448 = vsel %vm1098, %v1443, -inf
        %1449 = vmax.xlane.f32.xlu0 %v1448
        %v1450 = vpop.xlane.xlu0 %1449
        %v1451 = vsub.f32 %v1443, %v1450
        %v1452 = vmul.f32 %v1451, 1.442695
        %v1453 = vpow.pop %v1452
        %v1454 = vsel %vm1098, %v1453, 0.0
        %1455 = vadd.xlane.f32.xlu0 %v1454
        %v1456 = vpop.xlane.xlu0 %1455
        %v1457 = vrcp.pop %v1456
        %v1458 = vmul.f32 %v1453, %v1457
        %v1459 = vpack.c.bf16 %v1458, %v1458
        %v1460 = vpack.c.bf16 %v1395, %v1395
        %v1462 = vsel %vm1098, %v1459, 0
        %v1465 = vsel %vm1161, %v1460, 0
        %1467 = vmatprep.subr.bf16.mxu0 0
        %1468 = vmatpush1.bf16.msra.mxu0 0
        %1469 = vmatprep.subr.bf16.mxu0 0
        %1470 = vmatpush1.bf16.msra.mxu0 0
        %1471 = vmatprep.subr.bf16.mxu0 0
        %1472 = vmatpush1.bf16.msra.mxu0 0
        %1473 = vmatprep.subr.bf16.mxu0 0
        %1474 = vmatpush1.bf16.msra.mxu0 0
        %1475 = vmatprep.subr.bf16.mxu0 0
        %1476 = vmatpush1.bf16.msra.mxu0 0
        %1477 = vmatprep.subr.bf16.mxu0 0
        %1478 = vmatpush1.bf16.msra.mxu0 0
        %1479 = vmatprep.subr.bf16.mxu0 0
        %1480 = vmatpush1.bf16.msra.mxu0 0
        %1481 = vmatprep.subr.bf16.mxu0 0
        %1482 = vmatpush1.bf16.msra.mxu0 %v1465
        %1483 = vmatprep.subr.bf16.mxu0 0
        %1484 = vmatpush2.bf16.msra.mxu0 0
        %1485 = vmatprep.subr.bf16.mxu0 0
        %1486 = vmatpush2.bf16.msra.mxu0 0
        %1487 = vmatprep.subr.bf16.mxu0 0
        %1488 = vmatpush2.bf16.msra.mxu0 0
        %1489 = vmatprep.subr.bf16.mxu0 0
        %1490 = vmatpush2.bf16.msra.mxu0 0
        %1491 = vmatprep.subr.bf16.mxu0 0
        %1492 = vmatpush2.bf16.msra.mxu0 0
        %1493 = vmatprep.subr.bf16.mxu0 0
        %1494 = vmatpush2.bf16.msra.mxu0 0
        %1495 = vmatprep.subr.bf16.mxu0 0
        %1496 = vmatpush2.bf16.msra.mxu0 0
        %1497 = vmatprep.subr.bf16.mxu0 0
        %1498 = vmatpush2.bf16.msra.mxu0 0
        %1499 = vmatprep.mubr.bf16.mxu0 0
        %1500 = vmatmul.mubr.bf16.gmra.mxu0 %v1462
        %v1501 = vpop.f32.mrf.mxu0
        %v1502 = vadd.f32 0.0, %v1501
        %v1503 = vpop.f32.mrf.mxu0
        %v1504 = vpop.f32.mrf.mxu0
        %v1505 = vpop.f32.mrf.mxu0
        %1506 = vdwg.mxu0
        %s1507 = scalar_lea.vmem %s810, 32
        %v1508 = vld [vmem:[%s1507] sm:$0xf]
        %v1509 = vld [vmem:[%s1507 + $0x4] sm:$0xf]
        %v1510 = vld [vmem:[%s1507 + $0x8] sm:$0xf]
        %v1511 = vld [vmem:[%s1507 + $0xc] sm:$0xf]
        %s1512 = scalar_lea.vmem %s814, 2
        %v1513 = vld [vmem:[%s1512] sm:$0x1]
        %v1515 = vlaneseq
        %v1516 = vshrl.u32 %v1515, 7
        %v1517 = vsub.s32 0, %v1516
        %v1518 = vrot.slane %v1513, %v1517
        %v1524 = vunpack.c.l.b16 %v1508
        %v1525 = vunpack.c.l.b16 %v1509
        %v1526 = vunpack.c.l.b16 %v1510
        %v1527 = vunpack.c.l.b16 %v1511
        %v1528 = vpack.c.b16 %v1525, %v1524
        %v1529 = vpack.c.b16 %v1527, %v1526
        %1532 = vmatprep.subr.bf16.mxu0 0
        %1533 = vmatpush1.bf16.msra.mxu0 0
        %1534 = vmatprep.subr.bf16.mxu0 0
        %1535 = vmatpush1.bf16.msra.mxu0 0
        %1536 = vmatprep.subr.bf16.mxu0 0
        %1537 = vmatpush1.bf16.msra.mxu0 0
        %1538 = vmatprep.subr.bf16.mxu0 0
        %1539 = vmatpush1.bf16.msra.mxu0 0
        %1540 = vmatprep.subr.bf16.mxu0 0
        %1541 = vmatpush1.bf16.msra.mxu0 0
        %1542 = vmatprep.subr.bf16.mxu0 0
        %1543 = vmatpush1.bf16.msra.mxu0 0
        %1544 = vmatprep.subr.bf16.mxu0 0
        %1545 = vmatpush1.bf16.msra.mxu0 %v1529
        %1546 = vmatprep.subr.bf16.mxu0 0
        %1547 = vmatpush1.bf16.msra.mxu0 %v1528
        %1548 = vmatprep.subr.bf16.mxu0 0
        %1549 = vmatpush2.bf16.msra.mxu0 0
        %1550 = vmatprep.subr.bf16.mxu0 0
        %1551 = vmatpush2.bf16.msra.mxu0 0
        %1552 = vmatprep.subr.bf16.mxu0 0
        %1553 = vmatpush2.bf16.msra.mxu0 0
        %1554 = vmatprep.subr.bf16.mxu0 0
        %1555 = vmatpush2.bf16.msra.mxu0 0
        %1556 = vmatprep.subr.bf16.mxu0 0
        %1557 = vmatpush2.bf16.msra.mxu0 0
        %1558 = vmatprep.subr.bf16.mxu0 0
        %1559 = vmatpush2.bf16.msra.mxu0 0
        %1560 = vmatprep.subr.bf16.mxu0 0
        %1561 = vmatpush2.bf16.msra.mxu0 0
        %1562 = vmatprep.subr.bf16.mxu0 0
        %1563 = vmatpush2.bf16.msra.mxu0 0
        %1564 = vmatprep.mubr.bf16.mxu0 0
        %1565 = vmatmul.mubr.bf16.gmra.mxu0 %v928
        %v1566 = vpop.f32.mrf.mxu0
        %v1567 = vadd.f32 %v1518, %v1566
        %v1568 = vpop.f32.mrf.mxu0
        %v1569 = vpop.f32.mrf.mxu0
        %v1570 = vpop.f32.mrf.mxu0
        %1571 = vdwg.mxu0
        %s1572 = scalar_lea.vmem %s819, 32
        %v1573 = vld [vmem:[%s1572] sm:$0xf]
        %v1574 = vld [vmem:[%s1572 + $0x4] sm:$0xf]
        %v1575 = vld [vmem:[%s1572 + $0x8] sm:$0xf]
        %v1576 = vld [vmem:[%s1572 + $0xc] sm:$0xf]
        %s1577 = scalar_lea.vmem %s823, 2
        %v1578 = vld [vmem:[%s1577] sm:$0x1]
        %v1580 = vlaneseq
        %v1581 = vshrl.u32 %v1580, 7
        %v1582 = vsub.s32 0, %v1581
        %v1583 = vrot.slane %v1578, %v1582
        %v1589 = vunpack.c.l.b16 %v1573
        %v1590 = vunpack.c.l.b16 %v1574
        %v1591 = vunpack.c.l.b16 %v1575
        %v1592 = vunpack.c.l.b16 %v1576
        %v1593 = vpack.c.b16 %v1590, %v1589
        %v1594 = vpack.c.b16 %v1592, %v1591
        %1597 = vmatprep.subr.bf16.mxu0 0
        %1598 = vmatpush1.bf16.msra.mxu0 0
        %1599 = vmatprep.subr.bf16.mxu0 0
        %1600 = vmatpush1.bf16.msra.mxu0 0
        %1601 = vmatprep.subr.bf16.mxu0 0
        %1602 = vmatpush1.bf16.msra.mxu0 0
        %1603 = vmatprep.subr.bf16.mxu0 0
        %1604 = vmatpush1.bf16.msra.mxu0 0
        %1605 = vmatprep.subr.bf16.mxu0 0
        %1606 = vmatpush1.bf16.msra.mxu0 0
        %1607 = vmatprep.subr.bf16.mxu0 0
        %1608 = vmatpush1.bf16.msra.mxu0 0
        %1609 = vmatprep.subr.bf16.mxu0 0
        %1610 = vmatpush1.bf16.msra.mxu0 %v1594
        %1611 = vmatprep.subr.bf16.mxu0 0
        %1612 = vmatpush1.bf16.msra.mxu0 %v1593
        %1613 = vmatprep.subr.bf16.mxu0 0
        %1614 = vmatpush2.bf16.msra.mxu0 0
        %1615 = vmatprep.subr.bf16.mxu0 0
        %1616 = vmatpush2.bf16.msra.mxu0 0
        %1617 = vmatprep.subr.bf16.mxu0 0
        %1618 = vmatpush2.bf16.msra.mxu0 0
        %1619 = vmatprep.subr.bf16.mxu0 0
        %1620 = vmatpush2.bf16.msra.mxu0 0
        %1621 = vmatprep.subr.bf16.mxu0 0
        %1622 = vmatpush2.bf16.msra.mxu0 0
        %1623 = vmatprep.subr.bf16.mxu0 0
        %1624 = vmatpush2.bf16.msra.mxu0 0
        %1625 = vmatprep.subr.bf16.mxu0 0
        %1626 = vmatpush2.bf16.msra.mxu0 0
        %1627 = vmatprep.subr.bf16.mxu0 0
        %1628 = vmatpush2.bf16.msra.mxu0 0
        %1629 = vmatprep.mubr.bf16.mxu0 0
        %1630 = vmatmul.mubr.bf16.gmra.mxu0 %v928
        %v1631 = vpop.f32.mrf.mxu0
        %v1632 = vadd.f32 %v1583, %v1631
        %v1633 = vpop.f32.mrf.mxu0
        %v1634 = vpop.f32.mrf.mxu0
        %v1635 = vpop.f32.mrf.mxu0
        %1636 = vdwg.mxu0
        %s1637 = scalar_lea.vmem %s828, 32
        %v1638 = vld [vmem:[%s1637] sm:$0xf]
        %v1639 = vld [vmem:[%s1637 + $0x4] sm:$0xf]
        %v1640 = vld [vmem:[%s1637 + $0x8] sm:$0xf]
        %v1641 = vld [vmem:[%s1637 + $0xc] sm:$0xf]
        %s1642 = scalar_lea.vmem %s832, 2
        %v1643 = vld [vmem:[%s1642] sm:$0x1]
        %v1645 = vlaneseq
        %v1646 = vshrl.u32 %v1645, 7
        %v1647 = vsub.s32 0, %v1646
        %v1648 = vrot.slane %v1643, %v1647
        %v1654 = vunpack.c.l.b16 %v1638
        %v1655 = vunpack.c.l.b16 %v1639
        %v1656 = vunpack.c.l.b16 %v1640
        %v1657 = vunpack.c.l.b16 %v1641
        %v1658 = vpack.c.b16 %v1655, %v1654
        %v1659 = vpack.c.b16 %v1657, %v1656
        %1662 = vmatprep.subr.bf16.mxu0 0
        %1663 = vmatpush1.bf16.msra.mxu0 0
        %1664 = vmatprep.subr.bf16.mxu0 0
        %1665 = vmatpush1.bf16.msra.mxu0 0
        %1666 = vmatprep.subr.bf16.mxu0 0
        %1667 = vmatpush1.bf16.msra.mxu0 0
        %1668 = vmatprep.subr.bf16.mxu0 0
        %1669 = vmatpush1.bf16.msra.mxu0 0
        %1670 = vmatprep.subr.bf16.mxu0 0
        %1671 = vmatpush1.bf16.msra.mxu0 0
        %1672 = vmatprep.subr.bf16.mxu0 0
        %1673 = vmatpush1.bf16.msra.mxu0 0
        %1674 = vmatprep.subr.bf16.mxu0 0
        %1675 = vmatpush1.bf16.msra.mxu0 %v1659
        %1676 = vmatprep.subr.bf16.mxu0 0
        %1677 = vmatpush1.bf16.msra.mxu0 %v1658
        %1678 = vmatprep.subr.bf16.mxu0 0
        %1679 = vmatpush2.bf16.msra.mxu0 0
        %1680 = vmatprep.subr.bf16.mxu0 0
        %1681 = vmatpush2.bf16.msra.mxu0 0
        %1682 = vmatprep.subr.bf16.mxu0 0
        %1683 = vmatpush2.bf16.msra.mxu0 0
        %1684 = vmatprep.subr.bf16.mxu0 0
        %1685 = vmatpush2.bf16.msra.mxu0 0
        %1686 = vmatprep.subr.bf16.mxu0 0
        %1687 = vmatpush2.bf16.msra.mxu0 0
        %1688 = vmatprep.subr.bf16.mxu0 0
        %1689 = vmatpush2.bf16.msra.mxu0 0
        %1690 = vmatprep.subr.bf16.mxu0 0
        %1691 = vmatpush2.bf16.msra.mxu0 0
        %1692 = vmatprep.subr.bf16.mxu0 0
        %1693 = vmatpush2.bf16.msra.mxu0 0
        %1694 = vmatprep.mubr.bf16.mxu0 0
        %1695 = vmatmul.mubr.bf16.gmra.mxu0 %v928
        %v1696 = vpop.f32.mrf.mxu0
        %v1697 = vadd.f32 %v1648, %v1696
        %v1698 = vpop.f32.mrf.mxu0
        %v1699 = vpop.f32.mrf.mxu0
        %v1700 = vpop.f32.mrf.mxu0
        %1701 = vdwg.mxu0
        %v1702 = vpack.c.bf16 %v1567, %v1567
        %v1703 = vpack.c.bf16 %v1632, %v1632
        %v1705 = vsel %vm1098, %v1702, 0
        %v1708 = vsel %vm1098, %v1703, 0
        %1710 = vmatprep.subr.bf16.mxu0 0
        %1711 = vmatpush1.bf16.xpose.msra.mxu0 0
        %1712 = vmatprep.subr.bf16.mxu0 0
        %1713 = vmatpush1.bf16.xpose.msra.mxu0 0
        %1714 = vmatprep.subr.bf16.mxu0 0
        %1715 = vmatpush1.bf16.xpose.msra.mxu0 0
        %1716 = vmatprep.subr.bf16.mxu0 0
        %1717 = vmatpush1.bf16.xpose.msra.mxu0 0
        %1718 = vmatprep.subr.bf16.mxu0 0
        %1719 = vmatpush1.bf16.xpose.msra.mxu0 0
        %1720 = vmatprep.subr.bf16.mxu0 0
        %1721 = vmatpush1.bf16.xpose.msra.mxu0 0
        %1722 = vmatprep.subr.bf16.mxu0 0
        %1723 = vmatpush1.bf16.xpose.msra.mxu0 0
        %1724 = vmatprep.subr.bf16.mxu0 0
        %1725 = vmatpush1.bf16.xpose.msra.mxu0 %v1708
        %1726 = vmatprep.subr.bf16.mxu0 0
        %1727 = vmatpush2.bf16.xpose.msra.mxu0 0
        %1728 = vmatprep.subr.bf16.mxu0 0
        %1729 = vmatpush2.bf16.xpose.msra.mxu0 0
        %1730 = vmatprep.subr.bf16.mxu0 0
        %1731 = vmatpush2.bf16.xpose.msra.mxu0 0
        %1732 = vmatprep.subr.bf16.mxu0 0
        %1733 = vmatpush2.bf16.xpose.msra.mxu0 0
        %1734 = vmatprep.subr.bf16.mxu0 0
        %1735 = vmatpush2.bf16.xpose.msra.mxu0 0
        %1736 = vmatprep.subr.bf16.mxu0 0
        %1737 = vmatpush2.bf16.xpose.msra.mxu0 0
        %1738 = vmatprep.subr.bf16.mxu0 0
        %1739 = vmatpush2.bf16.xpose.msra.mxu0 0
        %1740 = vmatprep.subr.bf16.mxu0 0
        %1741 = vmatpush2.bf16.xpose.msra.mxu0 0
        %1742 = vmatprep.mubr.bf16.mxu0 0
        %1743 = vmatmul.mubr.bf16.gmra.mxu0 %v1705
        %v1744 = vpop.f32.mrf.mxu0
        %v1745 = vadd.f32 0.0, %v1744
        %v1746 = vpop.f32.mrf.mxu0
        %v1747 = vpop.f32.mrf.mxu0
        %v1748 = vpop.f32.mrf.mxu0
        %1749 = vdwg.mxu0
        %v1750 = vsel %vm1098, %v1745, -inf
        %1751 = vmax.xlane.f32.xlu0 %v1750
        %v1752 = vpop.xlane.xlu0 %1751
        %v1753 = vsub.f32 %v1745, %v1752
        %v1754 = vmul.f32 %v1753, 1.442695
        %v1755 = vpow.pop %v1754
        %v1756 = vsel %vm1098, %v1755, 0.0
        %1757 = vadd.xlane.f32.xlu0 %v1756
        %v1758 = vpop.xlane.xlu0 %1757
        %v1759 = vrcp.pop %v1758
        %v1760 = vmul.f32 %v1755, %v1759
        %v1761 = vpack.c.bf16 %v1760, %v1760
        %v1762 = vpack.c.bf16 %v1697, %v1697
        %v1764 = vsel %vm1098, %v1761, 0
        %v1767 = vsel %vm1161, %v1762, 0
        %1769 = vmatprep.subr.bf16.mxu0 0
        %1770 = vmatpush1.bf16.msra.mxu0 0
        %1771 = vmatprep.subr.bf16.mxu0 0
        %1772 = vmatpush1.bf16.msra.mxu0 0
        %1773 = vmatprep.subr.bf16.mxu0 0
        %1774 = vmatpush1.bf16.msra.mxu0 0
        %1775 = vmatprep.subr.bf16.mxu0 0
        %1776 = vmatpush1.bf16.msra.mxu0 0
        %1777 = vmatprep.subr.bf16.mxu0 0
        %1778 = vmatpush1.bf16.msra.mxu0 0
        %1779 = vmatprep.subr.bf16.mxu0 0
        %1780 = vmatpush1.bf16.msra.mxu0 0
        %1781 = vmatprep.subr.bf16.mxu0 0
        %1782 = vmatpush1.bf16.msra.mxu0 0
        %1783 = vmatprep.subr.bf16.mxu0 0
        %1784 = vmatpush1.bf16.msra.mxu0 %v1767
        %1785 = vmatprep.subr.bf16.mxu0 0
        %1786 = vmatpush2.bf16.msra.mxu0 0
        %1787 = vmatprep.subr.bf16.mxu0 0
        %1788 = vmatpush2.bf16.msra.mxu0 0
        %1789 = vmatprep.subr.bf16.mxu0 0
        %1790 = vmatpush2.bf16.msra.mxu0 0
        %1791 = vmatprep.subr.bf16.mxu0 0
        %1792 = vmatpush2.bf16.msra.mxu0 0
        %1793 = vmatprep.subr.bf16.mxu0 0
        %1794 = vmatpush2.bf16.msra.mxu0 0
        %1795 = vmatprep.subr.bf16.mxu0 0
        %1796 = vmatpush2.bf16.msra.mxu0 0
        %1797 = vmatprep.subr.bf16.mxu0 0
        %1798 = vmatpush2.bf16.msra.mxu0 0
        %1799 = vmatprep.subr.bf16.mxu0 0
        %1800 = vmatpush2.bf16.msra.mxu0 0
        %1801 = vmatprep.mubr.bf16.mxu0 0
        %1802 = vmatmul.mubr.bf16.gmra.mxu0 %v1764
        %v1803 = vpop.f32.mrf.mxu0
        %v1804 = vadd.f32 0.0, %v1803
        %v1805 = vpop.f32.mrf.mxu0
        %v1806 = vpop.f32.mrf.mxu0
        %v1807 = vpop.f32.mrf.mxu0
        %1808 = vdwg.mxu0
        %s1809 = scalar_lea.vmem %s810, 48
        %v1810 = vld [vmem:[%s1809] sm:$0xf]
        %v1811 = vld [vmem:[%s1809 + $0x4] sm:$0xf]
        %v1812 = vld [vmem:[%s1809 + $0x8] sm:$0xf]
        %v1813 = vld [vmem:[%s1809 + $0xc] sm:$0xf]
        %s1814 = scalar_lea.vmem %s814, 3
        %v1815 = vld [vmem:[%s1814] sm:$0x1]
        %v1817 = vlaneseq
        %v1818 = vshrl.u32 %v1817, 7
        %v1819 = vsub.s32 0, %v1818
        %v1820 = vrot.slane %v1815, %v1819
        %v1826 = vunpack.c.l.b16 %v1810
        %v1827 = vunpack.c.l.b16 %v1811
        %v1828 = vunpack.c.l.b16 %v1812
        %v1829 = vunpack.c.l.b16 %v1813
        %v1830 = vpack.c.b16 %v1827, %v1826
        %v1831 = vpack.c.b16 %v1829, %v1828
        %1834 = vmatprep.subr.bf16.mxu0 0
        %1835 = vmatpush1.bf16.msra.mxu0 0
        %1836 = vmatprep.subr.bf16.mxu0 0
        %1837 = vmatpush1.bf16.msra.mxu0 0
        %1838 = vmatprep.subr.bf16.mxu0 0
        %1839 = vmatpush1.bf16.msra.mxu0 0
        %1840 = vmatprep.subr.bf16.mxu0 0
        %1841 = vmatpush1.bf16.msra.mxu0 0
        %1842 = vmatprep.subr.bf16.mxu0 0
        %1843 = vmatpush1.bf16.msra.mxu0 0
        %1844 = vmatprep.subr.bf16.mxu0 0
        %1845 = vmatpush1.bf16.msra.mxu0 0
        %1846 = vmatprep.subr.bf16.mxu0 0
        %1847 = vmatpush1.bf16.msra.mxu0 %v1831
        %1848 = vmatprep.subr.bf16.mxu0 0
        %1849 = vmatpush1.bf16.msra.mxu0 %v1830
        %1850 = vmatprep.subr.bf16.mxu0 0
        %1851 = vmatpush2.bf16.msra.mxu0 0
        %1852 = vmatprep.subr.bf16.mxu0 0
        %1853 = vmatpush2.bf16.msra.mxu0 0
        %1854 = vmatprep.subr.bf16.mxu0 0
        %1855 = vmatpush2.bf16.msra.mxu0 0
        %1856 = vmatprep.subr.bf16.mxu0 0
        %1857 = vmatpush2.bf16.msra.mxu0 0
        %1858 = vmatprep.subr.bf16.mxu0 0
        %1859 = vmatpush2.bf16.msra.mxu0 0
        %1860 = vmatprep.subr.bf16.mxu0 0
        %1861 = vmatpush2.bf16.msra.mxu0 0
        %1862 = vmatprep.subr.bf16.mxu0 0
        %1863 = vmatpush2.bf16.msra.mxu0 0
        %1864 = vmatprep.subr.bf16.mxu0 0
        %1865 = vmatpush2.bf16.msra.mxu0 0
        %1866 = vmatprep.mubr.bf16.mxu0 0
        %1867 = vmatmul.mubr.bf16.gmra.mxu0 %v928
        %v1868 = vpop.f32.mrf.mxu0
        %v1869 = vadd.f32 %v1820, %v1868
        %v1870 = vpop.f32.mrf.mxu0
        %v1871 = vpop.f32.mrf.mxu0
        %v1872 = vpop.f32.mrf.mxu0
        %1873 = vdwg.mxu0
        %s1874 = scalar_lea.vmem %s819, 48
        %v1875 = vld [vmem:[%s1874] sm:$0xf]
        %v1876 = vld [vmem:[%s1874 + $0x4] sm:$0xf]
        %v1877 = vld [vmem:[%s1874 + $0x8] sm:$0xf]
        %v1878 = vld [vmem:[%s1874 + $0xc] sm:$0xf]
        %s1879 = scalar_lea.vmem %s823, 3
        %v1880 = vld [vmem:[%s1879] sm:$0x1]
        %v1882 = vlaneseq
        %v1883 = vshrl.u32 %v1882, 7
        %v1884 = vsub.s32 0, %v1883
        %v1885 = vrot.slane %v1880, %v1884
        %v1891 = vunpack.c.l.b16 %v1875
        %v1892 = vunpack.c.l.b16 %v1876
        %v1893 = vunpack.c.l.b16 %v1877
        %v1894 = vunpack.c.l.b16 %v1878
        %v1895 = vpack.c.b16 %v1892, %v1891
        %v1896 = vpack.c.b16 %v1894, %v1893
        %1899 = vmatprep.subr.bf16.mxu0 0
        %1900 = vmatpush1.bf16.msra.mxu0 0
        %1901 = vmatprep.subr.bf16.mxu0 0
        %1902 = vmatpush1.bf16.msra.mxu0 0
        %1903 = vmatprep.subr.bf16.mxu0 0
        %1904 = vmatpush1.bf16.msra.mxu0 0
        %1905 = vmatprep.subr.bf16.mxu0 0
        %1906 = vmatpush1.bf16.msra.mxu0 0
        %1907 = vmatprep.subr.bf16.mxu0 0
        %1908 = vmatpush1.bf16.msra.mxu0 0
        %1909 = vmatprep.subr.bf16.mxu0 0
        %1910 = vmatpush1.bf16.msra.mxu0 0
        %1911 = vmatprep.subr.bf16.mxu0 0
        %1912 = vmatpush1.bf16.msra.mxu0 %v1896
        %1913 = vmatprep.subr.bf16.mxu0 0
        %1914 = vmatpush1.bf16.msra.mxu0 %v1895
        %1915 = vmatprep.subr.bf16.mxu0 0
        %1916 = vmatpush2.bf16.msra.mxu0 0
        %1917 = vmatprep.subr.bf16.mxu0 0
        %1918 = vmatpush2.bf16.msra.mxu0 0
        %1919 = vmatprep.subr.bf16.mxu0 0
        %1920 = vmatpush2.bf16.msra.mxu0 0
        %1921 = vmatprep.subr.bf16.mxu0 0
        %1922 = vmatpush2.bf16.msra.mxu0 0
        %1923 = vmatprep.subr.bf16.mxu0 0
        %1924 = vmatpush2.bf16.msra.mxu0 0
        %1925 = vmatprep.subr.bf16.mxu0 0
        %1926 = vmatpush2.bf16.msra.mxu0 0
        %1927 = vmatprep.subr.bf16.mxu0 0
        %1928 = vmatpush2.bf16.msra.mxu0 0
        %1929 = vmatprep.subr.bf16.mxu0 0
        %1930 = vmatpush2.bf16.msra.mxu0 0
        %1931 = vmatprep.mubr.bf16.mxu0 0
        %1932 = vmatmul.mubr.bf16.gmra.mxu0 %v928
        %v1933 = vpop.f32.mrf.mxu0
        %v1934 = vadd.f32 %v1885, %v1933
        %v1935 = vpop.f32.mrf.mxu0
        %v1936 = vpop.f32.mrf.mxu0
        %v1937 = vpop.f32.mrf.mxu0
        %1938 = vdwg.mxu0
        %s1939 = scalar_lea.vmem %s828, 48
        %v1940 = vld [vmem:[%s1939] sm:$0xf]
        %v1941 = vld [vmem:[%s1939 + $0x4] sm:$0xf]
        %v1942 = vld [vmem:[%s1939 + $0x8] sm:$0xf]
        %v1943 = vld [vmem:[%s1939 + $0xc] sm:$0xf]
        %s1944 = scalar_lea.vmem %s832, 3
        %v1945 = vld [vmem:[%s1944] sm:$0x1]
        %v1947 = vlaneseq
        %v1948 = vshrl.u32 %v1947, 7
        %v1949 = vsub.s32 0, %v1948
        %v1950 = vrot.slane %v1945, %v1949
        %v1956 = vunpack.c.l.b16 %v1940
        %v1957 = vunpack.c.l.b16 %v1941
        %v1958 = vunpack.c.l.b16 %v1942
        %v1959 = vunpack.c.l.b16 %v1943
        %v1960 = vpack.c.b16 %v1957, %v1956
        %v1961 = vpack.c.b16 %v1959, %v1958
        %1964 = vmatprep.subr.bf16.mxu0 0
        %1965 = vmatpush1.bf16.msra.mxu0 0
        %1966 = vmatprep.subr.bf16.mxu0 0
        %1967 = vmatpush1.bf16.msra.mxu0 0
        %1968 = vmatprep.subr.bf16.mxu0 0
        %1969 = vmatpush1.bf16.msra.mxu0 0
        %1970 = vmatprep.subr.bf16.mxu0 0
        %1971 = vmatpush1.bf16.msra.mxu0 0
        %1972 = vmatprep.subr.bf16.mxu0 0
        %1973 = vmatpush1.bf16.msra.mxu0 0
        %1974 = vmatprep.subr.bf16.mxu0 0
        %1975 = vmatpush1.bf16.msra.mxu0 0
        %1976 = vmatprep.subr.bf16.mxu0 0
        %1977 = vmatpush1.bf16.msra.mxu0 %v1961
        %1978 = vmatprep.subr.bf16.mxu0 0
        %1979 = vmatpush1.bf16.msra.mxu0 %v1960
        %1980 = vmatprep.subr.bf16.mxu0 0
        %1981 = vmatpush2.bf16.msra.mxu0 0
        %1982 = vmatprep.subr.bf16.mxu0 0
        %1983 = vmatpush2.bf16.msra.mxu0 0
        %1984 = vmatprep.subr.bf16.mxu0 0
        %1985 = vmatpush2.bf16.msra.mxu0 0
        %1986 = vmatprep.subr.bf16.mxu0 0
        %1987 = vmatpush2.bf16.msra.mxu0 0
        %1988 = vmatprep.subr.bf16.mxu0 0
        %1989 = vmatpush2.bf16.msra.mxu0 0
        %1990 = vmatprep.subr.bf16.mxu0 0
        %1991 = vmatpush2.bf16.msra.mxu0 0
        %1992 = vmatprep.subr.bf16.mxu0 0
        %1993 = vmatpush2.bf16.msra.mxu0 0
        %1994 = vmatprep.subr.bf16.mxu0 0
        %1995 = vmatpush2.bf16.msra.mxu0 0
        %1996 = vmatprep.mubr.bf16.mxu0 0
        %1997 = vmatmul.mubr.bf16.gmra.mxu0 %v928
        %v1998 = vpop.f32.mrf.mxu0
        %v1999 = vadd.f32 %v1950, %v1998
        %v2000 = vpop.f32.mrf.mxu0
        %v2001 = vpop.f32.mrf.mxu0
        %v2002 = vpop.f32.mrf.mxu0
        %2003 = vdwg.mxu0
        %v2004 = vpack.c.bf16 %v1869, %v1869
        %v2005 = vpack.c.bf16 %v1934, %v1934
        %v2007 = vsel %vm1098, %v2004, 0
        %v2010 = vsel %vm1098, %v2005, 0
        %2012 = vmatprep.subr.bf16.mxu0 0
        %2013 = vmatpush1.bf16.xpose.msra.mxu0 0
        %2014 = vmatprep.subr.bf16.mxu0 0
        %2015 = vmatpush1.bf16.xpose.msra.mxu0 0
        %2016 = vmatprep.subr.bf16.mxu0 0
        %2017 = vmatpush1.bf16.xpose.msra.mxu0 0
        %2018 = vmatprep.subr.bf16.mxu0 0
        %2019 = vmatpush1.bf16.xpose.msra.mxu0 0
        %2020 = vmatprep.subr.bf16.mxu0 0
        %2021 = vmatpush1.bf16.xpose.msra.mxu0 0
        %2022 = vmatprep.subr.bf16.mxu0 0
        %2023 = vmatpush1.bf16.xpose.msra.mxu0 0
        %2024 = vmatprep.subr.bf16.mxu0 0
        %2025 = vmatpush1.bf16.xpose.msra.mxu0 0
        %2026 = vmatprep.subr.bf16.mxu0 0
        %2027 = vmatpush1.bf16.xpose.msra.mxu0 %v2010
        %2028 = vmatprep.subr.bf16.mxu0 0
        %2029 = vmatpush2.bf16.xpose.msra.mxu0 0
        %2030 = vmatprep.subr.bf16.mxu0 0
        %2031 = vmatpush2.bf16.xpose.msra.mxu0 0
        %2032 = vmatprep.subr.bf16.mxu0 0
        %2033 = vmatpush2.bf16.xpose.msra.mxu0 0
        %2034 = vmatprep.subr.bf16.mxu0 0
        %2035 = vmatpush2.bf16.xpose.msra.mxu0 0
        %2036 = vmatprep.subr.bf16.mxu0 0
        %2037 = vmatpush2.bf16.xpose.msra.mxu0 0
        %2038 = vmatprep.subr.bf16.mxu0 0
        %2039 = vmatpush2.bf16.xpose.msra.mxu0 0
        %2040 = vmatprep.subr.bf16.mxu0 0
        %2041 = vmatpush2.bf16.xpose.msra.mxu0 0
        %2042 = vmatprep.subr.bf16.mxu0 0
        %2043 = vmatpush2.bf16.xpose.msra.mxu0 0
        %2044 = vmatprep.mubr.bf16.mxu0 0
        %2045 = vmatmul.mubr.bf16.gmra.mxu0 %v2007
        %v2046 = vpop.f32.mrf.mxu0
        %v2047 = vadd.f32 0.0, %v2046
        %v2048 = vpop.f32.mrf.mxu0
        %v2049 = vpop.f32.mrf.mxu0
        %v2050 = vpop.f32.mrf.mxu0
        %2051 = vdwg.mxu0
        %v2052 = vsel %vm1098, %v2047, -inf
        %2053 = vmax.xlane.f32.xlu0 %v2052
        %v2054 = vpop.xlane.xlu0 %2053
        %v2055 = vsub.f32 %v2047, %v2054
        %v2056 = vmul.f32 %v2055, 1.442695
        %v2057 = vpow.pop %v2056
        %v2058 = vsel %vm1098, %v2057, 0.0
        %2059 = vadd.xlane.f32.xlu0 %v2058
        %v2060 = vpop.xlane.xlu0 %2059
        %v2061 = vrcp.pop %v2060
        %v2062 = vmul.f32 %v2057, %v2061
        %v2063 = vpack.c.bf16 %v2062, %v2062
        %v2064 = vpack.c.bf16 %v1999, %v1999
        %v2066 = vsel %vm1098, %v2063, 0
        %v2069 = vsel %vm1161, %v2064, 0
        %2071 = vmatprep.subr.bf16.mxu0 0
        %2072 = vmatpush1.bf16.msra.mxu0 0
        %2073 = vmatprep.subr.bf16.mxu0 0
        %2074 = vmatpush1.bf16.msra.mxu0 0
        %2075 = vmatprep.subr.bf16.mxu0 0
        %2076 = vmatpush1.bf16.msra.mxu0 0
        %2077 = vmatprep.subr.bf16.mxu0 0
        %2078 = vmatpush1.bf16.msra.mxu0 0
        %2079 = vmatprep.subr.bf16.mxu0 0
        %2080 = vmatpush1.bf16.msra.mxu0 0
        %2081 = vmatprep.subr.bf16.mxu0 0
        %2082 = vmatpush1.bf16.msra.mxu0 0
        %2083 = vmatprep.subr.bf16.mxu0 0
        %2084 = vmatpush1.bf16.msra.mxu0 0
        %2085 = vmatprep.subr.bf16.mxu0 0
        %2086 = vmatpush1.bf16.msra.mxu0 %v2069
        %2087 = vmatprep.subr.bf16.mxu0 0
        %2088 = vmatpush2.bf16.msra.mxu0 0
        %2089 = vmatprep.subr.bf16.mxu0 0
        %2090 = vmatpush2.bf16.msra.mxu0 0
        %2091 = vmatprep.subr.bf16.mxu0 0
        %2092 = vmatpush2.bf16.msra.mxu0 0
        %2093 = vmatprep.subr.bf16.mxu0 0
        %2094 = vmatpush2.bf16.msra.mxu0 0
        %2095 = vmatprep.subr.bf16.mxu0 0
        %2096 = vmatpush2.bf16.msra.mxu0 0
        %2097 = vmatprep.subr.bf16.mxu0 0
        %2098 = vmatpush2.bf16.msra.mxu0 0
        %2099 = vmatprep.subr.bf16.mxu0 0
        %2100 = vmatpush2.bf16.msra.mxu0 0
        %2101 = vmatprep.subr.bf16.mxu0 0
        %2102 = vmatpush2.bf16.msra.mxu0 0
        %2103 = vmatprep.mubr.bf16.mxu0 0
        %2104 = vmatmul.mubr.bf16.gmra.mxu0 %v2066
        %v2105 = vpop.f32.mrf.mxu0
        %v2106 = vadd.f32 0.0, %v2105
        %v2107 = vpop.f32.mrf.mxu0
        %v2108 = vpop.f32.mrf.mxu0
        %v2109 = vpop.f32.mrf.mxu0
        %2110 = vdwg.mxu0
        %2112 = vrot.lane.b32.xlu0 %v1502, 8
        %v2113 = vpop.permute.xlu0 %2112
        %2116 = vrot.lane.b32.xlu0 %v1804, 16
        %v2117 = vpop.permute.xlu0 %2116
        %2120 = vrot.lane.b32.xlu0 %v2106, 24
        %v2121 = vpop.permute.xlu0 %2120
        %v2123 = vsel %vm1098, %v1200, %v2113
        %vm2124 = vcmask 130048
        %v2125 = vsel %vm2124, %v2123, %v2117
        %vm2126 = vcmask 195584
        %v2127 = vsel %vm2126, %v2125, %v2121
        %v2128 = vpack.c.bf16 %v2127, %v2127
        %v2129 = vld [vmem:[%s837] sm:$0xf]
        %v2130 = vld [vmem:[%s837 + $0x4] sm:$0xf]
        %v2131 = vld [vmem:[%s837 + $0x8] sm:$0xf]
        %v2132 = vld [vmem:[%s837 + $0xc] sm:$0xf]
        %v2133 = vld [vmem:[%s840] sm:$0x1]
        %v2135 = vlaneseq
        %v2136 = vshrl.u32 %v2135, 7
        %v2137 = vsub.s32 0, %v2136
        %v2138 = vrot.slane %v2133, %v2137
        %v2144 = vunpack.c.l.b16 %v2129
        %v2145 = vunpack.c.l.b16 %v2130
        %v2146 = vunpack.c.l.b16 %v2131
        %v2147 = vunpack.c.l.b16 %v2132
        %v2148 = vpack.c.b16 %v2145, %v2144
        %v2149 = vpack.c.b16 %v2147, %v2146
        %v2153 = vsel %vm874, %v2128, 0
        %2155 = vmatprep.subr.bf16.mxu0 0
        %2156 = vmatpush1.bf16.msra.mxu0 0
        %2157 = vmatprep.subr.bf16.mxu0 0
        %2158 = vmatpush1.bf16.msra.mxu0 0
        %2159 = vmatprep.subr.bf16.mxu0 0
        %2160 = vmatpush1.bf16.msra.mxu0 0
        %2161 = vmatprep.subr.bf16.mxu0 0
        %2162 = vmatpush1.bf16.msra.mxu0 0
        %2163 = vmatprep.subr.bf16.mxu0 0
        %2164 = vmatpush1.bf16.msra.mxu0 0
        %2165 = vmatprep.subr.bf16.mxu0 0
        %2166 = vmatpush1.bf16.msra.mxu0 0
        %2167 = vmatprep.subr.bf16.mxu0 0
        %2168 = vmatpush1.bf16.msra.mxu0 %v2149
        %2169 = vmatprep.subr.bf16.mxu0 0
        %2170 = vmatpush1.bf16.msra.mxu0 %v2148
        %2171 = vmatprep.subr.bf16.mxu0 0
        %2172 = vmatpush2.bf16.msra.mxu0 0
        %2173 = vmatprep.subr.bf16.mxu0 0
        %2174 = vmatpush2.bf16.msra.mxu0 0
        %2175 = vmatprep.subr.bf16.mxu0 0
        %2176 = vmatpush2.bf16.msra.mxu0 0
        %2177 = vmatprep.subr.bf16.mxu0 0
        %2178 = vmatpush2.bf16.msra.mxu0 0
        %2179 = vmatprep.subr.bf16.mxu0 0
        %2180 = vmatpush2.bf16.msra.mxu0 0
        %2181 = vmatprep.subr.bf16.mxu0 0
        %2182 = vmatpush2.bf16.msra.mxu0 0
        %2183 = vmatprep.subr.bf16.mxu0 0
        %2184 = vmatpush2.bf16.msra.mxu0 0
        %2185 = vmatprep.subr.bf16.mxu0 0
        %2186 = vmatpush2.bf16.msra.mxu0 0
        %2187 = vmatprep.mubr.bf16.mxu0 0
        %2188 = vmatmul.mubr.bf16.gmra.mxu0 %v2153
        %v2189 = vpop.f32.mrf.mxu0
        %v2190 = vadd.f32 %v2138, %v2189
        %v2191 = vpop.f32.mrf.mxu0
        %v2192 = vpop.f32.mrf.mxu0
        %v2193 = vpop.f32.mrf.mxu0
        %2194 = vdwg.mxu0
        %v2195 = vadd.f32 %v871, %v2190
        %v2196 = vld [vmem:[%s843] sm:$0x1]
        %v2197 = vld [vmem:[%s846] sm:$0x1]
        %v2198 = vsel %vm874, %v2195, 0.0
        %2199 = vadd.xlane.f32.xlu0 %v2198
        %v2200 = vpop.xlane.xlu0 %2199
        %v2201 = vmul.f32 %v2200, %v878
        %v2202 = vsub.f32 %v2195, %v2201
        %v2203 = vmul.f32 %v2202, %v2202
        %v2204 = vsel %vm874, %v2203, 0.0
        %2205 = vadd.xlane.f32.xlu0 %v2204
        %v2206 = vpop.xlane.xlu0 %2205
        %v2207 = vmul.f32 %v2206, %v878
        %v2208 = vadd.f32 %v2207, 1e-05
        %v2209 = vrsqrt.pop %v2208
        %v2210 = vmul.f32 %v2202, %v2209
        %v2212 = vlaneseq
        %v2213 = vshrl.u32 %v2212, 7
        %v2214 = vsub.s32 0, %v2213
        %v2215 = vrot.slane %v2196, %v2214
        %v2217 = vmul.f32 %v2210, %v2215
        %v2219 = vlaneseq
        %v2220 = vshrl.u32 %v2219, 7
        %v2221 = vsub.s32 0, %v2220
        %v2222 = vrot.slane %v2197, %v2221
        %v2224 = vadd.f32 %v2217, %v2222
        %v2225 = vpack.c.bf16 %v2224, %v2224
        %v2226 = vld [vmem:[%s851] sm:$0xf]
        %v2227 = vld [vmem:[%s851 + $0x4] sm:$0xf]
        %v2228 = vld [vmem:[%s851 + $0x8] sm:$0xf]
        %v2229 = vld [vmem:[%s851 + $0xc] sm:$0xf]
        %v2230 = vld [vmem:[%s854] sm:$0x1]
        %v2232 = vlaneseq
        %v2233 = vshrl.u32 %v2232, 7
        %v2234 = vsub.s32 0, %v2233
        %v2235 = vrot.slane %v2230, %v2234
        %v2241 = vunpack.c.l.b16 %v2226
        %v2242 = vunpack.c.l.b16 %v2227
        %v2243 = vunpack.c.l.b16 %v2228
        %v2244 = vunpack.c.l.b16 %v2229
        %v2245 = vpack.c.b16 %v2242, %v2241
        %v2246 = vpack.c.b16 %v2244, %v2243
        %v2250 = vsel %vm874, %v2225, 0
        %2252 = vmatprep.subr.bf16.mxu0 0
        %2253 = vmatpush1.bf16.msra.mxu0 0
        %2254 = vmatprep.subr.bf16.mxu0 0
        %2255 = vmatpush1.bf16.msra.mxu0 0
        %2256 = vmatprep.subr.bf16.mxu0 0
        %2257 = vmatpush1.bf16.msra.mxu0 0
        %2258 = vmatprep.subr.bf16.mxu0 0
        %2259 = vmatpush1.bf16.msra.mxu0 0
        %2260 = vmatprep.subr.bf16.mxu0 0
        %2261 = vmatpush1.bf16.msra.mxu0 0
        %2262 = vmatprep.subr.bf16.mxu0 0
        %2263 = vmatpush1.bf16.msra.mxu0 0
        %2264 = vmatprep.subr.bf16.mxu0 0
        %2265 = vmatpush1.bf16.msra.mxu0 %v2246
        %2266 = vmatprep.subr.bf16.mxu0 0
        %2267 = vmatpush1.bf16.msra.mxu0 %v2245
        %2268 = vmatprep.subr.bf16.mxu0 0
        %2269 = vmatpush2.bf16.msra.mxu0 0
        %2270 = vmatprep.subr.bf16.mxu0 0
        %2271 = vmatpush2.bf16.msra.mxu0 0
        %2272 = vmatprep.subr.bf16.mxu0 0
        %2273 = vmatpush2.bf16.msra.mxu0 0
        %2274 = vmatprep.subr.bf16.mxu0 0
        %2275 = vmatpush2.bf16.msra.mxu0 0
        %2276 = vmatprep.subr.bf16.mxu0 0
        %2277 = vmatpush2.bf16.msra.mxu0 0
        %2278 = vmatprep.subr.bf16.mxu0 0
        %2279 = vmatpush2.bf16.msra.mxu0 0
        %2280 = vmatprep.subr.bf16.mxu0 0
        %2281 = vmatpush2.bf16.msra.mxu0 0
        %2282 = vmatprep.subr.bf16.mxu0 0
        %2283 = vmatpush2.bf16.msra.mxu0 0
        %2284 = vmatprep.mubr.bf16.mxu0 0
        %2285 = vmatmul.mubr.bf16.gmra.mxu0 %v2250
        %v2286 = vpop.f32.mrf.mxu0
        %v2287 = vadd.f32 %v2235, %v2286
        %v2288 = vpop.f32.mrf.mxu0
        %v2289 = vpop.f32.mrf.mxu0
        %v2290 = vpop.f32.mrf.mxu0
        %2291 = vdwg.mxu0
        %v2292 = vmax.f32 %v2287, 0.0
        %v2293 = vpack.c.bf16 %v2292, %v2292
        %v2294 = vld [vmem:[%s859] sm:$0xf]
        %v2295 = vld [vmem:[%s859 + $0x4] sm:$0xf]
        %v2296 = vld [vmem:[%s862] sm:$0x1]
        %v2298 = vlaneseq
        %v2299 = vshrl.u32 %v2298, 7
        %v2300 = vsub.s32 0, %v2299
        %v2301 = vrot.slane %v2296, %v2300
        %v2305 = vunpack.c.l.b16 %v2294
        %v2306 = vunpack.c.l.b16 %v2295
        %v2307 = vpack.c.b16 %v2306, %v2305
        %v2310 = vsel %vm2124, %v2293, 0
        %2312 = vmatprep.subr.bf16.mxu0 0
        %2313 = vmatpush1.bf16.msra.mxu0 0
        %2314 = vmatprep.subr.bf16.mxu0 0
        %2315 = vmatpush1.bf16.msra.mxu0 0
        %2316 = vmatprep.subr.bf16.mxu0 0
        %2317 = vmatpush1.bf16.msra.mxu0 0
        %2318 = vmatprep.subr.bf16.mxu0 0
        %2319 = vmatpush1.bf16.msra.mxu0 0
        %2320 = vmatprep.subr.bf16.mxu0 0
        %2321 = vmatpush1.bf16.msra.mxu0 0
        %2322 = vmatprep.subr.bf16.mxu0 0
        %2323 = vmatpush1.bf16.msra.mxu0 0
        %2324 = vmatprep.subr.bf16.mxu0 0
        %2325 = vmatpush1.bf16.msra.mxu0 0
        %2326 = vmatprep.subr.bf16.mxu0 0
        %2327 = vmatpush1.bf16.msra.mxu0 %v2307
        %2328 = vmatprep.subr.bf16.mxu0 0
        %2329 = vmatpush2.bf16.msra.mxu0 0
        %2330 = vmatprep.subr.bf16.mxu0 0
        %2331 = vmatpush2.bf16.msra.mxu0 0
        %2332 = vmatprep.subr.bf16.mxu0 0
        %2333 = vmatpush2.bf16.msra.mxu0 0
        %2334 = vmatprep.subr.bf16.mxu0 0
        %2335 = vmatpush2.bf16.msra.mxu0 0
        %2336 = vmatprep.subr.bf16.mxu0 0
        %2337 = vmatpush2.bf16.msra.mxu0 0
        %2338 = vmatprep.subr.bf16.mxu0 0
        %2339 = vmatpush2.bf16.msra.mxu0 0
        %2340 = vmatprep.subr.bf16.mxu0 0
        %2341 = vmatpush2.bf16.msra.mxu0 0
        %2342 = vmatprep.subr.bf16.mxu0 0
        %2343 = vmatpush2.bf16.msra.mxu0 0
        %2344 = vmatprep.mubr.bf16.mxu0 0
        %2345 = vmatmul.mubr.bf16.gmra.mxu0 %v2310
        %v2346 = vpop.f32.mrf.mxu0
        %v2347 = vadd.f32 %v2301, %v2346
        %v2348 = vpop.f32.mrf.mxu0
        %v2349 = vpop.f32.mrf.mxu0
        %v2350 = vpop.f32.mrf.mxu0
        %2351 = vdwg.mxu0
        %v2352 = vadd.f32 %v2195, %v2347
        %2353 = vst.msk [vmem:[#allocation2] sm:$0xff] %vm874, %v2352
        %v2354 = vlaneseq
        %v2355 = vshrl.u32 %v2354, 7
        %v2356 = vstv %s41
        %vm2357 = vcmp.eq.s32.totalorder %v2355, %v2356
        %v2358 = vld [vmem:[%s795] sm:$0x3]
        %v2359 = vsel %vm2357, 1, 0
        %vm2360 = vcmp.eq.s32.totalorder %v2359, 1
        %v2361 = vlaneseq
        %v2362 = vshrl.u32 %v2361, 7
        %v2363 = vsub.s32 0, %v2362
        %v2364 = vrot.slane %v2352, %v2363
        %v2365 = vsel %vm2360, %v2364, %v2358
        %vm2366 = vcmask 254976
        %2367 = vst.msk [vmem:[%s795] sm:$0x3] %vm2366, %v2365
        %p2368 = scmp.eq.s32.totalorder %s41, 1
        // Predicated region
        $region93: #{tpu_custom_call.1} parent=87 // pred_check
          %p2369 = pneg %p2368
        $region94: #{tpu_custom_call.1} parent=87 // pred_check_branch
          %2371 = sbr.rel (%p2369) target = $region96
        $region95: #{tpu_custom_call.1} parent=87 // pred_region
          %2372 = vst.msk [vmem:[%s788] sm:$0xff] %vm874, %v2352
        $region96: #{tpu_custom_call.1} parent=87 // pred_fallthru
          _
        %s2373 = sand.u32 %s498, 1
        %s2374 = scalar_lea.sflag [#allocation4], %s2373
        %s2375 = sand.u32 %s498, 1
        %s2376 = smul.addr %s2375, 8
        %s2377 = scalar_lea.vmem [#allocation3], %s2376
        %s2378 = sand.u32 %s524, 1
        %s2379 = scalar_lea.sflag [#allocation6], %s2378
        %s2380 = sand.u32 %s524, 1
        %s2381 = smul.addr %s2380, 2
        %s2382 = scalar_lea.vmem [#allocation5], %s2381
        // Predicated region
        $region97: #{tpu_custom_call.1} parent=87 // pred_check
          %p2383 = pneg %p508
        $region98: #{tpu_custom_call.1} parent=87 // pred_check_branch
          %2385 = sbr.rel (%p2383) target = $region100
        $region99: #{tpu_custom_call.1} parent=87 // pred_region
          %s2387 = ssub.s32 128, 128
          %2388 = vsyncadd %s2374, %s2387
          %s2389 = smul.addr %s40, 128
          %s2390 = scalar_lea.hbm %s17, %s2389
          %s2392 = sshll.u32 %s2377, 4
          %s2393 = int_to_ptr.vmem [resolvable:$true] %s2392
          %2395 = dma.vmem_to_hbm [thread:$0]  %s2393, 128, %s2390, %s2374
        $region100: #{tpu_custom_call.1} parent=87 // pred_fallthru
          _
        // Predicated region
        $region101: #{tpu_custom_call.1} parent=87 // pred_check
          %p2396 = pneg %p534
        $region102: #{tpu_custom_call.1} parent=87 // pred_check_branch
          %2398 = sbr.rel (%p2396) target = $region104
        $region103: #{tpu_custom_call.1} parent=87 // pred_region
          %s2400 = ssub.s32 32, 32
          %2401 = vsyncadd %s2379, %s2400
          %s2402 = smul.addr %s40, 32
          %s2403 = scalar_lea.hbm %s18, %s2402
          %s2405 = sshll.u32 %s2382, 4
          %s2406 = int_to_ptr.vmem [resolvable:$true] %s2405
          %2408 = dma.vmem_to_hbm [thread:$0]  %s2406, 32, %s2403, %s2379
        $region104: #{tpu_custom_call.1} parent=87 // pred_fallthru
          _
      $region88: #{tpu_custom_call.1} parent=5 // pred_fallthru
        _
      %p2409 = scmp.le.s32.totalorder 2, %s31
      // Predicated region
      $region105: #{tpu_custom_call.1} parent=5 // pred_check
        %p2410 = pneg %p2409
      $region106: #{tpu_custom_call.1} parent=5 // pred_check_branch
        %2412 = sbr.rel (%p2410) target = $region108
      $region107: #{tpu_custom_call.1} parent=5 // pred_region
        %s2413 = ssub.s32 %s31, 2
        // Predicated region
        $region109: #{tpu_custom_call.1} parent=107 // pred_check
          %p2414 = pneg %p514
        $region110: #{tpu_custom_call.1} parent=107 // pred_check_branch
          %2416 = sbr.rel (%p2414) target = $region112
        $region111: #{tpu_custom_call.1} parent=107 // pred_region
          %s2417 = sand.u32 %s499, 1
          %s2418 = scalar_lea.sflag [#allocation4], %s2417
          %s2419 = sand.u32 %s499, 1
          %s2420 = smul.addr %s2419, 8
          %s2421 = scalar_lea.vmem [#allocation3], %s2420
          %2422 = dma.done %s2418, 128
        $region112: #{tpu_custom_call.1} parent=107 // pred_fallthru
          _
        // Predicated region
        $region113: #{tpu_custom_call.1} parent=107 // pred_check
          %p2423 = pneg %p540
        $region114: #{tpu_custom_call.1} parent=107 // pred_check_branch
          %2425 = sbr.rel (%p2423) target = $region116
        $region115: #{tpu_custom_call.1} parent=107 // pred_region
          %s2426 = sand.u32 %s525, 1
          %s2427 = scalar_lea.sflag [#allocation6], %s2426
          %s2428 = sand.u32 %s525, 1
          %s2429 = smul.addr %s2428, 2
          %s2430 = scalar_lea.vmem [#allocation5], %s2429
          %2431 = dma.done %s2427, 32
        $region116: #{tpu_custom_call.1} parent=107 // pred_fallthru
          _
      $region108: #{tpu_custom_call.1} parent=5 // pred_fallthru
        _
    $region6: #{tpu_custom_call.1} parent=1 // loop_footer
      %s35 = sadd.s32 1, %s31
    $region7: #{tpu_custom_call.1} parent=1 // loop_footer_branch
      %30 = sbr.rel target = $region3
    $region8: #{tpu_custom_call.1} parent=1 // loop_exit
      _
    %2432 = vsyncpa [#allocation4], 1
    %s2433 = scalar_lea.sflag [#allocation4], 1
    %2434 = vsyncpa %s2433, 1
    %2435 = vsyncpa [#allocation6], 1
    %s2436 = scalar_lea.sflag [#allocation6], 1
    %2437 = vsyncpa %s2436, 1

</llo_original>
